<compile_context>
chip_gen: v7x
topology: tpu7x:2x2x1
jax: 0.10.0
libtpu: 0.0.40
codegen_flags: <defaults>
</compile_context>

<pallas_src>
import functools

import jax
import jax.numpy as jnp
from jax.experimental import pallas as pl
from jax.experimental.pallas import tpu as pltpu


def _round_up(x, m):
    return (x + m - 1) // m * m


# ---------------------------------------------------------------------------
# Fused ResidualBlock kernel (one grid step per batch sample)
# ---------------------------------------------------------------------------
def _resblock_kernel(xf_ref, w1_ref, w2_ref, p_ref, m1_ref, m2_ref,
                     o_ref, x1_ref, *, W, cnt1, cnt2, eps):
    C = xf_ref.shape[-1]
    M1p = m1_ref.shape[0]          # padded rows of conv1 "wide" output
    M2p = m2_ref.shape[0]          # padded rows of conv2 "wide" output
    M1s = x1_ref.shape[0]          # rows of conv1 scratch (>= M2p + 2*W + 2)
    shifts = [kh * W + kw for kh in range(3) for kw in range(3)]

    # ---------------- conv1: 9 shifted matmuls, bf16 x bf16 -> f32 acc -------
    acc1 = jnp.zeros((M1p, C), jnp.float32)
    for k, s in enumerate(shifts):
        a = xf_ref[0, s:s + M1p, :].astype(jnp.bfloat16)
        acc1 = acc1 + jnp.dot(a, w1_ref[k], preferred_element_type=jnp.float32)
    acc1 = acc1 + p_ref[0:1, :]                       # conv1 bias

    # ---------------- InstanceNorm1 (masked, two-pass) + ReLU ----------------
    m1 = m1_ref[...]                                  # (M1p, 1) validity mask
    mean1 = jnp.sum(acc1 * m1, axis=0, keepdims=True) * (1.0 / cnt1)
    d1 = acc1 - mean1
    var1 = jnp.sum(d1 * d1 * m1, axis=0, keepdims=True) * (1.0 / cnt1)
    y1 = d1 * jax.lax.rsqrt(var1 + eps) * p_ref[1:2, :] + p_ref[2:3, :]
    y1 = jnp.maximum(y1, 0.0)

    if M1s > M1p:                                     # init scratch tail rows
        x1_ref[M1p:, :] = jnp.zeros((M1s - M1p, C), jnp.float32)
    x1_ref[0:M1p, :] = y1

    # ---------------- conv2: 9 shifted matmuls --------------------------------
    acc2 = jnp.zeros((M2p, C), jnp.float32)
    for k, s in enumerate(shifts):
        a = x1_ref[s:s + M2p, :].astype(jnp.bfloat16)
        acc2 = acc2 + jnp.dot(a, w2_ref[k], preferred_element_type=jnp.float32)
    acc2 = acc2 + p_ref[3:4, :]                       # conv2 bias

    # ---------------- InstanceNorm2 (masked, two-pass) ------------------------
    m2 = m2_ref[...]
    mean2 = jnp.sum(acc2 * m2, axis=0, keepdims=True) * (1.0 / cnt2)
    d2 = acc2 - mean2
    var2 = jnp.sum(d2 * d2 * m2, axis=0, keepdims=True) * (1.0 / cnt2)
    y2 = d2 * jax.lax.rsqrt(var2 + eps) * p_ref[4:5, :] + p_ref[5:6, :]

    # ---------------- residual add of the centre crop of x --------------------
    # x[..., 2:h-2, 2:w-2] at flat-spatial offset (2*W + 2) in the same layout.
    resid = xf_ref[0, (2 * W + 2):(2 * W + 2) + M2p, :]
    o_ref[0, :, :] = y2 + resid


# ---------------------------------------------------------------------------
# Wrapper
# ---------------------------------------------------------------------------
def residual_block_forward(x_nchw, params, *, eps=1e-5):
    N, C, H, W = x_nchw.shape
    Ho1, Wo1 = H - 2, W - 2
    Ho2, Wo2 = H - 4, W - 4
    M1, M2 = Ho1 * W, Ho2 * W
    M1p, M2p = _round_up(M1, 8), _round_up(M2, 8)
    M0p = _round_up(max(H * W, 2 * W + 2 + M1p), 8)     # padded input rows
    M1s = _round_up(max(M1p, 2 * W + 2 + M2p), 8)       # conv1 scratch rows

    # NCHW -> NHWC -> flattened spatial [N, H*W (padded), C]; channels on lanes.
    xf = jnp.transpose(x_nchw, (0, 2, 3, 1)).reshape(N, H * W, C)
    xf = jnp.pad(xf, ((0, 0), (0, M0p - H * W), (0, 0)))

    # 3x3 weights in HWIO, flattened to [9, Cin, Cout], bf16 for the MXU.
    w1 = params["w1"].reshape(9, C, C).astype(jnp.bfloat16)
    w2 = params["w2"].reshape(9, C, C).astype(jnp.bfloat16)

    # Per-channel params packed into one (8, C) f32 slab:
    #   rows: conv1 bias, IN1 gamma, IN1 beta, conv2 bias, IN2 gamma, IN2 beta, 0, 0
    p = jnp.zeros((8, C), jnp.float32)
    p = p.at[0].set(params["b1"]).at[1].set(params["g1"]).at[2].set(params["be1"])
    p = p.at[3].set(params["b2"]).at[4].set(params["g2"]).at[5].set(params["be2"])

    # Validity masks for the "wide" layout (columns >= Wo are wrap-around junk).
    r1 = jnp.arange(M1p)
    mask1 = ((r1 < M1) & (r1 % W < Wo1)).astype(jnp.float32).reshape(M1p, 1)
    r2 = jnp.arange(M2p)
    mask2 = ((r2 < M2) & (r2 % W < Wo2)).astype(jnp.float32).reshape(M2p, 1)

    kernel = functools.partial(
        _resblock_kernel, W=W,
        cnt1=float(Ho1 * Wo1), cnt2=float(Ho2 * Wo2), eps=eps)

    out_flat = pl.pallas_call(
        kernel,
        out_shape=jax.ShapeDtypeStruct((N, M2p, C), jnp.float32),
        grid_spec=pltpu.PrefetchScalarGridSpec(
            num_scalar_prefetch=0,
            grid=(N,),
            in_specs=[
                pl.BlockSpec((1, M0p, C), lambda n: (n, 0, 0)),   # activations
                pl.BlockSpec((9, C, C), lambda n: (0, 0, 0)),     # w1 (resident)
                pl.BlockSpec((9, C, C), lambda n: (0, 0, 0)),     # w2 (resident)
                pl.BlockSpec((8, C), lambda n: (0, 0)),           # biases/affine
                pl.BlockSpec((M1p, 1), lambda n: (0, 0)),         # IN1 mask
                pl.BlockSpec((M2p, 1), lambda n: (0, 0)),         # IN2 mask
            ],
            out_specs=pl.BlockSpec((1, M2p, C), lambda n: (n, 0, 0)),
            scratch_shapes=[pltpu.VMEM((M1s, C), jnp.float32)],
        ),
        compiler_params=pltpu.CompilerParams(
            dimension_semantics=("parallel",)),
    )(xf, w1, w2, p, mask1, mask2)

    # Crop wide output [N, Ho2, W, C] -> [N, Ho2, Wo2, C], back to NCHW.
    out = out_flat[:, :M2, :].reshape(N, Ho2, W, C)[:, :, :Wo2, :]
    return jnp.transpose(out, (0, 3, 1, 2))


# ---------------------------------------------------------------------------
# Pure-JAX reference (f32) for a sanity check
# ---------------------------------------------------------------------------
def _reference_forward(x_nchw, params, *, eps=1e-5):
    x = jnp.transpose(x_nchw, (0, 2, 3, 1))

    def conv(h, w, b):
        y = jax.lax.conv_general_dilated(
            h, w, window_strides=(1, 1), padding="VALID",
            dimension_numbers=("NHWC", "HWIO", "NHWC"),
            precision=jax.lax.Precision.HIGHEST)
        return y + b

    def inorm(h, g, b):
        mu = jnp.mean(h, axis=(1, 2), keepdims=True)
        var = jnp.mean((h - mu) ** 2, axis=(1, 2), keepdims=True)
        return (h - mu) * jax.lax.rsqrt(var + eps) * g + b

    h = conv(x, params["w1"], params["b1"])
    h = jnp.maximum(inorm(h, params["g1"], params["be1"]), 0.0)
    h = conv(h, params["w2"], params["b2"])
    h = inorm(h, params["g2"], params["be2"])
    h = h + x[:, 2:-2, 2:-2, :]
    return jnp.transpose(h, (0, 3, 1, 2))


# ---------------------------------------------------------------------------
if __name__ == "__main__":
    key = jax.random.PRNGKey(0)
    kx, kw1, kw2, kb1, kb2 = jax.random.split(key, 5)

    N, C, H, W = 2, 64, 16, 16
    x = jax.random.normal(kx, (N, C, H, W), jnp.float32)

    std = (2.0 / (9 * C)) ** 0.5
    params = {
        "w1": jax.random.normal(kw1, (3, 3, C, C), jnp.float32) * std,  # HWIO
        "b1": jax.random.normal(kb1, (C,), jnp.float32) * 0.1,
        "g1": jnp.ones((C,), jnp.float32),      # InstanceNorm2d affine init
        "be1": jnp.zeros((C,), jnp.float32),
        "w2": jax.random.normal(kw2, (3, 3, C, C), jnp.float32) * std,
        "b2": jax.random.normal(kb2, (C,), jnp.float32) * 0.1,
        "g2": jnp.ones((C,), jnp.float32),
        "be2": jnp.zeros((C,), jnp.float32),
    }

    y = jax.jit(residual_block_forward)(x, params)
    y = jax.block_until_ready(y)
    assert y.shape == (N, C, H - 4, W - 4), y.shape
    assert y.dtype == jnp.float32

    y_ref = _reference_forward(x, params)
    err = float(jnp.max(jnp.abs(y - y_ref)))
    assert err < 0.25, f"max abs err vs reference: {err}"   # bf16-MXU tolerance

    print("KERNEL_OK")
</pallas_src>

<mosaic_0001>
module attributes {stable_mosaic.version = 11 : i64} {
  func.func @_resblock_kernel(%arg0: i32, %arg1: memref<1x264x64xf32, #tpu.memory_space<vmem>>, %arg2: memref<9x64x64xbf16, #tpu.memory_space<vmem>>, %arg3: memref<9x64x64xbf16, #tpu.memory_space<vmem>>, %arg4: memref<8x64xf32, #tpu.memory_space<vmem>>, %arg5: memref<224x1xf32, #tpu.memory_space<vmem>>, %arg6: memref<192x1xf32, #tpu.memory_space<vmem>>, %arg7: memref<1x192x64xf32, #tpu.memory_space<vmem>>, %arg8: memref<232x64xf32, #tpu.memory_space<vmem>>) attributes {dimension_semantics = [#tpu.dimension_semantics<parallel>], iteration_bounds = array<i64: 2>, scalar_prefetch = 0 : i64, scratch_operands = 1 : i64, tpu.core_type = #tpu.core_type<tc>, window_params = [{transform_indices = @transform_0, window_bounds = array<i64: 1, 264, 64>}, {pipeline_mode = #tpu.pipeline_mode<synchronous>, transform_indices = @transform_1, window_bounds = array<i64: 9, 64, 64>}, {pipeline_mode = #tpu.pipeline_mode<synchronous>, transform_indices = @transform_2, window_bounds = array<i64: 9, 64, 64>}, {pipeline_mode = #tpu.pipeline_mode<synchronous>, transform_indices = @transform_3, window_bounds = array<i64: 8, 64>}, {pipeline_mode = #tpu.pipeline_mode<synchronous>, transform_indices = @transform_4, window_bounds = array<i64: 224, 1>}, {pipeline_mode = #tpu.pipeline_mode<synchronous>, transform_indices = @transform_5, window_bounds = array<i64: 192, 1>}, {transform_indices = @transform_6, window_bounds = array<i64: 1, 192, 64>}]} {
    %cst = arith.constant 0.000000e+00 : f32
    %0 = vector.broadcast %cst : f32 to vector<224x64xf32>
    %c0 = arith.constant 0 : index
    %c0_0 = arith.constant 0 : index
    %c0_1 = arith.constant 0 : index
    %1 = vector.load %arg1[%c0, %c0_0, %c0_1] : memref<1x264x64xf32, #tpu.memory_space<vmem>>, vector<1x224x64xf32>
    %2 = vector.shape_cast %1 : vector<1x224x64xf32> to vector<224x64xf32>
    %3 = arith.truncf %2 : vector<224x64xf32> to vector<224x64xbf16>
    %c0_2 = arith.constant 0 : index
    %c0_3 = arith.constant 0 : index
    %c0_4 = arith.constant 0 : index
    %4 = vector.load %arg2[%c0_2, %c0_3, %c0_4] : memref<9x64x64xbf16, #tpu.memory_space<vmem>>, vector<1x64x64xbf16>
    %5 = vector.shape_cast %4 : vector<1x64x64xbf16> to vector<64x64xbf16>
    %cst_5 = arith.constant dense<0.000000e+00> : vector<224x64xf32>
    %6 = tpu.matmul %3, %5, %cst_5 {dimension_numbers = #tpu.dot_dimension_numbers<[1], [0], [0], [1], [0, 0, 1, 1], [], []>} : vector<224x64xbf16>, vector<64x64xbf16>, vector<224x64xf32> -> vector<224x64xf32>
    %7 = arith.addf %0, %6 : vector<224x64xf32>
    %c0_6 = arith.constant 0 : index
    %c1 = arith.constant 1 : index
    %c0_7 = arith.constant 0 : index
    %8 = vector.load %arg1[%c0_6, %c1, %c0_7] : memref<1x264x64xf32, #tpu.memory_space<vmem>>, vector<1x224x64xf32>
    %9 = vector.shape_cast %8 : vector<1x224x64xf32> to vector<224x64xf32>
    %10 = arith.truncf %9 : vector<224x64xf32> to vector<224x64xbf16>
    %c1_8 = arith.constant 1 : index
    %c0_9 = arith.constant 0 : index
    %c0_10 = arith.constant 0 : index
    %11 = vector.load %arg2[%c1_8, %c0_9, %c0_10] : memref<9x64x64xbf16, #tpu.memory_space<vmem>>, vector<1x64x64xbf16>
    %12 = vector.shape_cast %11 : vector<1x64x64xbf16> to vector<64x64xbf16>
    %cst_11 = arith.constant dense<0.000000e+00> : vector<224x64xf32>
    %13 = tpu.matmul %10, %12, %cst_11 {dimension_numbers = #tpu.dot_dimension_numbers<[1], [0], [0], [1], [0, 0, 1, 1], [], []>} : vector<224x64xbf16>, vector<64x64xbf16>, vector<224x64xf32> -> vector<224x64xf32>
    %14 = arith.addf %7, %13 : vector<224x64xf32>
    %c0_12 = arith.constant 0 : index
    %c2 = arith.constant 2 : index
    %c0_13 = arith.constant 0 : index
    %15 = vector.load %arg1[%c0_12, %c2, %c0_13] : memref<1x264x64xf32, #tpu.memory_space<vmem>>, vector<1x224x64xf32>
    %16 = vector.shape_cast %15 : vector<1x224x64xf32> to vector<224x64xf32>
    %17 = arith.truncf %16 : vector<224x64xf32> to vector<224x64xbf16>
    %c2_14 = arith.constant 2 : index
    %c0_15 = arith.constant 0 : index
    %c0_16 = arith.constant 0 : index
    %18 = vector.load %arg2[%c2_14, %c0_15, %c0_16] : memref<9x64x64xbf16, #tpu.memory_space<vmem>>, vector<1x64x64xbf16>
    %19 = vector.shape_cast %18 : vector<1x64x64xbf16> to vector<64x64xbf16>
    %cst_17 = arith.constant dense<0.000000e+00> : vector<224x64xf32>
    %20 = tpu.matmul %17, %19, %cst_17 {dimension_numbers = #tpu.dot_dimension_numbers<[1], [0], [0], [1], [0, 0, 1, 1], [], []>} : vector<224x64xbf16>, vector<64x64xbf16>, vector<224x64xf32> -> vector<224x64xf32>
    %21 = arith.addf %14, %20 : vector<224x64xf32>
    %c0_18 = arith.constant 0 : index
    %c16 = arith.constant 16 : index
    %c0_19 = arith.constant 0 : index
    %22 = vector.load %arg1[%c0_18, %c16, %c0_19] : memref<1x264x64xf32, #tpu.memory_space<vmem>>, vector<1x224x64xf32>
    %23 = vector.shape_cast %22 : vector<1x224x64xf32> to vector<224x64xf32>
    %24 = arith.truncf %23 : vector<224x64xf32> to vector<224x64xbf16>
    %c3 = arith.constant 3 : index
    %c0_20 = arith.constant 0 : index
    %c0_21 = arith.constant 0 : index
    %25 = vector.load %arg2[%c3, %c0_20, %c0_21] : memref<9x64x64xbf16, #tpu.memory_space<vmem>>, vector<1x64x64xbf16>
    %26 = vector.shape_cast %25 : vector<1x64x64xbf16> to vector<64x64xbf16>
    %cst_22 = arith.constant dense<0.000000e+00> : vector<224x64xf32>
    %27 = tpu.matmul %24, %26, %cst_22 {dimension_numbers = #tpu.dot_dimension_numbers<[1], [0], [0], [1], [0, 0, 1, 1], [], []>} : vector<224x64xbf16>, vector<64x64xbf16>, vector<224x64xf32> -> vector<224x64xf32>
    %28 = arith.addf %21, %27 : vector<224x64xf32>
    %c0_23 = arith.constant 0 : index
    %c17 = arith.constant 17 : index
    %c0_24 = arith.constant 0 : index
    %29 = vector.load %arg1[%c0_23, %c17, %c0_24] : memref<1x264x64xf32, #tpu.memory_space<vmem>>, vector<1x224x64xf32>
    %30 = vector.shape_cast %29 : vector<1x224x64xf32> to vector<224x64xf32>
    %31 = arith.truncf %30 : vector<224x64xf32> to vector<224x64xbf16>
    %c4 = arith.constant 4 : index
    %c0_25 = arith.constant 0 : index
    %c0_26 = arith.constant 0 : index
    %32 = vector.load %arg2[%c4, %c0_25, %c0_26] : memref<9x64x64xbf16, #tpu.memory_space<vmem>>, vector<1x64x64xbf16>
    %33 = vector.shape_cast %32 : vector<1x64x64xbf16> to vector<64x64xbf16>
    %cst_27 = arith.constant dense<0.000000e+00> : vector<224x64xf32>
    %34 = tpu.matmul %31, %33, %cst_27 {dimension_numbers = #tpu.dot_dimension_numbers<[1], [0], [0], [1], [0, 0, 1, 1], [], []>} : vector<224x64xbf16>, vector<64x64xbf16>, vector<224x64xf32> -> vector<224x64xf32>
    %35 = arith.addf %28, %34 : vector<224x64xf32>
    %c0_28 = arith.constant 0 : index
    %c18 = arith.constant 18 : index
    %c0_29 = arith.constant 0 : index
    %36 = vector.load %arg1[%c0_28, %c18, %c0_29] : memref<1x264x64xf32, #tpu.memory_space<vmem>>, vector<1x224x64xf32>
    %37 = vector.shape_cast %36 : vector<1x224x64xf32> to vector<224x64xf32>
    %38 = arith.truncf %37 : vector<224x64xf32> to vector<224x64xbf16>
    %c5 = arith.constant 5 : index
    %c0_30 = arith.constant 0 : index
    %c0_31 = arith.constant 0 : index
    %39 = vector.load %arg2[%c5, %c0_30, %c0_31] : memref<9x64x64xbf16, #tpu.memory_space<vmem>>, vector<1x64x64xbf16>
    %40 = vector.shape_cast %39 : vector<1x64x64xbf16> to vector<64x64xbf16>
    %cst_32 = arith.constant dense<0.000000e+00> : vector<224x64xf32>
    %41 = tpu.matmul %38, %40, %cst_32 {dimension_numbers = #tpu.dot_dimension_numbers<[1], [0], [0], [1], [0, 0, 1, 1], [], []>} : vector<224x64xbf16>, vector<64x64xbf16>, vector<224x64xf32> -> vector<224x64xf32>
    %42 = arith.addf %35, %41 : vector<224x64xf32>
    %c0_33 = arith.constant 0 : index
    %c32 = arith.constant 32 : index
    %c0_34 = arith.constant 0 : index
    %43 = vector.load %arg1[%c0_33, %c32, %c0_34] : memref<1x264x64xf32, #tpu.memory_space<vmem>>, vector<1x224x64xf32>
    %44 = vector.shape_cast %43 : vector<1x224x64xf32> to vector<224x64xf32>
    %45 = arith.truncf %44 : vector<224x64xf32> to vector<224x64xbf16>
    %c6 = arith.constant 6 : index
    %c0_35 = arith.constant 0 : index
    %c0_36 = arith.constant 0 : index
    %46 = vector.load %arg2[%c6, %c0_35, %c0_36] : memref<9x64x64xbf16, #tpu.memory_space<vmem>>, vector<1x64x64xbf16>
    %47 = vector.shape_cast %46 : vector<1x64x64xbf16> to vector<64x64xbf16>
    %cst_37 = arith.constant dense<0.000000e+00> : vector<224x64xf32>
    %48 = tpu.matmul %45, %47, %cst_37 {dimension_numbers = #tpu.dot_dimension_numbers<[1], [0], [0], [1], [0, 0, 1, 1], [], []>} : vector<224x64xbf16>, vector<64x64xbf16>, vector<224x64xf32> -> vector<224x64xf32>
    %49 = arith.addf %42, %48 : vector<224x64xf32>
    %c0_38 = arith.constant 0 : index
    %c33 = arith.constant 33 : index
    %c0_39 = arith.constant 0 : index
    %50 = vector.load %arg1[%c0_38, %c33, %c0_39] : memref<1x264x64xf32, #tpu.memory_space<vmem>>, vector<1x224x64xf32>
    %51 = vector.shape_cast %50 : vector<1x224x64xf32> to vector<224x64xf32>
    %52 = arith.truncf %51 : vector<224x64xf32> to vector<224x64xbf16>
    %c7 = arith.constant 7 : index
    %c0_40 = arith.constant 0 : index
    %c0_41 = arith.constant 0 : index
    %53 = vector.load %arg2[%c7, %c0_40, %c0_41] : memref<9x64x64xbf16, #tpu.memory_space<vmem>>, vector<1x64x64xbf16>
    %54 = vector.shape_cast %53 : vector<1x64x64xbf16> to vector<64x64xbf16>
    %cst_42 = arith.constant dense<0.000000e+00> : vector<224x64xf32>
    %55 = tpu.matmul %52, %54, %cst_42 {dimension_numbers = #tpu.dot_dimension_numbers<[1], [0], [0], [1], [0, 0, 1, 1], [], []>} : vector<224x64xbf16>, vector<64x64xbf16>, vector<224x64xf32> -> vector<224x64xf32>
    %56 = arith.addf %49, %55 : vector<224x64xf32>
    %c0_43 = arith.constant 0 : index
    %c34 = arith.constant 34 : index
    %c0_44 = arith.constant 0 : index
    %57 = vector.load %arg1[%c0_43, %c34, %c0_44] : memref<1x264x64xf32, #tpu.memory_space<vmem>>, vector<1x224x64xf32>
    %58 = vector.shape_cast %57 : vector<1x224x64xf32> to vector<224x64xf32>
    %59 = arith.truncf %58 : vector<224x64xf32> to vector<224x64xbf16>
    %c8 = arith.constant 8 : index
    %c0_45 = arith.constant 0 : index
    %c0_46 = arith.constant 0 : index
    %60 = vector.load %arg2[%c8, %c0_45, %c0_46] : memref<9x64x64xbf16, #tpu.memory_space<vmem>>, vector<1x64x64xbf16>
    %61 = vector.shape_cast %60 : vector<1x64x64xbf16> to vector<64x64xbf16>
    %cst_47 = arith.constant dense<0.000000e+00> : vector<224x64xf32>
    %62 = tpu.matmul %59, %61, %cst_47 {dimension_numbers = #tpu.dot_dimension_numbers<[1], [0], [0], [1], [0, 0, 1, 1], [], []>} : vector<224x64xbf16>, vector<64x64xbf16>, vector<224x64xf32> -> vector<224x64xf32>
    %63 = arith.addf %56, %62 : vector<224x64xf32>
    %c0_48 = arith.constant 0 : index
    %c0_49 = arith.constant 0 : index
    %64 = vector.load %arg4[%c0_48, %c0_49] : memref<8x64xf32, #tpu.memory_space<vmem>>, vector<1x64xf32>
    %65 = vector.broadcast %64 : vector<1x64xf32> to vector<224x64xf32>
    %66 = arith.addf %63, %65 : vector<224x64xf32>
    %c0_50 = arith.constant 0 : index
    %c0_51 = arith.constant 0 : index
    %67 = vector.load %arg5[%c0_50, %c0_51] : memref<224x1xf32, #tpu.memory_space<vmem>>, vector<224x1xf32>
    %68 = vector.broadcast %67 : vector<224x1xf32> to vector<224x64xf32>
    %69 = arith.mulf %66, %68 : vector<224x64xf32>
    %cst_52 = arith.constant dense<0.000000e+00> : vector<64xf32>
    %70 = vector.multi_reduction <add>, %69, %cst_52 [0] : vector<224x64xf32> to vector<64xf32>
    %71 = vector.shape_cast %70 : vector<64xf32> to vector<1x64xf32>
    %cst_53 = arith.constant 0.00510204071 : f32
    %72 = vector.broadcast %cst_53 : f32 to vector<1x64xf32>
    %73 = arith.mulf %71, %72 : vector<1x64xf32>
    %74 = vector.broadcast %73 : vector<1x64xf32> to vector<224x64xf32>
    %75 = arith.subf %66, %74 : vector<224x64xf32>
    %76 = arith.mulf %75, %75 : vector<224x64xf32>
    %77 = vector.broadcast %67 : vector<224x1xf32> to vector<224x64xf32>
    %78 = arith.mulf %76, %77 : vector<224x64xf32>
    %cst_54 = arith.constant dense<0.000000e+00> : vector<64xf32>
    %79 = vector.multi_reduction <add>, %78, %cst_54 [0] : vector<224x64xf32> to vector<64xf32>
    %80 = vector.shape_cast %79 : vector<64xf32> to vector<1x64xf32>
    %cst_55 = arith.constant 0.00510204071 : f32
    %81 = vector.broadcast %cst_55 : f32 to vector<1x64xf32>
    %82 = arith.mulf %80, %81 : vector<1x64xf32>
    %cst_56 = arith.constant 9.99999974E-6 : f32
    %83 = vector.broadcast %cst_56 : f32 to vector<1x64xf32>
    %84 = arith.addf %82, %83 : vector<1x64xf32>
    %85 = math.rsqrt %84 : vector<1x64xf32>
    %86 = vector.broadcast %85 : vector<1x64xf32> to vector<224x64xf32>
    %87 = arith.mulf %75, %86 : vector<224x64xf32>
    %c1_57 = arith.constant 1 : index
    %c0_58 = arith.constant 0 : index
    %88 = vector.load %arg4[%c1_57, %c0_58] : memref<8x64xf32, #tpu.memory_space<vmem>>, vector<1x64xf32>
    %89 = vector.broadcast %88 : vector<1x64xf32> to vector<224x64xf32>
    %90 = arith.mulf %87, %89 : vector<224x64xf32>
    %c2_59 = arith.constant 2 : index
    %c0_60 = arith.constant 0 : index
    %91 = vector.load %arg4[%c2_59, %c0_60] : memref<8x64xf32, #tpu.memory_space<vmem>>, vector<1x64xf32>
    %92 = vector.broadcast %91 : vector<1x64xf32> to vector<224x64xf32>
    %93 = arith.addf %90, %92 : vector<224x64xf32>
    %cst_61 = arith.constant 0.000000e+00 : f32
    %94 = vector.broadcast %cst_61 : f32 to vector<224x64xf32>
    %95 = arith.maximumf %93, %94 : vector<224x64xf32>
    %cst_62 = arith.constant 0.000000e+00 : f32
    %96 = vector.broadcast %cst_62 : f32 to vector<8x64xf32>
    %c224 = arith.constant 224 : index
    %c0_63 = arith.constant 0 : index
    %97 = vector.load %arg8[%c224, %c0_63] : memref<232x64xf32, #tpu.memory_space<vmem>>, vector<8x64xf32>
    tpu.vector_store %arg8[%c224, %c0_63], %96 {strides = array<i32>} : memref<232x64xf32, #tpu.memory_space<vmem>>, vector<8x64xf32>,
    %c0_64 = arith.constant 0 : index
    %c0_65 = arith.constant 0 : index
    %98 = vector.load %arg8[%c0_64, %c0_65] : memref<232x64xf32, #tpu.memory_space<vmem>>, vector<224x64xf32>
    tpu.vector_store %arg8[%c0_64, %c0_65], %95 {strides = array<i32>} : memref<232x64xf32, #tpu.memory_space<vmem>>, vector<224x64xf32>,
    %cst_66 = arith.constant 0.000000e+00 : f32
    %99 = vector.broadcast %cst_66 : f32 to vector<192x64xf32>
    %c0_67 = arith.constant 0 : index
    %c0_68 = arith.constant 0 : index
    %100 = vector.load %arg8[%c0_67, %c0_68] : memref<232x64xf32, #tpu.memory_space<vmem>>, vector<192x64xf32>
    %101 = arith.truncf %100 : vector<192x64xf32> to vector<192x64xbf16>
    %c0_69 = arith.constant 0 : index
    %c0_70 = arith.constant 0 : index
    %c0_71 = arith.constant 0 : index
    %102 = vector.load %arg3[%c0_69, %c0_70, %c0_71] : memref<9x64x64xbf16, #tpu.memory_space<vmem>>, vector<1x64x64xbf16>
    %103 = vector.shape_cast %102 : vector<1x64x64xbf16> to vector<64x64xbf16>
    %cst_72 = arith.constant dense<0.000000e+00> : vector<192x64xf32>
    %104 = tpu.matmul %101, %103, %cst_72 {dimension_numbers = #tpu.dot_dimension_numbers<[1], [0], [0], [1], [0, 0, 1, 1], [], []>} : vector<192x64xbf16>, vector<64x64xbf16>, vector<192x64xf32> -> vector<192x64xf32>
    %105 = arith.addf %99, %104 : vector<192x64xf32>
    %c1_73 = arith.constant 1 : index
    %c0_74 = arith.constant 0 : index
    %106 = vector.load %arg8[%c1_73, %c0_74] : memref<232x64xf32, #tpu.memory_space<vmem>>, vector<192x64xf32>
    %107 = arith.truncf %106 : vector<192x64xf32> to vector<192x64xbf16>
    %c1_75 = arith.constant 1 : index
    %c0_76 = arith.constant 0 : index
    %c0_77 = arith.constant 0 : index
    %108 = vector.load %arg3[%c1_75, %c0_76, %c0_77] : memref<9x64x64xbf16, #tpu.memory_space<vmem>>, vector<1x64x64xbf16>
    %109 = vector.shape_cast %108 : vector<1x64x64xbf16> to vector<64x64xbf16>
    %cst_78 = arith.constant dense<0.000000e+00> : vector<192x64xf32>
    %110 = tpu.matmul %107, %109, %cst_78 {dimension_numbers = #tpu.dot_dimension_numbers<[1], [0], [0], [1], [0, 0, 1, 1], [], []>} : vector<192x64xbf16>, vector<64x64xbf16>, vector<192x64xf32> -> vector<192x64xf32>
    %111 = arith.addf %105, %110 : vector<192x64xf32>
    %c2_79 = arith.constant 2 : index
    %c0_80 = arith.constant 0 : index
    %112 = vector.load %arg8[%c2_79, %c0_80] : memref<232x64xf32, #tpu.memory_space<vmem>>, vector<192x64xf32>
    %113 = arith.truncf %112 : vector<192x64xf32> to vector<192x64xbf16>
    %c2_81 = arith.constant 2 : index
    %c0_82 = arith.constant 0 : index
    %c0_83 = arith.constant 0 : index
    %114 = vector.load %arg3[%c2_81, %c0_82, %c0_83] : memref<9x64x64xbf16, #tpu.memory_space<vmem>>, vector<1x64x64xbf16>
    %115 = vector.shape_cast %114 : vector<1x64x64xbf16> to vector<64x64xbf16>
    %cst_84 = arith.constant dense<0.000000e+00> : vector<192x64xf32>
    %116 = tpu.matmul %113, %115, %cst_84 {dimension_numbers = #tpu.dot_dimension_numbers<[1], [0], [0], [1], [0, 0, 1, 1], [], []>} : vector<192x64xbf16>, vector<64x64xbf16>, vector<192x64xf32> -> vector<192x64xf32>
    %117 = arith.addf %111, %116 : vector<192x64xf32>
    %c16_85 = arith.constant 16 : index
    %c0_86 = arith.constant 0 : index
    %118 = vector.load %arg8[%c16_85, %c0_86] : memref<232x64xf32, #tpu.memory_space<vmem>>, vector<192x64xf32>
    %119 = arith.truncf %118 : vector<192x64xf32> to vector<192x64xbf16>
    %c3_87 = arith.constant 3 : index
    %c0_88 = arith.constant 0 : index
    %c0_89 = arith.constant 0 : index
    %120 = vector.load %arg3[%c3_87, %c0_88, %c0_89] : memref<9x64x64xbf16, #tpu.memory_space<vmem>>, vector<1x64x64xbf16>
    %121 = vector.shape_cast %120 : vector<1x64x64xbf16> to vector<64x64xbf16>
    %cst_90 = arith.constant dense<0.000000e+00> : vector<192x64xf32>
    %122 = tpu.matmul %119, %121, %cst_90 {dimension_numbers = #tpu.dot_dimension_numbers<[1], [0], [0], [1], [0, 0, 1, 1], [], []>} : vector<192x64xbf16>, vector<64x64xbf16>, vector<192x64xf32> -> vector<192x64xf32>
    %123 = arith.addf %117, %122 : vector<192x64xf32>
    %c17_91 = arith.constant 17 : index
    %c0_92 = arith.constant 0 : index
    %124 = vector.load %arg8[%c17_91, %c0_92] : memref<232x64xf32, #tpu.memory_space<vmem>>, vector<192x64xf32>
    %125 = arith.truncf %124 : vector<192x64xf32> to vector<192x64xbf16>
    %c4_93 = arith.constant 4 : index
    %c0_94 = arith.constant 0 : index
    %c0_95 = arith.constant 0 : index
    %126 = vector.load %arg3[%c4_93, %c0_94, %c0_95] : memref<9x64x64xbf16, #tpu.memory_space<vmem>>, vector<1x64x64xbf16>
    %127 = vector.shape_cast %126 : vector<1x64x64xbf16> to vector<64x64xbf16>
    %cst_96 = arith.constant dense<0.000000e+00> : vector<192x64xf32>
    %128 = tpu.matmul %125, %127, %cst_96 {dimension_numbers = #tpu.dot_dimension_numbers<[1], [0], [0], [1], [0, 0, 1, 1], [], []>} : vector<192x64xbf16>, vector<64x64xbf16>, vector<192x64xf32> -> vector<192x64xf32>
    %129 = arith.addf %123, %128 : vector<192x64xf32>
    %c18_97 = arith.constant 18 : index
    %c0_98 = arith.constant 0 : index
    %130 = vector.load %arg8[%c18_97, %c0_98] : memref<232x64xf32, #tpu.memory_space<vmem>>, vector<192x64xf32>
    %131 = arith.truncf %130 : vector<192x64xf32> to vector<192x64xbf16>
    %c5_99 = arith.constant 5 : index
    %c0_100 = arith.constant 0 : index
    %c0_101 = arith.constant 0 : index
    %132 = vector.load %arg3[%c5_99, %c0_100, %c0_101] : memref<9x64x64xbf16, #tpu.memory_space<vmem>>, vector<1x64x64xbf16>
    %133 = vector.shape_cast %132 : vector<1x64x64xbf16> to vector<64x64xbf16>
    %cst_102 = arith.constant dense<0.000000e+00> : vector<192x64xf32>
    %134 = tpu.matmul %131, %133, %cst_102 {dimension_numbers = #tpu.dot_dimension_numbers<[1], [0], [0], [1], [0, 0, 1, 1], [], []>} : vector<192x64xbf16>, vector<64x64xbf16>, vector<192x64xf32> -> vector<192x64xf32>
    %135 = arith.addf %129, %134 : vector<192x64xf32>
    %c32_103 = arith.constant 32 : index
    %c0_104 = arith.constant 0 : index
    %136 = vector.load %arg8[%c32_103, %c0_104] : memref<232x64xf32, #tpu.memory_space<vmem>>, vector<192x64xf32>
    %137 = arith.truncf %136 : vector<192x64xf32> to vector<192x64xbf16>
    %c6_105 = arith.constant 6 : index
    %c0_106 = arith.constant 0 : index
    %c0_107 = arith.constant 0 : index
    %138 = vector.load %arg3[%c6_105, %c0_106, %c0_107] : memref<9x64x64xbf16, #tpu.memory_space<vmem>>, vector<1x64x64xbf16>
    %139 = vector.shape_cast %138 : vector<1x64x64xbf16> to vector<64x64xbf16>
    %cst_108 = arith.constant dense<0.000000e+00> : vector<192x64xf32>
    %140 = tpu.matmul %137, %139, %cst_108 {dimension_numbers = #tpu.dot_dimension_numbers<[1], [0], [0], [1], [0, 0, 1, 1], [], []>} : vector<192x64xbf16>, vector<64x64xbf16>, vector<192x64xf32> -> vector<192x64xf32>
    %141 = arith.addf %135, %140 : vector<192x64xf32>
    %c33_109 = arith.constant 33 : index
    %c0_110 = arith.constant 0 : index
    %142 = vector.load %arg8[%c33_109, %c0_110] : memref<232x64xf32, #tpu.memory_space<vmem>>, vector<192x64xf32>
    %143 = arith.truncf %142 : vector<192x64xf32> to vector<192x64xbf16>
    %c7_111 = arith.constant 7 : index
    %c0_112 = arith.constant 0 : index
    %c0_113 = arith.constant 0 : index
    %144 = vector.load %arg3[%c7_111, %c0_112, %c0_113] : memref<9x64x64xbf16, #tpu.memory_space<vmem>>, vector<1x64x64xbf16>
    %145 = vector.shape_cast %144 : vector<1x64x64xbf16> to vector<64x64xbf16>
    %cst_114 = arith.constant dense<0.000000e+00> : vector<192x64xf32>
    %146 = tpu.matmul %143, %145, %cst_114 {dimension_numbers = #tpu.dot_dimension_numbers<[1], [0], [0], [1], [0, 0, 1, 1], [], []>} : vector<192x64xbf16>, vector<64x64xbf16>, vector<192x64xf32> -> vector<192x64xf32>
    %147 = arith.addf %141, %146 : vector<192x64xf32>
    %c34_115 = arith.constant 34 : index
    %c0_116 = arith.constant 0 : index
    %148 = vector.load %arg8[%c34_115, %c0_116] : memref<232x64xf32, #tpu.memory_space<vmem>>, vector<192x64xf32>
    %149 = arith.truncf %148 : vector<192x64xf32> to vector<192x64xbf16>
    %c8_117 = arith.constant 8 : index
    %c0_118 = arith.constant 0 : index
    %c0_119 = arith.constant 0 : index
    %150 = vector.load %arg3[%c8_117, %c0_118, %c0_119] : memref<9x64x64xbf16, #tpu.memory_space<vmem>>, vector<1x64x64xbf16>
    %151 = vector.shape_cast %150 : vector<1x64x64xbf16> to vector<64x64xbf16>
    %cst_120 = arith.constant dense<0.000000e+00> : vector<192x64xf32>
    %152 = tpu.matmul %149, %151, %cst_120 {dimension_numbers = #tpu.dot_dimension_numbers<[1], [0], [0], [1], [0, 0, 1, 1], [], []>} : vector<192x64xbf16>, vector<64x64xbf16>, vector<192x64xf32> -> vector<192x64xf32>
    %153 = arith.addf %147, %152 : vector<192x64xf32>
    %c3_121 = arith.constant 3 : index
    %c0_122 = arith.constant 0 : index
    %154 = vector.load %arg4[%c3_121, %c0_122] : memref<8x64xf32, #tpu.memory_space<vmem>>, vector<1x64xf32>
    %155 = vector.broadcast %154 : vector<1x64xf32> to vector<192x64xf32>
    %156 = arith.addf %153, %155 : vector<192x64xf32>
    %c0_123 = arith.constant 0 : index
    %c0_124 = arith.constant 0 : index
    %157 = vector.load %arg6[%c0_123, %c0_124] : memref<192x1xf32, #tpu.memory_space<vmem>>, vector<192x1xf32>
    %158 = vector.broadcast %157 : vector<192x1xf32> to vector<192x64xf32>
    %159 = arith.mulf %156, %158 : vector<192x64xf32>
    %cst_125 = arith.constant dense<0.000000e+00> : vector<64xf32>
    %160 = vector.multi_reduction <add>, %159, %cst_125 [0] : vector<192x64xf32> to vector<64xf32>
    %161 = vector.shape_cast %160 : vector<64xf32> to vector<1x64xf32>
    %cst_126 = arith.constant 0.0069444445 : f32
    %162 = vector.broadcast %cst_126 : f32 to vector<1x64xf32>
    %163 = arith.mulf %161, %162 : vector<1x64xf32>
    %164 = vector.broadcast %163 : vector<1x64xf32> to vector<192x64xf32>
    %165 = arith.subf %156, %164 : vector<192x64xf32>
    %166 = arith.mulf %165, %165 : vector<192x64xf32>
    %167 = vector.broadcast %157 : vector<192x1xf32> to vector<192x64xf32>
    %168 = arith.mulf %166, %167 : vector<192x64xf32>
    %cst_127 = arith.constant dense<0.000000e+00> : vector<64xf32>
    %169 = vector.multi_reduction <add>, %168, %cst_127 [0] : vector<192x64xf32> to vector<64xf32>
    %170 = vector.shape_cast %169 : vector<64xf32> to vector<1x64xf32>
    %cst_128 = arith.constant 0.0069444445 : f32
    %171 = vector.broadcast %cst_128 : f32 to vector<1x64xf32>
    %172 = arith.mulf %170, %171 : vector<1x64xf32>
    %cst_129 = arith.constant 9.99999974E-6 : f32
    %173 = vector.broadcast %cst_129 : f32 to vector<1x64xf32>
    %174 = arith.addf %172, %173 : vector<1x64xf32>
    %175 = math.rsqrt %174 : vector<1x64xf32>
    %176 = vector.broadcast %175 : vector<1x64xf32> to vector<192x64xf32>
    %177 = arith.mulf %165, %176 : vector<192x64xf32>
    %c4_130 = arith.constant 4 : index
    %c0_131 = arith.constant 0 : index
    %178 = vector.load %arg4[%c4_130, %c0_131] : memref<8x64xf32, #tpu.memory_space<vmem>>, vector<1x64xf32>
    %179 = vector.broadcast %178 : vector<1x64xf32> to vector<192x64xf32>
    %180 = arith.mulf %177, %179 : vector<192x64xf32>
    %c5_132 = arith.constant 5 : index
    %c0_133 = arith.constant 0 : index
    %181 = vector.load %arg4[%c5_132, %c0_133] : memref<8x64xf32, #tpu.memory_space<vmem>>, vector<1x64xf32>
    %182 = vector.broadcast %181 : vector<1x64xf32> to vector<192x64xf32>
    %183 = arith.addf %180, %182 : vector<192x64xf32>
    %c0_134 = arith.constant 0 : index
    %c34_135 = arith.constant 34 : index
    %c0_136 = arith.constant 0 : index
    %184 = vector.load %arg1[%c0_134, %c34_135, %c0_136] : memref<1x264x64xf32, #tpu.memory_space<vmem>>, vector<1x192x64xf32>
    %185 = vector.shape_cast %184 : vector<1x192x64xf32> to vector<192x64xf32>
    %186 = arith.addf %183, %185 : vector<192x64xf32>
    %c0_137 = arith.constant 0 : index
    %c0_138 = arith.constant 0 : index
    %c0_139 = arith.constant 0 : index
    %187 = vector.load %arg7[%c0_137, %c0_138, %c0_139] : memref<1x192x64xf32, #tpu.memory_space<vmem>>, vector<1x192x64xf32>
    %188 = vector.shape_cast %187 : vector<1x192x64xf32> to vector<192x64xf32>
    %189 = vector.shape_cast %186 : vector<192x64xf32> to vector<1x192x64xf32>
    tpu.vector_store %arg7[%c0_137, %c0_138, %c0_139], %189 {strides = array<i32>} : memref<1x192x64xf32, #tpu.memory_space<vmem>>, vector<1x192x64xf32>,
    return
  }
  func.func @transform_0(%arg0: i32) -> (i32, i32, i32) {
    %c0_i32 = arith.constant 0 : i32
    %c0_i32_0 = arith.constant 0 : i32
    %c0_i32_1 = arith.constant 0 : i32
    return %arg0, %c0_i32, %c0_i32_0 : i32, i32, i32
  }
  func.func @transform_1(%arg0: i32) -> (i32, i32, i32) {
    %c0_i32 = arith.constant 0 : i32
    %c0_i32_0 = arith.constant 0 : i32
    %c0_i32_1 = arith.constant 0 : i32
    %c0_i32_2 = arith.constant 0 : i32
    return %c0_i32, %c0_i32_0, %c0_i32_1 : i32, i32, i32
  }
  func.func @transform_2(%arg0: i32) -> (i32, i32, i32) {
    %c0_i32 = arith.constant 0 : i32
    %c0_i32_0 = arith.constant 0 : i32
    %c0_i32_1 = arith.constant 0 : i32
    %c0_i32_2 = arith.constant 0 : i32
    return %c0_i32, %c0_i32_0, %c0_i32_1 : i32, i32, i32
  }
  func.func @transform_3(%arg0: i32) -> (i32, i32) {
    %c0_i32 = arith.constant 0 : i32
    %c0_i32_0 = arith.constant 0 : i32
    %c0_i32_1 = arith.constant 0 : i32
    return %c0_i32, %c0_i32_0 : i32, i32
  }
  func.func @transform_4(%arg0: i32) -> (i32, i32) {
    %c0_i32 = arith.constant 0 : i32
    %c0_i32_0 = arith.constant 0 : i32
    %c0_i32_1 = arith.constant 0 : i32
    return %c0_i32, %c0_i32_0 : i32, i32
  }
  func.func @transform_5(%arg0: i32) -> (i32, i32) {
    %c0_i32 = arith.constant 0 : i32
    %c0_i32_0 = arith.constant 0 : i32
    %c0_i32_1 = arith.constant 0 : i32
    return %c0_i32, %c0_i32_0 : i32, i32
  }
  func.func @transform_6(%arg0: i32) -> (i32, i32, i32) {
    %c0_i32 = arith.constant 0 : i32
    %c0_i32_0 = arith.constant 0 : i32
    %c0_i32_1 = arith.constant 0 : i32
    return %arg0, %c0_i32, %c0_i32_0 : i32, i32, i32
  }
}

</mosaic_0001>

<llo_original>
// kernel: residual_block_forward.1
$region0: #{residual_block_forward.1}
  #allocation0 [shape = 'u32[]', space=smem, size = 0x4, offset = 0x4, fixed_abs, tag = 'smem constant byte address 0x4 - core index']
  #allocation1 [shape = 'u32[144,128]{1,0:T(1,128)}', space=vmem, size = 0x12000, scoped, tag = 'internal scratch']
  #allocation2 [shape = 'f32[232,64]{1,0:T(8,128)}', space=vmem, size = 0x1d000, scoped, tag = 'scratch operand']
  %s0 = inlined_call_operand.vmem [shape: f32[2,264,64], index: 0, kind: input, shape index: {}]
  %s1 = inlined_call_operand.vmem [shape: bf16[9,64,64], index: 1, kind: input, shape index: {}]
  %s2 = inlined_call_operand.vmem [shape: bf16[9,64,64], index: 2, kind: input, shape index: {}]
  %s3 = inlined_call_operand.vmem [shape: f32[8,64], index: 3, kind: input, shape index: {}]
  %s4 = inlined_call_operand.vmem [shape: f32[224,1], index: 4, kind: input, shape index: {}]
  %s5 = inlined_call_operand.vmem [shape: f32[192,1], index: 5, kind: input, shape index: {}]
  %s6 = inlined_call_operand.vmem [shape: f32[2,192,64], index: 6, kind: output, shape index: {}]
  %s7 = sld [smem:[#allocation0]]
  $region57: #{residual_block_forward.1} parent=0
    _
  %s9 = ssub.s32 1, %s7
  %s10 = scalar_select 0, %s9, %s7
  loop: start=0, step=1, limit=4
  $region2: #{residual_block_forward.1} parent=0 // loop_pre_header
    _
  $region3: #{residual_block_forward.1} parent=0 // loop_header
    %s12 = sphi 0, %s16
    %p13 = scmp.ge.s32.totalorder %s12, 4
    %s22 = sphi 0, %s24
    %s25 = sphi 0, %s22
    %s26 = sphi 0, %s25
    %s42 = sphi 0, %s26
    %s46 = sphi 0, %s46
    %s48 = sphi 0, %s46
    %s49 = sphi 0, %s48
    %s63 = sphi 0, %s49
    %s67 = sphi 0, %s67
    %s69 = sphi 0, %s67
    %s70 = sphi 0, %s69
    %s84 = sphi 0, %s70
    %s88 = sphi 0, %s88
    %s90 = sphi 0, %s88
    %s91 = sphi 0, %s90
    %s105 = sphi 0, %s91
    %s109 = sphi 0, %s109
    %s111 = sphi 0, %s109
    %s112 = sphi 0, %s111
    %s126 = sphi 0, %s112
    %s130 = sphi 0, %s130
    %s132 = sphi 0, %s130
    %s133 = sphi 0, %s132
    %s147 = sphi 0, %s133
    %s153 = sphi 0, %s155
    %s156 = sphi 0, %s153
    %s157 = sphi 0, %s156
    %s173 = sphi 0, %s157
  $region4: #{residual_block_forward.1} parent=0 // loop_header_branch
    %15 = sbr.rel (%p13) target = $region8
  $region5: #{residual_block_forward.1} parent=0 // loop_body
    %s17 = ssub.s32 %s12, 1
    %s18 = ssub.s32 %s12, 2
    %s19 = sadd.s32 %s12, 1
    %s20 = ssub.s32 %s12, %s19
    %p21 = scmp.eq.s32.totalorder %s20, 0
    %s23 = sadd.s32 %s22, 1
    %s24 = scalar_select %p21, %s22, %s23
    %p27 = pneg %p21
    %p28 = scmp.eq.s32.totalorder %s12, 1
    %p29 = por %p27, %p28
    %p30 = scmp.ne.s32.totalorder %s22, %s25
    %p31 = scmp.eq.s32.totalorder %s12, 0
    %p32 = por %p30, %p31
    %p33 = scmp.ne.s32.totalorder %s22, %s25
    %p34 = scmp.eq.s32.totalorder %s17, 1
    %p35 = por %p33, %p34
    %p36 = scmp.ne.s32.totalorder %s25, %s26
    %p37 = scmp.eq.s32.totalorder %s17, 0
    %p38 = por %p36, %p37
    %p39 = scmp.ne.s32.totalorder %s25, %s26
    %p40 = scmp.eq.s32.totalorder %s18, 1
    %p41 = por %p39, %p40
    %p43 = scmp.ne.s32.totalorder %s26, %s42
    %p44 = scmp.eq.s32.totalorder %s18, 0
    %p45 = por %p43, %p44
    %s47 = sadd.s32 %s46, 1
    %p50 = scmp.eq.s32.totalorder %s12, 1
    %p51 = scmp.ne.s32.totalorder %s46, %s48
    %p52 = scmp.eq.s32.totalorder %s12, 0
    %p53 = por %p51, %p52
    %p54 = scmp.ne.s32.totalorder %s46, %s48
    %p55 = scmp.eq.s32.totalorder %s17, 1
    %p56 = por %p54, %p55
    %p57 = scmp.ne.s32.totalorder %s48, %s49
    %p58 = scmp.eq.s32.totalorder %s17, 0
    %p59 = por %p57, %p58
    %p60 = scmp.ne.s32.totalorder %s48, %s49
    %p61 = scmp.eq.s32.totalorder %s18, 1
    %p62 = por %p60, %p61
    %p64 = scmp.ne.s32.totalorder %s49, %s63
    %p65 = scmp.eq.s32.totalorder %s18, 0
    %p66 = por %p64, %p65
    %s68 = sadd.s32 %s67, 1
    %p71 = scmp.eq.s32.totalorder %s12, 1
    %p72 = scmp.ne.s32.totalorder %s67, %s69
    %p73 = scmp.eq.s32.totalorder %s12, 0
    %p74 = por %p72, %p73
    %p75 = scmp.ne.s32.totalorder %s67, %s69
    %p76 = scmp.eq.s32.totalorder %s17, 1
    %p77 = por %p75, %p76
    %p78 = scmp.ne.s32.totalorder %s69, %s70
    %p79 = scmp.eq.s32.totalorder %s17, 0
    %p80 = por %p78, %p79
    %p81 = scmp.ne.s32.totalorder %s69, %s70
    %p82 = scmp.eq.s32.totalorder %s18, 1
    %p83 = por %p81, %p82
    %p85 = scmp.ne.s32.totalorder %s70, %s84
    %p86 = scmp.eq.s32.totalorder %s18, 0
    %p87 = por %p85, %p86
    %s89 = sadd.s32 %s88, 1
    %p92 = scmp.eq.s32.totalorder %s12, 1
    %p93 = scmp.ne.s32.totalorder %s88, %s90
    %p94 = scmp.eq.s32.totalorder %s12, 0
    %p95 = por %p93, %p94
    %p96 = scmp.ne.s32.totalorder %s88, %s90
    %p97 = scmp.eq.s32.totalorder %s17, 1
    %p98 = por %p96, %p97
    %p99 = scmp.ne.s32.totalorder %s90, %s91
    %p100 = scmp.eq.s32.totalorder %s17, 0
    %p101 = por %p99, %p100
    %p102 = scmp.ne.s32.totalorder %s90, %s91
    %p103 = scmp.eq.s32.totalorder %s18, 1
    %p104 = por %p102, %p103
    %p106 = scmp.ne.s32.totalorder %s91, %s105
    %p107 = scmp.eq.s32.totalorder %s18, 0
    %p108 = por %p106, %p107
    %s110 = sadd.s32 %s109, 1
    %p113 = scmp.eq.s32.totalorder %s12, 1
    %p114 = scmp.ne.s32.totalorder %s109, %s111
    %p115 = scmp.eq.s32.totalorder %s12, 0
    %p116 = por %p114, %p115
    %p117 = scmp.ne.s32.totalorder %s109, %s111
    %p118 = scmp.eq.s32.totalorder %s17, 1
    %p119 = por %p117, %p118
    %p120 = scmp.ne.s32.totalorder %s111, %s112
    %p121 = scmp.eq.s32.totalorder %s17, 0
    %p122 = por %p120, %p121
    %p123 = scmp.ne.s32.totalorder %s111, %s112
    %p124 = scmp.eq.s32.totalorder %s18, 1
    %p125 = por %p123, %p124
    %p127 = scmp.ne.s32.totalorder %s112, %s126
    %p128 = scmp.eq.s32.totalorder %s18, 0
    %p129 = por %p127, %p128
    %s131 = sadd.s32 %s130, 1
    %p134 = scmp.eq.s32.totalorder %s12, 1
    %p135 = scmp.ne.s32.totalorder %s130, %s132
    %p136 = scmp.eq.s32.totalorder %s12, 0
    %p137 = por %p135, %p136
    %p138 = scmp.ne.s32.totalorder %s130, %s132
    %p139 = scmp.eq.s32.totalorder %s17, 1
    %p140 = por %p138, %p139
    %p141 = scmp.ne.s32.totalorder %s132, %s133
    %p142 = scmp.eq.s32.totalorder %s17, 0
    %p143 = por %p141, %p142
    %p144 = scmp.ne.s32.totalorder %s132, %s133
    %p145 = scmp.eq.s32.totalorder %s18, 1
    %p146 = por %p144, %p145
    %p148 = scmp.ne.s32.totalorder %s133, %s147
    %p149 = scmp.eq.s32.totalorder %s18, 0
    %p150 = por %p148, %p149
    %s151 = ssub.s32 %s12, %s19
    %p152 = scmp.eq.s32.totalorder %s151, 0
    %s154 = sadd.s32 %s153, 1
    %s155 = scalar_select %p152, %s153, %s154
    %p158 = pneg %p152
    %p159 = scmp.eq.s32.totalorder %s12, 1
    %p160 = por %p158, %p159
    %p161 = scmp.ne.s32.totalorder %s153, %s156
    %p162 = scmp.eq.s32.totalorder %s12, 0
    %p163 = por %p161, %p162
    %p164 = scmp.ne.s32.totalorder %s153, %s156
    %p165 = scmp.eq.s32.totalorder %s17, 1
    %p166 = por %p164, %p165
    %p167 = scmp.ne.s32.totalorder %s156, %s157
    %p168 = scmp.eq.s32.totalorder %s17, 0
    %p169 = por %p167, %p168
    %p170 = scmp.ne.s32.totalorder %s156, %s157
    %p171 = scmp.eq.s32.totalorder %s18, 1
    %p172 = por %p170, %p171
    %p174 = scmp.ne.s32.totalorder %s157, %s173
    %p175 = scmp.eq.s32.totalorder %s18, 0
    %p176 = por %p174, %p175
    %p177 = scmp.le.s32.totalorder 1, %s12
    %p178 = scmp.lt.s32.totalorder %s12, 3
    %p179 = pnand %p177, %p178
    %p180 = pneg %p179
    // Predicated region
    $region9: #{residual_block_forward.1} parent=5 // pred_check
      _
    $region10: #{residual_block_forward.1} parent=5 // pred_check_branch
      %182 = sbr.rel (%p179) target = $region12
    $region11: #{residual_block_forward.1} parent=5 // pred_region
      %s183 = ssub.s32 %s12, 1
      // Predicated region
      $region13: #{residual_block_forward.1} parent=11 // pred_check
        %p184 = pneg %p59
      $region14: #{residual_block_forward.1} parent=11 // pred_check_branch
        %186 = sbr.rel (%p184) target = $region16
      $region15: #{residual_block_forward.1} parent=11 // pred_region
        _
      $region16: #{residual_block_forward.1} parent=11 // pred_fallthru
        _
      // Predicated region
      $region17: #{residual_block_forward.1} parent=11 // pred_check
        %p187 = pneg %p80
      $region18: #{residual_block_forward.1} parent=11 // pred_check_branch
        %189 = sbr.rel (%p187) target = $region20
      $region19: #{residual_block_forward.1} parent=11 // pred_region
        _
      $region20: #{residual_block_forward.1} parent=11 // pred_fallthru
        _
      // Predicated region
      $region21: #{residual_block_forward.1} parent=11 // pred_check
        %p190 = pneg %p101
      $region22: #{residual_block_forward.1} parent=11 // pred_check_branch
        %192 = sbr.rel (%p190) target = $region24
      $region23: #{residual_block_forward.1} parent=11 // pred_region
        _
      $region24: #{residual_block_forward.1} parent=11 // pred_fallthru
        _
      // Predicated region
      $region25: #{residual_block_forward.1} parent=11 // pred_check
        %p193 = pneg %p122
      $region26: #{residual_block_forward.1} parent=11 // pred_check_branch
        %195 = sbr.rel (%p193) target = $region28
      $region27: #{residual_block_forward.1} parent=11 // pred_region
        _
      $region28: #{residual_block_forward.1} parent=11 // pred_fallthru
        _
      // Predicated region
      $region29: #{residual_block_forward.1} parent=11 // pred_check
        %p196 = pneg %p143
      $region30: #{residual_block_forward.1} parent=11 // pred_check_branch
        %198 = sbr.rel (%p196) target = $region32
      $region31: #{residual_block_forward.1} parent=11 // pred_region
        _
      $region32: #{residual_block_forward.1} parent=11 // pred_fallthru
        _
    $region12: #{residual_block_forward.1} parent=5 // pred_fallthru
      _
    %p199 = scmp.lt.s32.totalorder %s12, 2
    // Predicated region
    $region33: #{residual_block_forward.1} parent=5 // pred_check
      %p200 = pneg %p199
    $region34: #{residual_block_forward.1} parent=5 // pred_check_branch
      %202 = sbr.rel (%p200) target = $region36
    $region35: #{residual_block_forward.1} parent=5 // pred_region
      // Predicated region
      $region37: #{residual_block_forward.1} parent=35 // pred_check
        %p203 = pneg %p32
      $region38: #{residual_block_forward.1} parent=35 // pred_check_branch
        %205 = sbr.rel (%p203) target = $region40
      $region39: #{residual_block_forward.1} parent=35 // pred_region
        %p206 = scmp.lt.s32.totalorder %s12, 1
        %s207 = scalar_select %p206, %s12, 1
        %s208 = smul.addr %s207, 33
        %s209 = smul.addr %s208, 8
        %s210 = scalar_lea.vmem %s0, %s209
      $region40: #{residual_block_forward.1} parent=35 // pred_fallthru
        _
    $region36: #{residual_block_forward.1} parent=5 // pred_fallthru
      _
    %p211 = scmp.le.s32.totalorder 1, %s12
    %p212 = scmp.lt.s32.totalorder %s12, 3
    %p213 = pnand %p211, %p212
    %p214 = pneg %p213
    // Predicated region
    $region41: #{residual_block_forward.1} parent=5 // pred_check
      _
    $region42: #{residual_block_forward.1} parent=5 // pred_check_branch
      %216 = sbr.rel (%p213) target = $region44
    $region43: #{residual_block_forward.1} parent=5 // pred_region
      %s217 = ssub.s32 %s12, 1
      %p218 = scmp.lt.s32.totalorder %s17, 1
      %s219 = scalar_select %p218, %s17, 1
      %s220 = smul.addr %s219, 33
      %s221 = smul.addr %s220, 8
      %s222 = scalar_lea.vmem %s0, %s221
      %p223 = pneg %p38
      %p224 = pneg %p35
      %p225 = pneg %p59
      %p226 = pneg %p56
      %p227 = pneg %p80
      %p228 = pneg %p77
      %p229 = pneg %p101
      %p230 = pneg %p98
      %p231 = pneg %p122
      %p232 = pneg %p119
      %p233 = pneg %p143
      %p234 = pneg %p140
      %p235 = pneg %p169
      %p236 = pneg %p166
      %p237 = scmp.lt.s32.totalorder %s17, 1
      %s238 = scalar_select %p237, %s17, 1
      %s239 = smul.addr %s238, 24
      %s240 = smul.addr %s239, 8
      %s241 = scalar_lea.vmem %s6, %s240
      %p242 = scmp.lt.s32.totalorder %s17, 1
      %s243 = scalar_select %p242, %s17, 1
      %s244 = smul.addr %s243, 33
      %s245 = smul.addr %s244, 8
      %s246 = scalar_lea.vmem %s0, %s245
      %p247 = scmp.lt.s32.totalorder %s17, 1
      %s248 = scalar_select %p247, %s17, 1
      %s249 = smul.addr %s248, 24
      %s250 = smul.addr %s249, 8
      %s251 = scalar_lea.vmem %s6, %s250
      %v253 = vld [vmem:[%s246] sm:$0xff]
      %v254 = vld [vmem:[%s246 + $0x8] sm:$0xff]
      %v255 = vld [vmem:[%s246 + $0x10] sm:$0xff]
      %v256 = vld [vmem:[%s246 + $0x18] sm:$0xff]
      %v257 = vld [vmem:[%s246 + $0x20] sm:$0xff]
      %v258 = vld [vmem:[%s246 + $0x28] sm:$0xff]
      %v259 = vld [vmem:[%s246 + $0x30] sm:$0xff]
      %v260 = vld [vmem:[%s246 + $0x38] sm:$0xff]
      %v261 = vld [vmem:[%s246 + $0x40] sm:$0xff]
      %v262 = vld [vmem:[%s246 + $0x48] sm:$0xff]
      %v263 = vld [vmem:[%s246 + $0x50] sm:$0xff]
      %v264 = vld [vmem:[%s246 + $0x58] sm:$0xff]
      %v265 = vld [vmem:[%s246 + $0x60] sm:$0xff]
      %v266 = vld [vmem:[%s246 + $0x68] sm:$0xff]
      %v267 = vld [vmem:[%s246 + $0x70] sm:$0xff]
      %v268 = vld [vmem:[%s246 + $0x78] sm:$0xff]
      %v269 = vld [vmem:[%s246 + $0x80] sm:$0xff]
      %v270 = vld [vmem:[%s246 + $0x88] sm:$0xff]
      %v271 = vld [vmem:[%s246 + $0x90] sm:$0xff]
      %v272 = vld [vmem:[%s246 + $0x98] sm:$0xff]
      %v273 = vld [vmem:[%s246 + $0xa0] sm:$0xff]
      %v274 = vld [vmem:[%s246 + $0xa8] sm:$0xff]
      %v275 = vld [vmem:[%s246 + $0xb0] sm:$0xff]
      %v276 = vld [vmem:[%s246 + $0xb8] sm:$0xff]
      %v277 = vld [vmem:[%s246 + $0xc0] sm:$0xff]
      %v278 = vld [vmem:[%s246 + $0xc8] sm:$0xff]
      %v279 = vld [vmem:[%s246 + $0xd0] sm:$0xff]
      %v280 = vld [vmem:[%s246 + $0xd8] sm:$0xff]
      %v281 = vpack.c.bf16 %v254, %v253
      %v282 = vpack.c.bf16 %v256, %v255
      %v283 = vpack.c.bf16 %v258, %v257
      %v284 = vpack.c.bf16 %v260, %v259
      %v285 = vpack.c.bf16 %v262, %v261
      %v286 = vpack.c.bf16 %v264, %v263
      %v287 = vpack.c.bf16 %v266, %v265
      %v288 = vpack.c.bf16 %v268, %v267
      %v289 = vpack.c.bf16 %v270, %v269
      %v290 = vpack.c.bf16 %v272, %v271
      %v291 = vpack.c.bf16 %v274, %v273
      %v292 = vpack.c.bf16 %v276, %v275
      %v293 = vpack.c.bf16 %v278, %v277
      %v294 = vpack.c.bf16 %v280, %v279
      %v295 = vld [vmem:[%s1] sm:$0xf]
      %v296 = vld [vmem:[%s1 + $0x4] sm:$0xf]
      %v297 = vld [vmem:[%s1 + $0x8] sm:$0xf]
      %v298 = vld [vmem:[%s1 + $0xc] sm:$0xf]
      %v299 = vld [vmem:[%s1 + $0x10] sm:$0xf]
      %v300 = vld [vmem:[%s1 + $0x14] sm:$0xf]
      %v301 = vld [vmem:[%s1 + $0x18] sm:$0xf]
      %v302 = vld [vmem:[%s1 + $0x1c] sm:$0xf]
      %v303 = vld [vmem:[%s246 + $0x1] sm:$0xff]
      %v304 = vld [vmem:[%s246 + $0x9] sm:$0xff]
      %v305 = vld [vmem:[%s246 + $0x11] sm:$0xff]
      %v306 = vld [vmem:[%s246 + $0x19] sm:$0xff]
      %v307 = vld [vmem:[%s246 + $0x21] sm:$0xff]
      %v308 = vld [vmem:[%s246 + $0x29] sm:$0xff]
      %v309 = vld [vmem:[%s246 + $0x31] sm:$0xff]
      %v310 = vld [vmem:[%s246 + $0x39] sm:$0xff]
      %v311 = vld [vmem:[%s246 + $0x41] sm:$0xff]
      %v312 = vld [vmem:[%s246 + $0x49] sm:$0xff]
      %v313 = vld [vmem:[%s246 + $0x51] sm:$0xff]
      %v314 = vld [vmem:[%s246 + $0x59] sm:$0xff]
      %v315 = vld [vmem:[%s246 + $0x61] sm:$0xff]
      %v316 = vld [vmem:[%s246 + $0x69] sm:$0xff]
      %v317 = vld [vmem:[%s246 + $0x71] sm:$0xff]
      %v318 = vld [vmem:[%s246 + $0x79] sm:$0xff]
      %v319 = vld [vmem:[%s246 + $0x81] sm:$0xff]
      %v320 = vld [vmem:[%s246 + $0x89] sm:$0xff]
      %v321 = vld [vmem:[%s246 + $0x91] sm:$0xff]
      %v322 = vld [vmem:[%s246 + $0x99] sm:$0xff]
      %v323 = vld [vmem:[%s246 + $0xa1] sm:$0xff]
      %v324 = vld [vmem:[%s246 + $0xa9] sm:$0xff]
      %v325 = vld [vmem:[%s246 + $0xb1] sm:$0xff]
      %v326 = vld [vmem:[%s246 + $0xb9] sm:$0xff]
      %v327 = vld [vmem:[%s246 + $0xc1] sm:$0xff]
      %v328 = vld [vmem:[%s246 + $0xc9] sm:$0xff]
      %v329 = vld [vmem:[%s246 + $0xd1] sm:$0xff]
      %v330 = vld [vmem:[%s246 + $0xd9] sm:$0xff]
      %v331 = vpack.c.bf16 %v304, %v303
      %v332 = vpack.c.bf16 %v306, %v305
      %v333 = vpack.c.bf16 %v308, %v307
      %v334 = vpack.c.bf16 %v310, %v309
      %v335 = vpack.c.bf16 %v312, %v311
      %v336 = vpack.c.bf16 %v314, %v313
      %v337 = vpack.c.bf16 %v316, %v315
      %v338 = vpack.c.bf16 %v318, %v317
      %v339 = vpack.c.bf16 %v320, %v319
      %v340 = vpack.c.bf16 %v322, %v321
      %v341 = vpack.c.bf16 %v324, %v323
      %v342 = vpack.c.bf16 %v326, %v325
      %v343 = vpack.c.bf16 %v328, %v327
      %v344 = vpack.c.bf16 %v330, %v329
      %s345 = scalar_lea.vmem %s1, 32
      %v346 = vld [vmem:[%s345] sm:$0xf]
      %v347 = vld [vmem:[%s345 + $0x4] sm:$0xf]
      %v348 = vld [vmem:[%s345 + $0x8] sm:$0xf]
      %v349 = vld [vmem:[%s345 + $0xc] sm:$0xf]
      %v350 = vld [vmem:[%s345 + $0x10] sm:$0xf]
      %v351 = vld [vmem:[%s345 + $0x14] sm:$0xf]
      %v352 = vld [vmem:[%s345 + $0x18] sm:$0xf]
      %v353 = vld [vmem:[%s345 + $0x1c] sm:$0xf]
      %v362 = vunpack.c.l.b16 %v346
      %v363 = vunpack.c.l.b16 %v347
      %v364 = vunpack.c.l.b16 %v348
      %v365 = vunpack.c.l.b16 %v349
      %v366 = vunpack.c.l.b16 %v350
      %v367 = vunpack.c.l.b16 %v351
      %v368 = vunpack.c.l.b16 %v352
      %v369 = vunpack.c.l.b16 %v353
      %v370 = vpack.c.b16 %v363, %v362
      %v371 = vpack.c.b16 %v365, %v364
      %v372 = vpack.c.b16 %v367, %v366
      %v373 = vpack.c.b16 %v369, %v368
      %vm378 = vcmask 523264
      %v380 = vsel %vm378, %v331, 0
      %v383 = vsel %vm378, %v332, 0
      %v386 = vsel %vm378, %v333, 0
      %v389 = vsel %vm378, %v334, 0
      %v392 = vsel %vm378, %v335, 0
      %v395 = vsel %vm378, %v336, 0
      %v398 = vsel %vm378, %v337, 0
      %v401 = vsel %vm378, %v338, 0
      %v404 = vsel %vm378, %v339, 0
      %v407 = vsel %vm378, %v340, 0
      %v410 = vsel %vm378, %v341, 0
      %v413 = vsel %vm378, %v342, 0
      %v416 = vsel %vm378, %v343, 0
      %v419 = vsel %vm378, %v344, 0
      %421 = vmatprep.subr.bf16.mxu0 0
      %422 = vmatpush1.bf16.msra.mxu0 %v370
      %423 = vmatprep.subr.bf16.mxu0 0
      %424 = vmatpush1.bf16.msra.mxu0 %v371
      %425 = vmatprep.subr.bf16.mxu0 0
      %426 = vmatpush1.bf16.msra.mxu0 %v372
      %427 = vmatprep.subr.bf16.mxu0 0
      %428 = vmatpush1.bf16.msra.mxu0 %v373
      %429 = vmatprep.subr.bf16.mxu0 0
      %430 = vmatpush1.bf16.msra.mxu0 0
      %431 = vmatprep.subr.bf16.mxu0 0
      %432 = vmatpush1.bf16.msra.mxu0 0
      %433 = vmatprep.subr.bf16.mxu0 0
      %434 = vmatpush1.bf16.msra.mxu0 0
      %435 = vmatprep.subr.bf16.mxu0 0
      %436 = vmatpush1.bf16.msra.mxu0 0
      %437 = vmatprep.subr.bf16.mxu0 0
      %438 = vmatpush1.bf16.msra.mxu0 0
      %439 = vmatprep.subr.bf16.mxu0 0
      %440 = vmatpush1.bf16.msra.mxu0 0
      %441 = vmatprep.subr.bf16.mxu0 0
      %442 = vmatpush1.bf16.msra.mxu0 0
      %443 = vmatprep.subr.bf16.mxu0 0
      %444 = vmatpush1.bf16.msra.mxu0 0
      %445 = vmatprep.subr.bf16.mxu0 0
      %446 = vmatpush1.bf16.msra.mxu0 0
      %447 = vmatprep.subr.bf16.mxu0 0
      %448 = vmatpush1.bf16.msra.mxu0 0
      %449 = vmatprep.subr.bf16.mxu0 0
      %450 = vmatpush1.bf16.msra.mxu0 0
      %451 = vmatprep.subr.bf16.mxu0 0
      %452 = vmatpush1.bf16.msra.mxu0 0
      %453 = vmatprep.mubr.bf16.mxu0 0
      %454 = vmatmul.mubr.bf16.gmra.mrb[0].mxu0 %v380
      %v455 = vpop.f32.mrb[0].mxu0
      %v456 = vadd.f32 0.0, %v455
      %v457 = vpop.f32.mrb[0].mxu0
      %v458 = vpop.f32.mrb[0].mxu0
      %v459 = vadd.f32 0.0, %v458
      %v460 = vpop.f32.mrb[0].mxu0
      %461 = vmatprep.mubr.bf16.mxu0 0
      %462 = vmatmul.mubr.bf16.gmra.mrb[0].mxu0 %v383
      %v463 = vpop.f32.mrb[0].mxu0
      %v464 = vadd.f32 0.0, %v463
      %v465 = vpop.f32.mrb[0].mxu0
      %v466 = vpop.f32.mrb[0].mxu0
      %v467 = vadd.f32 0.0, %v466
      %v468 = vpop.f32.mrb[0].mxu0
      %469 = vmatprep.mubr.bf16.mxu0 0
      %470 = vmatmul.mubr.bf16.gmra.mrb[0].mxu0 %v386
      %v471 = vpop.f32.mrb[0].mxu0
      %v472 = vadd.f32 0.0, %v471
      %v473 = vpop.f32.mrb[0].mxu0
      %v474 = vpop.f32.mrb[0].mxu0
      %v475 = vadd.f32 0.0, %v474
      %v476 = vpop.f32.mrb[0].mxu0
      %477 = vmatprep.mubr.bf16.mxu0 0
      %478 = vmatmul.mubr.bf16.gmra.mrb[0].mxu0 %v389
      %v479 = vpop.f32.mrb[0].mxu0
      %v480 = vadd.f32 0.0, %v479
      %v481 = vpop.f32.mrb[0].mxu0
      %v482 = vpop.f32.mrb[0].mxu0
      %v483 = vadd.f32 0.0, %v482
      %v484 = vpop.f32.mrb[0].mxu0
      %485 = vmatprep.mubr.bf16.mxu0 0
      %486 = vmatmul.mubr.bf16.gmra.mrb[0].mxu0 %v392
      %v487 = vpop.f32.mrb[0].mxu0
      %v488 = vadd.f32 0.0, %v487
      %v489 = vpop.f32.mrb[0].mxu0
      %v490 = vpop.f32.mrb[0].mxu0
      %v491 = vadd.f32 0.0, %v490
      %v492 = vpop.f32.mrb[0].mxu0
      %493 = vmatprep.mubr.bf16.mxu0 0
      %494 = vmatmul.mubr.bf16.gmra.mrb[0].mxu0 %v395
      %v495 = vpop.f32.mrb[0].mxu0
      %v496 = vadd.f32 0.0, %v495
      %v497 = vpop.f32.mrb[0].mxu0
      %v498 = vpop.f32.mrb[0].mxu0
      %v499 = vadd.f32 0.0, %v498
      %v500 = vpop.f32.mrb[0].mxu0
      %501 = vmatprep.mubr.bf16.mxu0 0
      %502 = vmatmul.mubr.bf16.gmra.mrb[0].mxu0 %v398
      %v503 = vpop.f32.mrb[0].mxu0
      %v504 = vadd.f32 0.0, %v503
      %v505 = vpop.f32.mrb[0].mxu0
      %v506 = vpop.f32.mrb[0].mxu0
      %v507 = vadd.f32 0.0, %v506
      %v508 = vpop.f32.mrb[0].mxu0
      %509 = vmatprep.mubr.bf16.mxu0 0
      %510 = vmatmul.mubr.bf16.gmra.mrb[0].mxu0 %v401
      %v511 = vpop.f32.mrb[0].mxu0
      %v512 = vadd.f32 0.0, %v511
      %v513 = vpop.f32.mrb[0].mxu0
      %v514 = vpop.f32.mrb[0].mxu0
      %v515 = vadd.f32 0.0, %v514
      %v516 = vpop.f32.mrb[0].mxu0
      %517 = vmatprep.mubr.bf16.mxu0 0
      %518 = vmatmul.mubr.bf16.gmra.mrb[0].mxu0 %v404
      %v519 = vpop.f32.mrb[0].mxu0
      %v520 = vadd.f32 0.0, %v519
      %v521 = vpop.f32.mrb[0].mxu0
      %v522 = vpop.f32.mrb[0].mxu0
      %v523 = vadd.f32 0.0, %v522
      %v524 = vpop.f32.mrb[0].mxu0
      %525 = vmatprep.mubr.bf16.mxu0 0
      %526 = vmatmul.mubr.bf16.gmra.mrb[0].mxu0 %v407
      %v527 = vpop.f32.mrb[0].mxu0
      %v528 = vadd.f32 0.0, %v527
      %v529 = vpop.f32.mrb[0].mxu0
      %v530 = vpop.f32.mrb[0].mxu0
      %v531 = vadd.f32 0.0, %v530
      %v532 = vpop.f32.mrb[0].mxu0
      %533 = vmatprep.mubr.bf16.mxu0 0
      %534 = vmatmul.mubr.bf16.gmra.mrb[0].mxu0 %v410
      %v535 = vpop.f32.mrb[0].mxu0
      %v536 = vadd.f32 0.0, %v535
      %v537 = vpop.f32.mrb[0].mxu0
      %v538 = vpop.f32.mrb[0].mxu0
      %v539 = vadd.f32 0.0, %v538
      %v540 = vpop.f32.mrb[0].mxu0
      %541 = vmatprep.mubr.bf16.mxu0 0
      %542 = vmatmul.mubr.bf16.gmra.mrb[0].mxu0 %v413
      %v543 = vpop.f32.mrb[0].mxu0
      %v544 = vadd.f32 0.0, %v543
      %v545 = vpop.f32.mrb[0].mxu0
      %v546 = vpop.f32.mrb[0].mxu0
      %v547 = vadd.f32 0.0, %v546
      %v548 = vpop.f32.mrb[0].mxu0
      %549 = vmatprep.mubr.bf16.mxu0 0
      %550 = vmatmul.mubr.bf16.gmra.mrb[0].mxu0 %v416
      %v551 = vpop.f32.mrb[0].mxu0
      %v552 = vadd.f32 0.0, %v551
      %v553 = vpop.f32.mrb[0].mxu0
      %v554 = vpop.f32.mrb[0].mxu0
      %v555 = vadd.f32 0.0, %v554
      %v556 = vpop.f32.mrb[0].mxu0
      %557 = vmatprep.mubr.bf16.mxu0 0
      %558 = vmatmul.mubr.bf16.gmra.mrb[0].mxu0 %v419
      %v559 = vpop.f32.mrb[0].mxu0
      %v560 = vadd.f32 0.0, %v559
      %v561 = vpop.f32.mrb[0].mxu0
      %v562 = vpop.f32.mrb[0].mxu0
      %v563 = vadd.f32 0.0, %v562
      %v564 = vpop.f32.mrb[0].mxu0
      %565 = vdwg.mxu0
      %v574 = vunpack.c.l.b16 %v295
      %v575 = vunpack.c.l.b16 %v296
      %v576 = vunpack.c.l.b16 %v297
      %v577 = vunpack.c.l.b16 %v298
      %v578 = vunpack.c.l.b16 %v299
      %v579 = vunpack.c.l.b16 %v300
      %v580 = vunpack.c.l.b16 %v301
      %v581 = vunpack.c.l.b16 %v302
      %v582 = vpack.c.b16 %v575, %v574
      %v583 = vpack.c.b16 %v577, %v576
      %v584 = vpack.c.b16 %v579, %v578
      %v585 = vpack.c.b16 %v581, %v580
      %v591 = vsel %vm378, %v281, 0
      %v594 = vsel %vm378, %v282, 0
      %v597 = vsel %vm378, %v283, 0
      %v600 = vsel %vm378, %v284, 0
      %v603 = vsel %vm378, %v285, 0
      %v606 = vsel %vm378, %v286, 0
      %v609 = vsel %vm378, %v287, 0
      %v612 = vsel %vm378, %v288, 0
      %v615 = vsel %vm378, %v289, 0
      %v618 = vsel %vm378, %v290, 0
      %v621 = vsel %vm378, %v291, 0
      %v624 = vsel %vm378, %v292, 0
      %v627 = vsel %vm378, %v293, 0
      %v630 = vsel %vm378, %v294, 0
      %632 = vmatprep.subr.bf16.mxu0 0
      %633 = vmatpush1.bf16.msra.mxu0 %v582
      %634 = vmatprep.subr.bf16.mxu0 0
      %635 = vmatpush1.bf16.msra.mxu0 %v583
      %636 = vmatprep.subr.bf16.mxu0 0
      %637 = vmatpush1.bf16.msra.mxu0 %v584
      %638 = vmatprep.subr.bf16.mxu0 0
      %639 = vmatpush1.bf16.msra.mxu0 %v585
      %640 = vmatprep.subr.bf16.mxu0 0
      %641 = vmatpush1.bf16.msra.mxu0 0
      %642 = vmatprep.subr.bf16.mxu0 0
      %643 = vmatpush1.bf16.msra.mxu0 0
      %644 = vmatprep.subr.bf16.mxu0 0
      %645 = vmatpush1.bf16.msra.mxu0 0
      %646 = vmatprep.subr.bf16.mxu0 0
      %647 = vmatpush1.bf16.msra.mxu0 0
      %648 = vmatprep.subr.bf16.mxu0 0
      %649 = vmatpush1.bf16.msra.mxu0 0
      %650 = vmatprep.subr.bf16.mxu0 0
      %651 = vmatpush1.bf16.msra.mxu0 0
      %652 = vmatprep.subr.bf16.mxu0 0
      %653 = vmatpush1.bf16.msra.mxu0 0
      %654 = vmatprep.subr.bf16.mxu0 0
      %655 = vmatpush1.bf16.msra.mxu0 0
      %656 = vmatprep.subr.bf16.mxu0 0
      %657 = vmatpush1.bf16.msra.mxu0 0
      %658 = vmatprep.subr.bf16.mxu0 0
      %659 = vmatpush1.bf16.msra.mxu0 0
      %660 = vmatprep.subr.bf16.mxu0 0
      %661 = vmatpush1.bf16.msra.mxu0 0
      %662 = vmatprep.subr.bf16.mxu0 0
      %663 = vmatpush1.bf16.msra.mxu0 0
      %664 = vmatprep.mubr.bf16.mxu0 0
      %665 = vmatmul.mubr.bf16.gmra.mrb[0].mxu0 %v591
      %v666 = vpop.f32.mrb[0].mxu0
      %v667 = vadd.f32 %v456, %v666
      %v668 = vpop.f32.mrb[0].mxu0
      %v669 = vpop.f32.mrb[0].mxu0
      %v670 = vadd.f32 %v459, %v669
      %v671 = vpop.f32.mrb[0].mxu0
      %672 = vmatprep.mubr.bf16.mxu0 0
      %673 = vmatmul.mubr.bf16.gmra.mrb[0].mxu0 %v594
      %v674 = vpop.f32.mrb[0].mxu0
      %v675 = vadd.f32 %v464, %v674
      %v676 = vpop.f32.mrb[0].mxu0
      %v677 = vpop.f32.mrb[0].mxu0
      %v678 = vadd.f32 %v467, %v677
      %v679 = vpop.f32.mrb[0].mxu0
      %680 = vmatprep.mubr.bf16.mxu0 0
      %681 = vmatmul.mubr.bf16.gmra.mrb[0].mxu0 %v597
      %v682 = vpop.f32.mrb[0].mxu0
      %v683 = vadd.f32 %v472, %v682
      %v684 = vpop.f32.mrb[0].mxu0
      %v685 = vpop.f32.mrb[0].mxu0
      %v686 = vadd.f32 %v475, %v685
      %v687 = vpop.f32.mrb[0].mxu0
      %688 = vmatprep.mubr.bf16.mxu0 0
      %689 = vmatmul.mubr.bf16.gmra.mrb[0].mxu0 %v600
      %v690 = vpop.f32.mrb[0].mxu0
      %v691 = vadd.f32 %v480, %v690
      %v692 = vpop.f32.mrb[0].mxu0
      %v693 = vpop.f32.mrb[0].mxu0
      %v694 = vadd.f32 %v483, %v693
      %v695 = vpop.f32.mrb[0].mxu0
      %696 = vmatprep.mubr.bf16.mxu0 0
      %697 = vmatmul.mubr.bf16.gmra.mrb[0].mxu0 %v603
      %v698 = vpop.f32.mrb[0].mxu0
      %v699 = vadd.f32 %v488, %v698
      %v700 = vpop.f32.mrb[0].mxu0
      %v701 = vpop.f32.mrb[0].mxu0
      %v702 = vadd.f32 %v491, %v701
      %v703 = vpop.f32.mrb[0].mxu0
      %704 = vmatprep.mubr.bf16.mxu0 0
      %705 = vmatmul.mubr.bf16.gmra.mrb[0].mxu0 %v606
      %v706 = vpop.f32.mrb[0].mxu0
      %v707 = vadd.f32 %v496, %v706
      %v708 = vpop.f32.mrb[0].mxu0
      %v709 = vpop.f32.mrb[0].mxu0
      %v710 = vadd.f32 %v499, %v709
      %v711 = vpop.f32.mrb[0].mxu0
      %712 = vmatprep.mubr.bf16.mxu0 0
      %713 = vmatmul.mubr.bf16.gmra.mrb[0].mxu0 %v609
      %v714 = vpop.f32.mrb[0].mxu0
      %v715 = vadd.f32 %v504, %v714
      %v716 = vpop.f32.mrb[0].mxu0
      %v717 = vpop.f32.mrb[0].mxu0
      %v718 = vadd.f32 %v507, %v717
      %v719 = vpop.f32.mrb[0].mxu0
      %720 = vmatprep.mubr.bf16.mxu0 0
      %721 = vmatmul.mubr.bf16.gmra.mrb[0].mxu0 %v612
      %v722 = vpop.f32.mrb[0].mxu0
      %v723 = vadd.f32 %v512, %v722
      %v724 = vpop.f32.mrb[0].mxu0
      %v725 = vpop.f32.mrb[0].mxu0
      %v726 = vadd.f32 %v515, %v725
      %v727 = vpop.f32.mrb[0].mxu0
      %728 = vmatprep.mubr.bf16.mxu0 0
      %729 = vmatmul.mubr.bf16.gmra.mrb[0].mxu0 %v615
      %v730 = vpop.f32.mrb[0].mxu0
      %v731 = vadd.f32 %v520, %v730
      %v732 = vpop.f32.mrb[0].mxu0
      %v733 = vpop.f32.mrb[0].mxu0
      %v734 = vadd.f32 %v523, %v733
      %v735 = vpop.f32.mrb[0].mxu0
      %736 = vmatprep.mubr.bf16.mxu0 0
      %737 = vmatmul.mubr.bf16.gmra.mrb[0].mxu0 %v618
      %v738 = vpop.f32.mrb[0].mxu0
      %v739 = vadd.f32 %v528, %v738
      %v740 = vpop.f32.mrb[0].mxu0
      %v741 = vpop.f32.mrb[0].mxu0
      %v742 = vadd.f32 %v531, %v741
      %v743 = vpop.f32.mrb[0].mxu0
      %744 = vmatprep.mubr.bf16.mxu0 0
      %745 = vmatmul.mubr.bf16.gmra.mrb[0].mxu0 %v621
      %v746 = vpop.f32.mrb[0].mxu0
      %v747 = vadd.f32 %v536, %v746
      %v748 = vpop.f32.mrb[0].mxu0
      %v749 = vpop.f32.mrb[0].mxu0
      %v750 = vadd.f32 %v539, %v749
      %v751 = vpop.f32.mrb[0].mxu0
      %752 = vmatprep.mubr.bf16.mxu0 0
      %753 = vmatmul.mubr.bf16.gmra.mrb[0].mxu0 %v624
      %v754 = vpop.f32.mrb[0].mxu0
      %v755 = vadd.f32 %v544, %v754
      %v756 = vpop.f32.mrb[0].mxu0
      %v757 = vpop.f32.mrb[0].mxu0
      %v758 = vadd.f32 %v547, %v757
      %v759 = vpop.f32.mrb[0].mxu0
      %760 = vmatprep.mubr.bf16.mxu0 0
      %761 = vmatmul.mubr.bf16.gmra.mrb[0].mxu0 %v627
      %v762 = vpop.f32.mrb[0].mxu0
      %v763 = vadd.f32 %v552, %v762
      %v764 = vpop.f32.mrb[0].mxu0
      %v765 = vpop.f32.mrb[0].mxu0
      %v766 = vadd.f32 %v555, %v765
      %v767 = vpop.f32.mrb[0].mxu0
      %768 = vmatprep.mubr.bf16.mxu0 0
      %769 = vmatmul.mubr.bf16.gmra.mrb[0].mxu0 %v630
      %v770 = vpop.f32.mrb[0].mxu0
      %v771 = vadd.f32 %v560, %v770
      %v772 = vpop.f32.mrb[0].mxu0
      %v773 = vpop.f32.mrb[0].mxu0
      %v774 = vadd.f32 %v563, %v773
      %v775 = vpop.f32.mrb[0].mxu0
      %776 = vdwg.mxu0
      %v777 = vld [vmem:[%s246 + $0x2] sm:$0xff]
      %v778 = vld [vmem:[%s246 + $0xa] sm:$0xff]
      %v779 = vld [vmem:[%s246 + $0x12] sm:$0xff]
      %v780 = vld [vmem:[%s246 + $0x1a] sm:$0xff]
      %v781 = vld [vmem:[%s246 + $0x22] sm:$0xff]
      %v782 = vld [vmem:[%s246 + $0x2a] sm:$0xff]
      %v783 = vld [vmem:[%s246 + $0x32] sm:$0xff]
      %v784 = vld [vmem:[%s246 + $0x3a] sm:$0xff]
      %v785 = vld [vmem:[%s246 + $0x42] sm:$0xff]
      %v786 = vld [vmem:[%s246 + $0x4a] sm:$0xff]
      %v787 = vld [vmem:[%s246 + $0x52] sm:$0xff]
      %v788 = vld [vmem:[%s246 + $0x5a] sm:$0xff]
      %v789 = vld [vmem:[%s246 + $0x62] sm:$0xff]
      %v790 = vld [vmem:[%s246 + $0x6a] sm:$0xff]
      %v791 = vld [vmem:[%s246 + $0x72] sm:$0xff]
      %v792 = vld [vmem:[%s246 + $0x7a] sm:$0xff]
      %v793 = vld [vmem:[%s246 + $0x82] sm:$0xff]
      %v794 = vld [vmem:[%s246 + $0x8a] sm:$0xff]
      %v795 = vld [vmem:[%s246 + $0x92] sm:$0xff]
      %v796 = vld [vmem:[%s246 + $0x9a] sm:$0xff]
      %v797 = vld [vmem:[%s246 + $0xa2] sm:$0xff]
      %v798 = vld [vmem:[%s246 + $0xaa] sm:$0xff]
      %v799 = vld [vmem:[%s246 + $0xb2] sm:$0xff]
      %v800 = vld [vmem:[%s246 + $0xba] sm:$0xff]
      %v801 = vld [vmem:[%s246 + $0xc2] sm:$0xff]
      %v802 = vld [vmem:[%s246 + $0xca] sm:$0xff]
      %v803 = vld [vmem:[%s246 + $0xd2] sm:$0xff]
      %v804 = vld [vmem:[%s246 + $0xda] sm:$0xff]
      %v805 = vpack.c.bf16 %v778, %v777
      %v806 = vpack.c.bf16 %v780, %v779
      %v807 = vpack.c.bf16 %v782, %v781
      %v808 = vpack.c.bf16 %v784, %v783
      %v809 = vpack.c.bf16 %v786, %v785
      %v810 = vpack.c.bf16 %v788, %v787
      %v811 = vpack.c.bf16 %v790, %v789
      %v812 = vpack.c.bf16 %v792, %v791
      %v813 = vpack.c.bf16 %v794, %v793
      %v814 = vpack.c.bf16 %v796, %v795
      %v815 = vpack.c.bf16 %v798, %v797
      %v816 = vpack.c.bf16 %v800, %v799
      %v817 = vpack.c.bf16 %v802, %v801
      %v818 = vpack.c.bf16 %v804, %v803
      %s819 = scalar_lea.vmem %s1, 64
      %v820 = vld [vmem:[%s819] sm:$0xf]
      %v821 = vld [vmem:[%s819 + $0x4] sm:$0xf]
      %v822 = vld [vmem:[%s819 + $0x8] sm:$0xf]
      %v823 = vld [vmem:[%s819 + $0xc] sm:$0xf]
      %v824 = vld [vmem:[%s819 + $0x10] sm:$0xf]
      %v825 = vld [vmem:[%s819 + $0x14] sm:$0xf]
      %v826 = vld [vmem:[%s819 + $0x18] sm:$0xf]
      %v827 = vld [vmem:[%s819 + $0x1c] sm:$0xf]
      %v836 = vunpack.c.l.b16 %v820
      %v837 = vunpack.c.l.b16 %v821
      %v838 = vunpack.c.l.b16 %v822
      %v839 = vunpack.c.l.b16 %v823
      %v840 = vunpack.c.l.b16 %v824
      %v841 = vunpack.c.l.b16 %v825
      %v842 = vunpack.c.l.b16 %v826
      %v843 = vunpack.c.l.b16 %v827
      %v844 = vpack.c.b16 %v837, %v836
      %v845 = vpack.c.b16 %v839, %v838
      %v846 = vpack.c.b16 %v841, %v840
      %v847 = vpack.c.b16 %v843, %v842
      %v853 = vsel %vm378, %v805, 0
      %v856 = vsel %vm378, %v806, 0
      %v859 = vsel %vm378, %v807, 0
      %v862 = vsel %vm378, %v808, 0
      %v865 = vsel %vm378, %v809, 0
      %v868 = vsel %vm378, %v810, 0
      %v871 = vsel %vm378, %v811, 0
      %v874 = vsel %vm378, %v812, 0
      %v877 = vsel %vm378, %v813, 0
      %v880 = vsel %vm378, %v814, 0
      %v883 = vsel %vm378, %v815, 0
      %v886 = vsel %vm378, %v816, 0
      %v889 = vsel %vm378, %v817, 0
      %v892 = vsel %vm378, %v818, 0
      %894 = vmatprep.subr.bf16.mxu0 0
      %895 = vmatpush1.bf16.msra.mxu0 %v844
      %896 = vmatprep.subr.bf16.mxu0 0
      %897 = vmatpush1.bf16.msra.mxu0 %v845
      %898 = vmatprep.subr.bf16.mxu0 0
      %899 = vmatpush1.bf16.msra.mxu0 %v846
      %900 = vmatprep.subr.bf16.mxu0 0
      %901 = vmatpush1.bf16.msra.mxu0 %v847
      %902 = vmatprep.subr.bf16.mxu0 0
      %903 = vmatpush1.bf16.msra.mxu0 0
      %904 = vmatprep.subr.bf16.mxu0 0
      %905 = vmatpush1.bf16.msra.mxu0 0
      %906 = vmatprep.subr.bf16.mxu0 0
      %907 = vmatpush1.bf16.msra.mxu0 0
      %908 = vmatprep.subr.bf16.mxu0 0
      %909 = vmatpush1.bf16.msra.mxu0 0
      %910 = vmatprep.subr.bf16.mxu0 0
      %911 = vmatpush1.bf16.msra.mxu0 0
      %912 = vmatprep.subr.bf16.mxu0 0
      %913 = vmatpush1.bf16.msra.mxu0 0
      %914 = vmatprep.subr.bf16.mxu0 0
      %915 = vmatpush1.bf16.msra.mxu0 0
      %916 = vmatprep.subr.bf16.mxu0 0
      %917 = vmatpush1.bf16.msra.mxu0 0
      %918 = vmatprep.subr.bf16.mxu0 0
      %919 = vmatpush1.bf16.msra.mxu0 0
      %920 = vmatprep.subr.bf16.mxu0 0
      %921 = vmatpush1.bf16.msra.mxu0 0
      %922 = vmatprep.subr.bf16.mxu0 0
      %923 = vmatpush1.bf16.msra.mxu0 0
      %924 = vmatprep.subr.bf16.mxu0 0
      %925 = vmatpush1.bf16.msra.mxu0 0
      %926 = vmatprep.mubr.bf16.mxu0 0
      %927 = vmatmul.mubr.bf16.gmra.mrb[0].mxu0 %v853
      %v928 = vpop.f32.mrb[0].mxu0
      %v929 = vadd.f32 0.0, %v928
      %v930 = vpop.f32.mrb[0].mxu0
      %v931 = vpop.f32.mrb[0].mxu0
      %v932 = vadd.f32 0.0, %v931
      %v933 = vpop.f32.mrb[0].mxu0
      %934 = vmatprep.mubr.bf16.mxu0 0
      %935 = vmatmul.mubr.bf16.gmra.mrb[0].mxu0 %v856
      %v936 = vpop.f32.mrb[0].mxu0
      %v937 = vadd.f32 0.0, %v936
      %v938 = vpop.f32.mrb[0].mxu0
      %v939 = vpop.f32.mrb[0].mxu0
      %v940 = vadd.f32 0.0, %v939
      %v941 = vpop.f32.mrb[0].mxu0
      %942 = vmatprep.mubr.bf16.mxu0 0
      %943 = vmatmul.mubr.bf16.gmra.mrb[0].mxu0 %v859
      %v944 = vpop.f32.mrb[0].mxu0
      %v945 = vadd.f32 0.0, %v944
      %v946 = vpop.f32.mrb[0].mxu0
      %v947 = vpop.f32.mrb[0].mxu0
      %v948 = vadd.f32 0.0, %v947
      %v949 = vpop.f32.mrb[0].mxu0
      %950 = vmatprep.mubr.bf16.mxu0 0
      %951 = vmatmul.mubr.bf16.gmra.mrb[0].mxu0 %v862
      %v952 = vpop.f32.mrb[0].mxu0
      %v953 = vadd.f32 0.0, %v952
      %v954 = vpop.f32.mrb[0].mxu0
      %v955 = vpop.f32.mrb[0].mxu0
      %v956 = vadd.f32 0.0, %v955
      %v957 = vpop.f32.mrb[0].mxu0
      %958 = vmatprep.mubr.bf16.mxu0 0
      %959 = vmatmul.mubr.bf16.gmra.mrb[0].mxu0 %v865
      %v960 = vpop.f32.mrb[0].mxu0
      %v961 = vadd.f32 0.0, %v960
      %v962 = vpop.f32.mrb[0].mxu0
      %v963 = vpop.f32.mrb[0].mxu0
      %v964 = vadd.f32 0.0, %v963
      %v965 = vpop.f32.mrb[0].mxu0
      %966 = vmatprep.mubr.bf16.mxu0 0
      %967 = vmatmul.mubr.bf16.gmra.mrb[0].mxu0 %v868
      %v968 = vpop.f32.mrb[0].mxu0
      %v969 = vadd.f32 0.0, %v968
      %v970 = vpop.f32.mrb[0].mxu0
      %v971 = vpop.f32.mrb[0].mxu0
      %v972 = vadd.f32 0.0, %v971
      %v973 = vpop.f32.mrb[0].mxu0
      %974 = vmatprep.mubr.bf16.mxu0 0
      %975 = vmatmul.mubr.bf16.gmra.mrb[0].mxu0 %v871
      %v976 = vpop.f32.mrb[0].mxu0
      %v977 = vadd.f32 0.0, %v976
      %v978 = vpop.f32.mrb[0].mxu0
      %v979 = vpop.f32.mrb[0].mxu0
      %v980 = vadd.f32 0.0, %v979
      %v981 = vpop.f32.mrb[0].mxu0
      %982 = vmatprep.mubr.bf16.mxu0 0
      %983 = vmatmul.mubr.bf16.gmra.mrb[0].mxu0 %v874
      %v984 = vpop.f32.mrb[0].mxu0
      %v985 = vadd.f32 0.0, %v984
      %v986 = vpop.f32.mrb[0].mxu0
      %v987 = vpop.f32.mrb[0].mxu0
      %v988 = vadd.f32 0.0, %v987
      %v989 = vpop.f32.mrb[0].mxu0
      %990 = vmatprep.mubr.bf16.mxu0 0
      %991 = vmatmul.mubr.bf16.gmra.mrb[0].mxu0 %v877
      %v992 = vpop.f32.mrb[0].mxu0
      %v993 = vadd.f32 0.0, %v992
      %v994 = vpop.f32.mrb[0].mxu0
      %v995 = vpop.f32.mrb[0].mxu0
      %v996 = vadd.f32 0.0, %v995
      %v997 = vpop.f32.mrb[0].mxu0
      %998 = vmatprep.mubr.bf16.mxu0 0
      %999 = vmatmul.mubr.bf16.gmra.mrb[0].mxu0 %v880
      %v1000 = vpop.f32.mrb[0].mxu0
      %v1001 = vadd.f32 0.0, %v1000
      %v1002 = vpop.f32.mrb[0].mxu0
      %v1003 = vpop.f32.mrb[0].mxu0
      %v1004 = vadd.f32 0.0, %v1003
      %v1005 = vpop.f32.mrb[0].mxu0
      %1006 = vmatprep.mubr.bf16.mxu0 0
      %1007 = vmatmul.mubr.bf16.gmra.mrb[0].mxu0 %v883
      %v1008 = vpop.f32.mrb[0].mxu0
      %v1009 = vadd.f32 0.0, %v1008
      %v1010 = vpop.f32.mrb[0].mxu0
      %v1011 = vpop.f32.mrb[0].mxu0
      %v1012 = vadd.f32 0.0, %v1011
      %v1013 = vpop.f32.mrb[0].mxu0
      %1014 = vmatprep.mubr.bf16.mxu0 0
      %1015 = vmatmul.mubr.bf16.gmra.mrb[0].mxu0 %v886
      %v1016 = vpop.f32.mrb[0].mxu0
      %v1017 = vadd.f32 0.0, %v1016
      %v1018 = vpop.f32.mrb[0].mxu0
      %v1019 = vpop.f32.mrb[0].mxu0
      %v1020 = vadd.f32 0.0, %v1019
      %v1021 = vpop.f32.mrb[0].mxu0
      %1022 = vmatprep.mubr.bf16.mxu0 0
      %1023 = vmatmul.mubr.bf16.gmra.mrb[0].mxu0 %v889
      %v1024 = vpop.f32.mrb[0].mxu0
      %v1025 = vadd.f32 0.0, %v1024
      %v1026 = vpop.f32.mrb[0].mxu0
      %v1027 = vpop.f32.mrb[0].mxu0
      %v1028 = vadd.f32 0.0, %v1027
      %v1029 = vpop.f32.mrb[0].mxu0
      %1030 = vmatprep.mubr.bf16.mxu0 0
      %1031 = vmatmul.mubr.bf16.gmra.mrb[0].mxu0 %v892
      %v1032 = vpop.f32.mrb[0].mxu0
      %v1033 = vadd.f32 0.0, %v1032
      %v1034 = vpop.f32.mrb[0].mxu0
      %v1035 = vpop.f32.mrb[0].mxu0
      %v1036 = vadd.f32 0.0, %v1035
      %v1037 = vpop.f32.mrb[0].mxu0
      %1038 = vdwg.mxu0
      %v1039 = vadd.f32 %v667, %v929
      %v1040 = vadd.f32 %v670, %v932
      %v1041 = vadd.f32 %v675, %v937
      %v1042 = vadd.f32 %v678, %v940
      %v1043 = vadd.f32 %v683, %v945
      %v1044 = vadd.f32 %v686, %v948
      %v1045 = vadd.f32 %v691, %v953
      %v1046 = vadd.f32 %v694, %v956
      %v1047 = vadd.f32 %v699, %v961
      %v1048 = vadd.f32 %v702, %v964
      %v1049 = vadd.f32 %v707, %v969
      %v1050 = vadd.f32 %v710, %v972
      %v1051 = vadd.f32 %v715, %v977
      %v1052 = vadd.f32 %v718, %v980
      %v1053 = vadd.f32 %v723, %v985
      %v1054 = vadd.f32 %v726, %v988
      %v1055 = vadd.f32 %v731, %v993
      %v1056 = vadd.f32 %v734, %v996
      %v1057 = vadd.f32 %v739, %v1001
      %v1058 = vadd.f32 %v742, %v1004
      %v1059 = vadd.f32 %v747, %v1009
      %v1060 = vadd.f32 %v750, %v1012
      %v1061 = vadd.f32 %v755, %v1017
      %v1062 = vadd.f32 %v758, %v1020
      %v1063 = vadd.f32 %v763, %v1025
      %v1064 = vadd.f32 %v766, %v1028
      %v1065 = vadd.f32 %v771, %v1033
      %v1066 = vadd.f32 %v774, %v1036
      %v1067 = vld [vmem:[%s246 + $0x10] sm:$0xff]
      %v1068 = vld [vmem:[%s246 + $0x18] sm:$0xff]
      %v1069 = vld [vmem:[%s246 + $0x20] sm:$0xff]
      %v1070 = vld [vmem:[%s246 + $0x28] sm:$0xff]
      %v1071 = vld [vmem:[%s246 + $0x30] sm:$0xff]
      %v1072 = vld [vmem:[%s246 + $0x38] sm:$0xff]
      %v1073 = vld [vmem:[%s246 + $0x40] sm:$0xff]
      %v1074 = vld [vmem:[%s246 + $0x48] sm:$0xff]
      %v1075 = vld [vmem:[%s246 + $0x50] sm:$0xff]
      %v1076 = vld [vmem:[%s246 + $0x58] sm:$0xff]
      %v1077 = vld [vmem:[%s246 + $0x60] sm:$0xff]
      %v1078 = vld [vmem:[%s246 + $0x68] sm:$0xff]
      %v1079 = vld [vmem:[%s246 + $0x70] sm:$0xff]
      %v1080 = vld [vmem:[%s246 + $0x78] sm:$0xff]
      %v1081 = vld [vmem:[%s246 + $0x80] sm:$0xff]
      %v1082 = vld [vmem:[%s246 + $0x88] sm:$0xff]
      %v1083 = vld [vmem:[%s246 + $0x90] sm:$0xff]
      %v1084 = vld [vmem:[%s246 + $0x98] sm:$0xff]
      %v1085 = vld [vmem:[%s246 + $0xa0] sm:$0xff]
      %v1086 = vld [vmem:[%s246 + $0xa8] sm:$0xff]
      %v1087 = vld [vmem:[%s246 + $0xb0] sm:$0xff]
      %v1088 = vld [vmem:[%s246 + $0xb8] sm:$0xff]
      %v1089 = vld [vmem:[%s246 + $0xc0] sm:$0xff]
      %v1090 = vld [vmem:[%s246 + $0xc8] sm:$0xff]
      %v1091 = vld [vmem:[%s246 + $0xd0] sm:$0xff]
      %v1092 = vld [vmem:[%s246 + $0xd8] sm:$0xff]
      %v1093 = vld [vmem:[%s246 + $0xe0] sm:$0xff]
      %v1094 = vld [vmem:[%s246 + $0xe8] sm:$0xff]
      %v1095 = vpack.c.bf16 %v1068, %v1067
      %v1096 = vpack.c.bf16 %v1070, %v1069
      %v1097 = vpack.c.bf16 %v1072, %v1071
      %v1098 = vpack.c.bf16 %v1074, %v1073
      %v1099 = vpack.c.bf16 %v1076, %v1075
      %v1100 = vpack.c.bf16 %v1078, %v1077
      %v1101 = vpack.c.bf16 %v1080, %v1079
      %v1102 = vpack.c.bf16 %v1082, %v1081
      %v1103 = vpack.c.bf16 %v1084, %v1083
      %v1104 = vpack.c.bf16 %v1086, %v1085
      %v1105 = vpack.c.bf16 %v1088, %v1087
      %v1106 = vpack.c.bf16 %v1090, %v1089
      %v1107 = vpack.c.bf16 %v1092, %v1091
      %v1108 = vpack.c.bf16 %v1094, %v1093
      %s1109 = scalar_lea.vmem %s1, 96
      %v1110 = vld [vmem:[%s1109] sm:$0xf]
      %v1111 = vld [vmem:[%s1109 + $0x4] sm:$0xf]
      %v1112 = vld [vmem:[%s1109 + $0x8] sm:$0xf]
      %v1113 = vld [vmem:[%s1109 + $0xc] sm:$0xf]
      %v1114 = vld [vmem:[%s1109 + $0x10] sm:$0xf]
      %v1115 = vld [vmem:[%s1109 + $0x14] sm:$0xf]
      %v1116 = vld [vmem:[%s1109 + $0x18] sm:$0xf]
      %v1117 = vld [vmem:[%s1109 + $0x1c] sm:$0xf]
      %v1126 = vunpack.c.l.b16 %v1110
      %v1127 = vunpack.c.l.b16 %v1111
      %v1128 = vunpack.c.l.b16 %v1112
      %v1129 = vunpack.c.l.b16 %v1113
      %v1130 = vunpack.c.l.b16 %v1114
      %v1131 = vunpack.c.l.b16 %v1115
      %v1132 = vunpack.c.l.b16 %v1116
      %v1133 = vunpack.c.l.b16 %v1117
      %v1134 = vpack.c.b16 %v1127, %v1126
      %v1135 = vpack.c.b16 %v1129, %v1128
      %v1136 = vpack.c.b16 %v1131, %v1130
      %v1137 = vpack.c.b16 %v1133, %v1132
      %v1143 = vsel %vm378, %v1095, 0
      %v1146 = vsel %vm378, %v1096, 0
      %v1149 = vsel %vm378, %v1097, 0
      %v1152 = vsel %vm378, %v1098, 0
      %v1155 = vsel %vm378, %v1099, 0
      %v1158 = vsel %vm378, %v1100, 0
      %v1161 = vsel %vm378, %v1101, 0
      %v1164 = vsel %vm378, %v1102, 0
      %v1167 = vsel %vm378, %v1103, 0
      %v1170 = vsel %vm378, %v1104, 0
      %v1173 = vsel %vm378, %v1105, 0
      %v1176 = vsel %vm378, %v1106, 0
      %v1179 = vsel %vm378, %v1107, 0
      %v1182 = vsel %vm378, %v1108, 0
      %1184 = vmatprep.subr.bf16.mxu0 0
      %1185 = vmatpush1.bf16.msra.mxu0 %v1134
      %1186 = vmatprep.subr.bf16.mxu0 0
      %1187 = vmatpush1.bf16.msra.mxu0 %v1135
      %1188 = vmatprep.subr.bf16.mxu0 0
      %1189 = vmatpush1.bf16.msra.mxu0 %v1136
      %1190 = vmatprep.subr.bf16.mxu0 0
      %1191 = vmatpush1.bf16.msra.mxu0 %v1137
      %1192 = vmatprep.subr.bf16.mxu0 0
      %1193 = vmatpush1.bf16.msra.mxu0 0
      %1194 = vmatprep.subr.bf16.mxu0 0
      %1195 = vmatpush1.bf16.msra.mxu0 0
      %1196 = vmatprep.subr.bf16.mxu0 0
      %1197 = vmatpush1.bf16.msra.mxu0 0
      %1198 = vmatprep.subr.bf16.mxu0 0
      %1199 = vmatpush1.bf16.msra.mxu0 0
      %1200 = vmatprep.subr.bf16.mxu0 0
      %1201 = vmatpush1.bf16.msra.mxu0 0
      %1202 = vmatprep.subr.bf16.mxu0 0
      %1203 = vmatpush1.bf16.msra.mxu0 0
      %1204 = vmatprep.subr.bf16.mxu0 0
      %1205 = vmatpush1.bf16.msra.mxu0 0
      %1206 = vmatprep.subr.bf16.mxu0 0
      %1207 = vmatpush1.bf16.msra.mxu0 0
      %1208 = vmatprep.subr.bf16.mxu0 0
      %1209 = vmatpush1.bf16.msra.mxu0 0
      %1210 = vmatprep.subr.bf16.mxu0 0
      %1211 = vmatpush1.bf16.msra.mxu0 0
      %1212 = vmatprep.subr.bf16.mxu0 0
      %1213 = vmatpush1.bf16.msra.mxu0 0
      %1214 = vmatprep.subr.bf16.mxu0 0
      %1215 = vmatpush1.bf16.msra.mxu0 0
      %1216 = vmatprep.mubr.bf16.mxu0 0
      %1217 = vmatmul.mubr.bf16.gmra.mrb[0].mxu0 %v1143
      %v1218 = vpop.f32.mrb[0].mxu0
      %v1219 = vadd.f32 0.0, %v1218
      %v1220 = vpop.f32.mrb[0].mxu0
      %v1221 = vpop.f32.mrb[0].mxu0
      %v1222 = vadd.f32 0.0, %v1221
      %v1223 = vpop.f32.mrb[0].mxu0
      %1224 = vmatprep.mubr.bf16.mxu0 0
      %1225 = vmatmul.mubr.bf16.gmra.mrb[0].mxu0 %v1146
      %v1226 = vpop.f32.mrb[0].mxu0
      %v1227 = vadd.f32 0.0, %v1226
      %v1228 = vpop.f32.mrb[0].mxu0
      %v1229 = vpop.f32.mrb[0].mxu0
      %v1230 = vadd.f32 0.0, %v1229
      %v1231 = vpop.f32.mrb[0].mxu0
      %1232 = vmatprep.mubr.bf16.mxu0 0
      %1233 = vmatmul.mubr.bf16.gmra.mrb[0].mxu0 %v1149
      %v1234 = vpop.f32.mrb[0].mxu0
      %v1235 = vadd.f32 0.0, %v1234
      %v1236 = vpop.f32.mrb[0].mxu0
      %v1237 = vpop.f32.mrb[0].mxu0
      %v1238 = vadd.f32 0.0, %v1237
      %v1239 = vpop.f32.mrb[0].mxu0
      %1240 = vmatprep.mubr.bf16.mxu0 0
      %1241 = vmatmul.mubr.bf16.gmra.mrb[0].mxu0 %v1152
      %v1242 = vpop.f32.mrb[0].mxu0
      %v1243 = vadd.f32 0.0, %v1242
      %v1244 = vpop.f32.mrb[0].mxu0
      %v1245 = vpop.f32.mrb[0].mxu0
      %v1246 = vadd.f32 0.0, %v1245
      %v1247 = vpop.f32.mrb[0].mxu0
      %1248 = vmatprep.mubr.bf16.mxu0 0
      %1249 = vmatmul.mubr.bf16.gmra.mrb[0].mxu0 %v1155
      %v1250 = vpop.f32.mrb[0].mxu0
      %v1251 = vadd.f32 0.0, %v1250
      %v1252 = vpop.f32.mrb[0].mxu0
      %v1253 = vpop.f32.mrb[0].mxu0
      %v1254 = vadd.f32 0.0, %v1253
      %v1255 = vpop.f32.mrb[0].mxu0
      %1256 = vmatprep.mubr.bf16.mxu0 0
      %1257 = vmatmul.mubr.bf16.gmra.mrb[0].mxu0 %v1158
      %v1258 = vpop.f32.mrb[0].mxu0
      %v1259 = vadd.f32 0.0, %v1258
      %v1260 = vpop.f32.mrb[0].mxu0
      %v1261 = vpop.f32.mrb[0].mxu0
      %v1262 = vadd.f32 0.0, %v1261
      %v1263 = vpop.f32.mrb[0].mxu0
      %1264 = vmatprep.mubr.bf16.mxu0 0
      %1265 = vmatmul.mubr.bf16.gmra.mrb[0].mxu0 %v1161
      %v1266 = vpop.f32.mrb[0].mxu0
      %v1267 = vadd.f32 0.0, %v1266
      %v1268 = vpop.f32.mrb[0].mxu0
      %v1269 = vpop.f32.mrb[0].mxu0
      %v1270 = vadd.f32 0.0, %v1269
      %v1271 = vpop.f32.mrb[0].mxu0
      %1272 = vmatprep.mubr.bf16.mxu0 0
      %1273 = vmatmul.mubr.bf16.gmra.mrb[0].mxu0 %v1164
      %v1274 = vpop.f32.mrb[0].mxu0
      %v1275 = vadd.f32 0.0, %v1274
      %v1276 = vpop.f32.mrb[0].mxu0
      %v1277 = vpop.f32.mrb[0].mxu0
      %v1278 = vadd.f32 0.0, %v1277
      %v1279 = vpop.f32.mrb[0].mxu0
      %1280 = vmatprep.mubr.bf16.mxu0 0
      %1281 = vmatmul.mubr.bf16.gmra.mrb[0].mxu0 %v1167
      %v1282 = vpop.f32.mrb[0].mxu0
      %v1283 = vadd.f32 0.0, %v1282
      %v1284 = vpop.f32.mrb[0].mxu0
      %v1285 = vpop.f32.mrb[0].mxu0
      %v1286 = vadd.f32 0.0, %v1285
      %v1287 = vpop.f32.mrb[0].mxu0
      %1288 = vmatprep.mubr.bf16.mxu0 0
      %1289 = vmatmul.mubr.bf16.gmra.mrb[0].mxu0 %v1170
      %v1290 = vpop.f32.mrb[0].mxu0
      %v1291 = vadd.f32 0.0, %v1290
      %v1292 = vpop.f32.mrb[0].mxu0
      %v1293 = vpop.f32.mrb[0].mxu0
      %v1294 = vadd.f32 0.0, %v1293
      %v1295 = vpop.f32.mrb[0].mxu0
      %1296 = vmatprep.mubr.bf16.mxu0 0
      %1297 = vmatmul.mubr.bf16.gmra.mrb[0].mxu0 %v1173
      %v1298 = vpop.f32.mrb[0].mxu0
      %v1299 = vadd.f32 0.0, %v1298
      %v1300 = vpop.f32.mrb[0].mxu0
      %v1301 = vpop.f32.mrb[0].mxu0
      %v1302 = vadd.f32 0.0, %v1301
      %v1303 = vpop.f32.mrb[0].mxu0
      %1304 = vmatprep.mubr.bf16.mxu0 0
      %1305 = vmatmul.mubr.bf16.gmra.mrb[0].mxu0 %v1176
      %v1306 = vpop.f32.mrb[0].mxu0
      %v1307 = vadd.f32 0.0, %v1306
      %v1308 = vpop.f32.mrb[0].mxu0
      %v1309 = vpop.f32.mrb[0].mxu0
      %v1310 = vadd.f32 0.0, %v1309
      %v1311 = vpop.f32.mrb[0].mxu0
      %1312 = vmatprep.mubr.bf16.mxu0 0
      %1313 = vmatmul.mubr.bf16.gmra.mrb[0].mxu0 %v1179
      %v1314 = vpop.f32.mrb[0].mxu0
      %v1315 = vadd.f32 0.0, %v1314
      %v1316 = vpop.f32.mrb[0].mxu0
      %v1317 = vpop.f32.mrb[0].mxu0
      %v1318 = vadd.f32 0.0, %v1317
      %v1319 = vpop.f32.mrb[0].mxu0
      %1320 = vmatprep.mubr.bf16.mxu0 0
      %1321 = vmatmul.mubr.bf16.gmra.mrb[0].mxu0 %v1182
      %v1322 = vpop.f32.mrb[0].mxu0
      %v1323 = vadd.f32 0.0, %v1322
      %v1324 = vpop.f32.mrb[0].mxu0
      %v1325 = vpop.f32.mrb[0].mxu0
      %v1326 = vadd.f32 0.0, %v1325
      %v1327 = vpop.f32.mrb[0].mxu0
      %1328 = vdwg.mxu0
      %v1329 = vadd.f32 %v1039, %v1219
      %v1330 = vadd.f32 %v1040, %v1222
      %v1331 = vadd.f32 %v1041, %v1227
      %v1332 = vadd.f32 %v1042, %v1230
      %v1333 = vadd.f32 %v1043, %v1235
      %v1334 = vadd.f32 %v1044, %v1238
      %v1335 = vadd.f32 %v1045, %v1243
      %v1336 = vadd.f32 %v1046, %v1246
      %v1337 = vadd.f32 %v1047, %v1251
      %v1338 = vadd.f32 %v1048, %v1254
      %v1339 = vadd.f32 %v1049, %v1259
      %v1340 = vadd.f32 %v1050, %v1262
      %v1341 = vadd.f32 %v1051, %v1267
      %v1342 = vadd.f32 %v1052, %v1270
      %v1343 = vadd.f32 %v1053, %v1275
      %v1344 = vadd.f32 %v1054, %v1278
      %v1345 = vadd.f32 %v1055, %v1283
      %v1346 = vadd.f32 %v1056, %v1286
      %v1347 = vadd.f32 %v1057, %v1291
      %v1348 = vadd.f32 %v1058, %v1294
      %v1349 = vadd.f32 %v1059, %v1299
      %v1350 = vadd.f32 %v1060, %v1302
      %v1351 = vadd.f32 %v1061, %v1307
      %v1352 = vadd.f32 %v1062, %v1310
      %v1353 = vadd.f32 %v1063, %v1315
      %v1354 = vadd.f32 %v1064, %v1318
      %v1355 = vadd.f32 %v1065, %v1323
      %v1356 = vadd.f32 %v1066, %v1326
      %v1357 = vld [vmem:[%s246 + $0x11] sm:$0xff]
      %v1358 = vld [vmem:[%s246 + $0x19] sm:$0xff]
      %v1359 = vld [vmem:[%s246 + $0x21] sm:$0xff]
      %v1360 = vld [vmem:[%s246 + $0x29] sm:$0xff]
      %v1361 = vld [vmem:[%s246 + $0x31] sm:$0xff]
      %v1362 = vld [vmem:[%s246 + $0x39] sm:$0xff]
      %v1363 = vld [vmem:[%s246 + $0x41] sm:$0xff]
      %v1364 = vld [vmem:[%s246 + $0x49] sm:$0xff]
      %v1365 = vld [vmem:[%s246 + $0x51] sm:$0xff]
      %v1366 = vld [vmem:[%s246 + $0x59] sm:$0xff]
      %v1367 = vld [vmem:[%s246 + $0x61] sm:$0xff]
      %v1368 = vld [vmem:[%s246 + $0x69] sm:$0xff]
      %v1369 = vld [vmem:[%s246 + $0x71] sm:$0xff]
      %v1370 = vld [vmem:[%s246 + $0x79] sm:$0xff]
      %v1371 = vld [vmem:[%s246 + $0x81] sm:$0xff]
      %v1372 = vld [vmem:[%s246 + $0x89] sm:$0xff]
      %v1373 = vld [vmem:[%s246 + $0x91] sm:$0xff]
      %v1374 = vld [vmem:[%s246 + $0x99] sm:$0xff]
      %v1375 = vld [vmem:[%s246 + $0xa1] sm:$0xff]
      %v1376 = vld [vmem:[%s246 + $0xa9] sm:$0xff]
      %v1377 = vld [vmem:[%s246 + $0xb1] sm:$0xff]
      %v1378 = vld [vmem:[%s246 + $0xb9] sm:$0xff]
      %v1379 = vld [vmem:[%s246 + $0xc1] sm:$0xff]
      %v1380 = vld [vmem:[%s246 + $0xc9] sm:$0xff]
      %v1381 = vld [vmem:[%s246 + $0xd1] sm:$0xff]
      %v1382 = vld [vmem:[%s246 + $0xd9] sm:$0xff]
      %v1383 = vld [vmem:[%s246 + $0xe1] sm:$0xff]
      %v1384 = vld [vmem:[%s246 + $0xe9] sm:$0xff]
      %v1385 = vpack.c.bf16 %v1358, %v1357
      %v1386 = vpack.c.bf16 %v1360, %v1359
      %v1387 = vpack.c.bf16 %v1362, %v1361
      %v1388 = vpack.c.bf16 %v1364, %v1363
      %v1389 = vpack.c.bf16 %v1366, %v1365
      %v1390 = vpack.c.bf16 %v1368, %v1367
      %v1391 = vpack.c.bf16 %v1370, %v1369
      %v1392 = vpack.c.bf16 %v1372, %v1371
      %v1393 = vpack.c.bf16 %v1374, %v1373
      %v1394 = vpack.c.bf16 %v1376, %v1375
      %v1395 = vpack.c.bf16 %v1378, %v1377
      %v1396 = vpack.c.bf16 %v1380, %v1379
      %v1397 = vpack.c.bf16 %v1382, %v1381
      %v1398 = vpack.c.bf16 %v1384, %v1383
      %s1399 = scalar_lea.vmem %s1, 128
      %v1400 = vld [vmem:[%s1399] sm:$0xf]
      %v1401 = vld [vmem:[%s1399 + $0x4] sm:$0xf]
      %v1402 = vld [vmem:[%s1399 + $0x8] sm:$0xf]
      %v1403 = vld [vmem:[%s1399 + $0xc] sm:$0xf]
      %v1404 = vld [vmem:[%s1399 + $0x10] sm:$0xf]
      %v1405 = vld [vmem:[%s1399 + $0x14] sm:$0xf]
      %v1406 = vld [vmem:[%s1399 + $0x18] sm:$0xf]
      %v1407 = vld [vmem:[%s1399 + $0x1c] sm:$0xf]
      %v1416 = vunpack.c.l.b16 %v1400
      %v1417 = vunpack.c.l.b16 %v1401
      %v1418 = vunpack.c.l.b16 %v1402
      %v1419 = vunpack.c.l.b16 %v1403
      %v1420 = vunpack.c.l.b16 %v1404
      %v1421 = vunpack.c.l.b16 %v1405
      %v1422 = vunpack.c.l.b16 %v1406
      %v1423 = vunpack.c.l.b16 %v1407
      %v1424 = vpack.c.b16 %v1417, %v1416
      %v1425 = vpack.c.b16 %v1419, %v1418
      %v1426 = vpack.c.b16 %v1421, %v1420
      %v1427 = vpack.c.b16 %v1423, %v1422
      %v1433 = vsel %vm378, %v1385, 0
      %v1436 = vsel %vm378, %v1386, 0
      %v1439 = vsel %vm378, %v1387, 0
      %v1442 = vsel %vm378, %v1388, 0
      %v1445 = vsel %vm378, %v1389, 0
      %v1448 = vsel %vm378, %v1390, 0
      %v1451 = vsel %vm378, %v1391, 0
      %v1454 = vsel %vm378, %v1392, 0
      %v1457 = vsel %vm378, %v1393, 0
      %v1460 = vsel %vm378, %v1394, 0
      %v1463 = vsel %vm378, %v1395, 0
      %v1466 = vsel %vm378, %v1396, 0
      %v1469 = vsel %vm378, %v1397, 0
      %v1472 = vsel %vm378, %v1398, 0
      %1474 = vmatprep.subr.bf16.mxu0 0
      %1475 = vmatpush1.bf16.msra.mxu0 %v1424
      %1476 = vmatprep.subr.bf16.mxu0 0
      %1477 = vmatpush1.bf16.msra.mxu0 %v1425
      %1478 = vmatprep.subr.bf16.mxu0 0
      %1479 = vmatpush1.bf16.msra.mxu0 %v1426
      %1480 = vmatprep.subr.bf16.mxu0 0
      %1481 = vmatpush1.bf16.msra.mxu0 %v1427
      %1482 = vmatprep.subr.bf16.mxu0 0
      %1483 = vmatpush1.bf16.msra.mxu0 0
      %1484 = vmatprep.subr.bf16.mxu0 0
      %1485 = vmatpush1.bf16.msra.mxu0 0
      %1486 = vmatprep.subr.bf16.mxu0 0
      %1487 = vmatpush1.bf16.msra.mxu0 0
      %1488 = vmatprep.subr.bf16.mxu0 0
      %1489 = vmatpush1.bf16.msra.mxu0 0
      %1490 = vmatprep.subr.bf16.mxu0 0
      %1491 = vmatpush1.bf16.msra.mxu0 0
      %1492 = vmatprep.subr.bf16.mxu0 0
      %1493 = vmatpush1.bf16.msra.mxu0 0
      %1494 = vmatprep.subr.bf16.mxu0 0
      %1495 = vmatpush1.bf16.msra.mxu0 0
      %1496 = vmatprep.subr.bf16.mxu0 0
      %1497 = vmatpush1.bf16.msra.mxu0 0
      %1498 = vmatprep.subr.bf16.mxu0 0
      %1499 = vmatpush1.bf16.msra.mxu0 0
      %1500 = vmatprep.subr.bf16.mxu0 0
      %1501 = vmatpush1.bf16.msra.mxu0 0
      %1502 = vmatprep.subr.bf16.mxu0 0
      %1503 = vmatpush1.bf16.msra.mxu0 0
      %1504 = vmatprep.subr.bf16.mxu0 0
      %1505 = vmatpush1.bf16.msra.mxu0 0
      %1506 = vmatprep.mubr.bf16.mxu0 0
      %1507 = vmatmul.mubr.bf16.gmra.mrb[0].mxu0 %v1433
      %v1508 = vpop.f32.mrb[0].mxu0
      %v1509 = vadd.f32 0.0, %v1508
      %v1510 = vpop.f32.mrb[0].mxu0
      %v1511 = vpop.f32.mrb[0].mxu0
      %v1512 = vadd.f32 0.0, %v1511
      %v1513 = vpop.f32.mrb[0].mxu0
      %1514 = vmatprep.mubr.bf16.mxu0 0
      %1515 = vmatmul.mubr.bf16.gmra.mrb[0].mxu0 %v1436
      %v1516 = vpop.f32.mrb[0].mxu0
      %v1517 = vadd.f32 0.0, %v1516
      %v1518 = vpop.f32.mrb[0].mxu0
      %v1519 = vpop.f32.mrb[0].mxu0
      %v1520 = vadd.f32 0.0, %v1519
      %v1521 = vpop.f32.mrb[0].mxu0
      %1522 = vmatprep.mubr.bf16.mxu0 0
      %1523 = vmatmul.mubr.bf16.gmra.mrb[0].mxu0 %v1439
      %v1524 = vpop.f32.mrb[0].mxu0
      %v1525 = vadd.f32 0.0, %v1524
      %v1526 = vpop.f32.mrb[0].mxu0
      %v1527 = vpop.f32.mrb[0].mxu0
      %v1528 = vadd.f32 0.0, %v1527
      %v1529 = vpop.f32.mrb[0].mxu0
      %1530 = vmatprep.mubr.bf16.mxu0 0
      %1531 = vmatmul.mubr.bf16.gmra.mrb[0].mxu0 %v1442
      %v1532 = vpop.f32.mrb[0].mxu0
      %v1533 = vadd.f32 0.0, %v1532
      %v1534 = vpop.f32.mrb[0].mxu0
      %v1535 = vpop.f32.mrb[0].mxu0
      %v1536 = vadd.f32 0.0, %v1535
      %v1537 = vpop.f32.mrb[0].mxu0
      %1538 = vmatprep.mubr.bf16.mxu0 0
      %1539 = vmatmul.mubr.bf16.gmra.mrb[0].mxu0 %v1445
      %v1540 = vpop.f32.mrb[0].mxu0
      %v1541 = vadd.f32 0.0, %v1540
      %v1542 = vpop.f32.mrb[0].mxu0
      %v1543 = vpop.f32.mrb[0].mxu0
      %v1544 = vadd.f32 0.0, %v1543
      %v1545 = vpop.f32.mrb[0].mxu0
      %1546 = vmatprep.mubr.bf16.mxu0 0
      %1547 = vmatmul.mubr.bf16.gmra.mrb[0].mxu0 %v1448
      %v1548 = vpop.f32.mrb[0].mxu0
      %v1549 = vadd.f32 0.0, %v1548
      %v1550 = vpop.f32.mrb[0].mxu0
      %v1551 = vpop.f32.mrb[0].mxu0
      %v1552 = vadd.f32 0.0, %v1551
      %v1553 = vpop.f32.mrb[0].mxu0
      %1554 = vmatprep.mubr.bf16.mxu0 0
      %1555 = vmatmul.mubr.bf16.gmra.mrb[0].mxu0 %v1451
      %v1556 = vpop.f32.mrb[0].mxu0
      %v1557 = vadd.f32 0.0, %v1556
      %v1558 = vpop.f32.mrb[0].mxu0
      %v1559 = vpop.f32.mrb[0].mxu0
      %v1560 = vadd.f32 0.0, %v1559
      %v1561 = vpop.f32.mrb[0].mxu0
      %1562 = vmatprep.mubr.bf16.mxu0 0
      %1563 = vmatmul.mubr.bf16.gmra.mrb[0].mxu0 %v1454
      %v1564 = vpop.f32.mrb[0].mxu0
      %v1565 = vadd.f32 0.0, %v1564
      %v1566 = vpop.f32.mrb[0].mxu0
      %v1567 = vpop.f32.mrb[0].mxu0
      %v1568 = vadd.f32 0.0, %v1567
      %v1569 = vpop.f32.mrb[0].mxu0
      %1570 = vmatprep.mubr.bf16.mxu0 0
      %1571 = vmatmul.mubr.bf16.gmra.mrb[0].mxu0 %v1457
      %v1572 = vpop.f32.mrb[0].mxu0
      %v1573 = vadd.f32 0.0, %v1572
      %v1574 = vpop.f32.mrb[0].mxu0
      %v1575 = vpop.f32.mrb[0].mxu0
      %v1576 = vadd.f32 0.0, %v1575
      %v1577 = vpop.f32.mrb[0].mxu0
      %1578 = vmatprep.mubr.bf16.mxu0 0
      %1579 = vmatmul.mubr.bf16.gmra.mrb[0].mxu0 %v1460
      %v1580 = vpop.f32.mrb[0].mxu0
      %v1581 = vadd.f32 0.0, %v1580
      %v1582 = vpop.f32.mrb[0].mxu0
      %v1583 = vpop.f32.mrb[0].mxu0
      %v1584 = vadd.f32 0.0, %v1583
      %v1585 = vpop.f32.mrb[0].mxu0
      %1586 = vmatprep.mubr.bf16.mxu0 0
      %1587 = vmatmul.mubr.bf16.gmra.mrb[0].mxu0 %v1463
      %v1588 = vpop.f32.mrb[0].mxu0
      %v1589 = vadd.f32 0.0, %v1588
      %v1590 = vpop.f32.mrb[0].mxu0
      %v1591 = vpop.f32.mrb[0].mxu0
      %v1592 = vadd.f32 0.0, %v1591
      %v1593 = vpop.f32.mrb[0].mxu0
      %1594 = vmatprep.mubr.bf16.mxu0 0
      %1595 = vmatmul.mubr.bf16.gmra.mrb[0].mxu0 %v1466
      %v1596 = vpop.f32.mrb[0].mxu0
      %v1597 = vadd.f32 0.0, %v1596
      %v1598 = vpop.f32.mrb[0].mxu0
      %v1599 = vpop.f32.mrb[0].mxu0
      %v1600 = vadd.f32 0.0, %v1599
      %v1601 = vpop.f32.mrb[0].mxu0
      %1602 = vmatprep.mubr.bf16.mxu0 0
      %1603 = vmatmul.mubr.bf16.gmra.mrb[0].mxu0 %v1469
      %v1604 = vpop.f32.mrb[0].mxu0
      %v1605 = vadd.f32 0.0, %v1604
      %v1606 = vpop.f32.mrb[0].mxu0
      %v1607 = vpop.f32.mrb[0].mxu0
      %v1608 = vadd.f32 0.0, %v1607
      %v1609 = vpop.f32.mrb[0].mxu0
      %1610 = vmatprep.mubr.bf16.mxu0 0
      %1611 = vmatmul.mubr.bf16.gmra.mrb[0].mxu0 %v1472
      %v1612 = vpop.f32.mrb[0].mxu0
      %v1613 = vadd.f32 0.0, %v1612
      %v1614 = vpop.f32.mrb[0].mxu0
      %v1615 = vpop.f32.mrb[0].mxu0
      %v1616 = vadd.f32 0.0, %v1615
      %v1617 = vpop.f32.mrb[0].mxu0
      %1618 = vdwg.mxu0
      %v1619 = vadd.f32 %v1329, %v1509
      %v1620 = vadd.f32 %v1330, %v1512
      %v1621 = vadd.f32 %v1331, %v1517
      %v1622 = vadd.f32 %v1332, %v1520
      %v1623 = vadd.f32 %v1333, %v1525
      %v1624 = vadd.f32 %v1334, %v1528
      %v1625 = vadd.f32 %v1335, %v1533
      %v1626 = vadd.f32 %v1336, %v1536
      %v1627 = vadd.f32 %v1337, %v1541
      %v1628 = vadd.f32 %v1338, %v1544
      %v1629 = vadd.f32 %v1339, %v1549
      %v1630 = vadd.f32 %v1340, %v1552
      %v1631 = vadd.f32 %v1341, %v1557
      %v1632 = vadd.f32 %v1342, %v1560
      %v1633 = vadd.f32 %v1343, %v1565
      %v1634 = vadd.f32 %v1344, %v1568
      %v1635 = vadd.f32 %v1345, %v1573
      %v1636 = vadd.f32 %v1346, %v1576
      %v1637 = vadd.f32 %v1347, %v1581
      %v1638 = vadd.f32 %v1348, %v1584
      %v1639 = vadd.f32 %v1349, %v1589
      %v1640 = vadd.f32 %v1350, %v1592
      %v1641 = vadd.f32 %v1351, %v1597
      %v1642 = vadd.f32 %v1352, %v1600
      %v1643 = vadd.f32 %v1353, %v1605
      %v1644 = vadd.f32 %v1354, %v1608
      %v1645 = vadd.f32 %v1355, %v1613
      %v1646 = vadd.f32 %v1356, %v1616
      %v1647 = vld [vmem:[%s246 + $0x12] sm:$0xff]
      %v1648 = vld [vmem:[%s246 + $0x1a] sm:$0xff]
      %v1649 = vld [vmem:[%s246 + $0x22] sm:$0xff]
      %v1650 = vld [vmem:[%s246 + $0x2a] sm:$0xff]
      %v1651 = vld [vmem:[%s246 + $0x32] sm:$0xff]
      %v1652 = vld [vmem:[%s246 + $0x3a] sm:$0xff]
      %v1653 = vld [vmem:[%s246 + $0x42] sm:$0xff]
      %v1654 = vld [vmem:[%s246 + $0x4a] sm:$0xff]
      %v1655 = vld [vmem:[%s246 + $0x52] sm:$0xff]
      %v1656 = vld [vmem:[%s246 + $0x5a] sm:$0xff]
      %v1657 = vld [vmem:[%s246 + $0x62] sm:$0xff]
      %v1658 = vld [vmem:[%s246 + $0x6a] sm:$0xff]
      %v1659 = vld [vmem:[%s246 + $0x72] sm:$0xff]
      %v1660 = vld [vmem:[%s246 + $0x7a] sm:$0xff]
      %v1661 = vld [vmem:[%s246 + $0x82] sm:$0xff]
      %v1662 = vld [vmem:[%s246 + $0x8a] sm:$0xff]
      %v1663 = vld [vmem:[%s246 + $0x92] sm:$0xff]
      %v1664 = vld [vmem:[%s246 + $0x9a] sm:$0xff]
      %v1665 = vld [vmem:[%s246 + $0xa2] sm:$0xff]
      %v1666 = vld [vmem:[%s246 + $0xaa] sm:$0xff]
      %v1667 = vld [vmem:[%s246 + $0xb2] sm:$0xff]
      %v1668 = vld [vmem:[%s246 + $0xba] sm:$0xff]
      %v1669 = vld [vmem:[%s246 + $0xc2] sm:$0xff]
      %v1670 = vld [vmem:[%s246 + $0xca] sm:$0xff]
      %v1671 = vld [vmem:[%s246 + $0xd2] sm:$0xff]
      %v1672 = vld [vmem:[%s246 + $0xda] sm:$0xff]
      %v1673 = vld [vmem:[%s246 + $0xe2] sm:$0xff]
      %v1674 = vld [vmem:[%s246 + $0xea] sm:$0xff]
      %v1675 = vpack.c.bf16 %v1648, %v1647
      %v1676 = vpack.c.bf16 %v1650, %v1649
      %v1677 = vpack.c.bf16 %v1652, %v1651
      %v1678 = vpack.c.bf16 %v1654, %v1653
      %v1679 = vpack.c.bf16 %v1656, %v1655
      %v1680 = vpack.c.bf16 %v1658, %v1657
      %v1681 = vpack.c.bf16 %v1660, %v1659
      %v1682 = vpack.c.bf16 %v1662, %v1661
      %v1683 = vpack.c.bf16 %v1664, %v1663
      %v1684 = vpack.c.bf16 %v1666, %v1665
      %v1685 = vpack.c.bf16 %v1668, %v1667
      %v1686 = vpack.c.bf16 %v1670, %v1669
      %v1687 = vpack.c.bf16 %v1672, %v1671
      %v1688 = vpack.c.bf16 %v1674, %v1673
      %s1689 = scalar_lea.vmem %s1, 160
      %v1690 = vld [vmem:[%s1689] sm:$0xf]
      %v1691 = vld [vmem:[%s1689 + $0x4] sm:$0xf]
      %v1692 = vld [vmem:[%s1689 + $0x8] sm:$0xf]
      %v1693 = vld [vmem:[%s1689 + $0xc] sm:$0xf]
      %v1694 = vld [vmem:[%s1689 + $0x10] sm:$0xf]
      %v1695 = vld [vmem:[%s1689 + $0x14] sm:$0xf]
      %v1696 = vld [vmem:[%s1689 + $0x18] sm:$0xf]
      %v1697 = vld [vmem:[%s1689 + $0x1c] sm:$0xf]
      %v1706 = vunpack.c.l.b16 %v1690
      %v1707 = vunpack.c.l.b16 %v1691
      %v1708 = vunpack.c.l.b16 %v1692
      %v1709 = vunpack.c.l.b16 %v1693
      %v1710 = vunpack.c.l.b16 %v1694
      %v1711 = vunpack.c.l.b16 %v1695
      %v1712 = vunpack.c.l.b16 %v1696
      %v1713 = vunpack.c.l.b16 %v1697
      %v1714 = vpack.c.b16 %v1707, %v1706
      %v1715 = vpack.c.b16 %v1709, %v1708
      %v1716 = vpack.c.b16 %v1711, %v1710
      %v1717 = vpack.c.b16 %v1713, %v1712
      %v1723 = vsel %vm378, %v1675, 0
      %v1726 = vsel %vm378, %v1676, 0
      %v1729 = vsel %vm378, %v1677, 0
      %v1732 = vsel %vm378, %v1678, 0
      %v1735 = vsel %vm378, %v1679, 0
      %v1738 = vsel %vm378, %v1680, 0
      %v1741 = vsel %vm378, %v1681, 0
      %v1744 = vsel %vm378, %v1682, 0
      %v1747 = vsel %vm378, %v1683, 0
      %v1750 = vsel %vm378, %v1684, 0
      %v1753 = vsel %vm378, %v1685, 0
      %v1756 = vsel %vm378, %v1686, 0
      %v1759 = vsel %vm378, %v1687, 0
      %v1762 = vsel %vm378, %v1688, 0
      %1764 = vmatprep.subr.bf16.mxu0 0
      %1765 = vmatpush1.bf16.msra.mxu0 %v1714
      %1766 = vmatprep.subr.bf16.mxu0 0
      %1767 = vmatpush1.bf16.msra.mxu0 %v1715
      %1768 = vmatprep.subr.bf16.mxu0 0
      %1769 = vmatpush1.bf16.msra.mxu0 %v1716
      %1770 = vmatprep.subr.bf16.mxu0 0
      %1771 = vmatpush1.bf16.msra.mxu0 %v1717
      %1772 = vmatprep.subr.bf16.mxu0 0
      %1773 = vmatpush1.bf16.msra.mxu0 0
      %1774 = vmatprep.subr.bf16.mxu0 0
      %1775 = vmatpush1.bf16.msra.mxu0 0
      %1776 = vmatprep.subr.bf16.mxu0 0
      %1777 = vmatpush1.bf16.msra.mxu0 0
      %1778 = vmatprep.subr.bf16.mxu0 0
      %1779 = vmatpush1.bf16.msra.mxu0 0
      %1780 = vmatprep.subr.bf16.mxu0 0
      %1781 = vmatpush1.bf16.msra.mxu0 0
      %1782 = vmatprep.subr.bf16.mxu0 0
      %1783 = vmatpush1.bf16.msra.mxu0 0
      %1784 = vmatprep.subr.bf16.mxu0 0
      %1785 = vmatpush1.bf16.msra.mxu0 0
      %1786 = vmatprep.subr.bf16.mxu0 0
      %1787 = vmatpush1.bf16.msra.mxu0 0
      %1788 = vmatprep.subr.bf16.mxu0 0
      %1789 = vmatpush1.bf16.msra.mxu0 0
      %1790 = vmatprep.subr.bf16.mxu0 0
      %1791 = vmatpush1.bf16.msra.mxu0 0
      %1792 = vmatprep.subr.bf16.mxu0 0
      %1793 = vmatpush1.bf16.msra.mxu0 0
      %1794 = vmatprep.subr.bf16.mxu0 0
      %1795 = vmatpush1.bf16.msra.mxu0 0
      %1796 = vmatprep.mubr.bf16.mxu0 0
      %1797 = vmatmul.mubr.bf16.gmra.mrb[0].mxu0 %v1723
      %v1798 = vpop.f32.mrb[0].mxu0
      %v1799 = vadd.f32 0.0, %v1798
      %v1800 = vpop.f32.mrb[0].mxu0
      %v1801 = vpop.f32.mrb[0].mxu0
      %v1802 = vadd.f32 0.0, %v1801
      %v1803 = vpop.f32.mrb[0].mxu0
      %1804 = vmatprep.mubr.bf16.mxu0 0
      %1805 = vmatmul.mubr.bf16.gmra.mrb[0].mxu0 %v1726
      %v1806 = vpop.f32.mrb[0].mxu0
      %v1807 = vadd.f32 0.0, %v1806
      %v1808 = vpop.f32.mrb[0].mxu0
      %v1809 = vpop.f32.mrb[0].mxu0
      %v1810 = vadd.f32 0.0, %v1809
      %v1811 = vpop.f32.mrb[0].mxu0
      %1812 = vmatprep.mubr.bf16.mxu0 0
      %1813 = vmatmul.mubr.bf16.gmra.mrb[0].mxu0 %v1729
      %v1814 = vpop.f32.mrb[0].mxu0
      %v1815 = vadd.f32 0.0, %v1814
      %v1816 = vpop.f32.mrb[0].mxu0
      %v1817 = vpop.f32.mrb[0].mxu0
      %v1818 = vadd.f32 0.0, %v1817
      %v1819 = vpop.f32.mrb[0].mxu0
      %1820 = vmatprep.mubr.bf16.mxu0 0
      %1821 = vmatmul.mubr.bf16.gmra.mrb[0].mxu0 %v1732
      %v1822 = vpop.f32.mrb[0].mxu0
      %v1823 = vadd.f32 0.0, %v1822
      %v1824 = vpop.f32.mrb[0].mxu0
      %v1825 = vpop.f32.mrb[0].mxu0
      %v1826 = vadd.f32 0.0, %v1825
      %v1827 = vpop.f32.mrb[0].mxu0
      %1828 = vmatprep.mubr.bf16.mxu0 0
      %1829 = vmatmul.mubr.bf16.gmra.mrb[0].mxu0 %v1735
      %v1830 = vpop.f32.mrb[0].mxu0
      %v1831 = vadd.f32 0.0, %v1830
      %v1832 = vpop.f32.mrb[0].mxu0
      %v1833 = vpop.f32.mrb[0].mxu0
      %v1834 = vadd.f32 0.0, %v1833
      %v1835 = vpop.f32.mrb[0].mxu0
      %1836 = vmatprep.mubr.bf16.mxu0 0
      %1837 = vmatmul.mubr.bf16.gmra.mrb[0].mxu0 %v1738
      %v1838 = vpop.f32.mrb[0].mxu0
      %v1839 = vadd.f32 0.0, %v1838
      %v1840 = vpop.f32.mrb[0].mxu0
      %v1841 = vpop.f32.mrb[0].mxu0
      %v1842 = vadd.f32 0.0, %v1841
      %v1843 = vpop.f32.mrb[0].mxu0
      %1844 = vmatprep.mubr.bf16.mxu0 0
      %1845 = vmatmul.mubr.bf16.gmra.mrb[0].mxu0 %v1741
      %v1846 = vpop.f32.mrb[0].mxu0
      %v1847 = vadd.f32 0.0, %v1846
      %v1848 = vpop.f32.mrb[0].mxu0
      %v1849 = vpop.f32.mrb[0].mxu0
      %v1850 = vadd.f32 0.0, %v1849
      %v1851 = vpop.f32.mrb[0].mxu0
      %1852 = vmatprep.mubr.bf16.mxu0 0
      %1853 = vmatmul.mubr.bf16.gmra.mrb[0].mxu0 %v1744
      %v1854 = vpop.f32.mrb[0].mxu0
      %v1855 = vadd.f32 0.0, %v1854
      %v1856 = vpop.f32.mrb[0].mxu0
      %v1857 = vpop.f32.mrb[0].mxu0
      %v1858 = vadd.f32 0.0, %v1857
      %v1859 = vpop.f32.mrb[0].mxu0
      %1860 = vmatprep.mubr.bf16.mxu0 0
      %1861 = vmatmul.mubr.bf16.gmra.mrb[0].mxu0 %v1747
      %v1862 = vpop.f32.mrb[0].mxu0
      %v1863 = vadd.f32 0.0, %v1862
      %v1864 = vpop.f32.mrb[0].mxu0
      %v1865 = vpop.f32.mrb[0].mxu0
      %v1866 = vadd.f32 0.0, %v1865
      %v1867 = vpop.f32.mrb[0].mxu0
      %1868 = vmatprep.mubr.bf16.mxu0 0
      %1869 = vmatmul.mubr.bf16.gmra.mrb[0].mxu0 %v1750
      %v1870 = vpop.f32.mrb[0].mxu0
      %v1871 = vadd.f32 0.0, %v1870
      %v1872 = vpop.f32.mrb[0].mxu0
      %v1873 = vpop.f32.mrb[0].mxu0
      %v1874 = vadd.f32 0.0, %v1873
      %v1875 = vpop.f32.mrb[0].mxu0
      %1876 = vmatprep.mubr.bf16.mxu0 0
      %1877 = vmatmul.mubr.bf16.gmra.mrb[0].mxu0 %v1753
      %v1878 = vpop.f32.mrb[0].mxu0
      %v1879 = vadd.f32 0.0, %v1878
      %v1880 = vpop.f32.mrb[0].mxu0
      %v1881 = vpop.f32.mrb[0].mxu0
      %v1882 = vadd.f32 0.0, %v1881
      %v1883 = vpop.f32.mrb[0].mxu0
      %1884 = vmatprep.mubr.bf16.mxu0 0
      %1885 = vmatmul.mubr.bf16.gmra.mrb[0].mxu0 %v1756
      %v1886 = vpop.f32.mrb[0].mxu0
      %v1887 = vadd.f32 0.0, %v1886
      %v1888 = vpop.f32.mrb[0].mxu0
      %v1889 = vpop.f32.mrb[0].mxu0
      %v1890 = vadd.f32 0.0, %v1889
      %v1891 = vpop.f32.mrb[0].mxu0
      %1892 = vmatprep.mubr.bf16.mxu0 0
      %1893 = vmatmul.mubr.bf16.gmra.mrb[0].mxu0 %v1759
      %v1894 = vpop.f32.mrb[0].mxu0
      %v1895 = vadd.f32 0.0, %v1894
      %v1896 = vpop.f32.mrb[0].mxu0
      %v1897 = vpop.f32.mrb[0].mxu0
      %v1898 = vadd.f32 0.0, %v1897
      %v1899 = vpop.f32.mrb[0].mxu0
      %1900 = vmatprep.mubr.bf16.mxu0 0
      %1901 = vmatmul.mubr.bf16.gmra.mrb[0].mxu0 %v1762
      %v1902 = vpop.f32.mrb[0].mxu0
      %v1903 = vadd.f32 0.0, %v1902
      %v1904 = vpop.f32.mrb[0].mxu0
      %v1905 = vpop.f32.mrb[0].mxu0
      %v1906 = vadd.f32 0.0, %v1905
      %v1907 = vpop.f32.mrb[0].mxu0
      %1908 = vdwg.mxu0
      %v1909 = vadd.f32 %v1619, %v1799
      %v1910 = vadd.f32 %v1620, %v1802
      %v1911 = vadd.f32 %v1621, %v1807
      %v1912 = vadd.f32 %v1622, %v1810
      %v1913 = vadd.f32 %v1623, %v1815
      %v1914 = vadd.f32 %v1624, %v1818
      %v1915 = vadd.f32 %v1625, %v1823
      %v1916 = vadd.f32 %v1626, %v1826
      %v1917 = vadd.f32 %v1627, %v1831
      %v1918 = vadd.f32 %v1628, %v1834
      %v1919 = vadd.f32 %v1629, %v1839
      %v1920 = vadd.f32 %v1630, %v1842
      %v1921 = vadd.f32 %v1631, %v1847
      %v1922 = vadd.f32 %v1632, %v1850
      %v1923 = vadd.f32 %v1633, %v1855
      %v1924 = vadd.f32 %v1634, %v1858
      %v1925 = vadd.f32 %v1635, %v1863
      %v1926 = vadd.f32 %v1636, %v1866
      %v1927 = vadd.f32 %v1637, %v1871
      %v1928 = vadd.f32 %v1638, %v1874
      %v1929 = vadd.f32 %v1639, %v1879
      %v1930 = vadd.f32 %v1640, %v1882
      %v1931 = vadd.f32 %v1641, %v1887
      %v1932 = vadd.f32 %v1642, %v1890
      %v1933 = vadd.f32 %v1643, %v1895
      %v1934 = vadd.f32 %v1644, %v1898
      %v1935 = vadd.f32 %v1645, %v1903
      %v1936 = vadd.f32 %v1646, %v1906
      %v1937 = vld [vmem:[%s246 + $0x20] sm:$0xff]
      %v1938 = vld [vmem:[%s246 + $0x28] sm:$0xff]
      %v1939 = vld [vmem:[%s246 + $0x30] sm:$0xff]
      %v1940 = vld [vmem:[%s246 + $0x38] sm:$0xff]
      %v1941 = vld [vmem:[%s246 + $0x40] sm:$0xff]
      %v1942 = vld [vmem:[%s246 + $0x48] sm:$0xff]
      %v1943 = vld [vmem:[%s246 + $0x50] sm:$0xff]
      %v1944 = vld [vmem:[%s246 + $0x58] sm:$0xff]
      %v1945 = vld [vmem:[%s246 + $0x60] sm:$0xff]
      %v1946 = vld [vmem:[%s246 + $0x68] sm:$0xff]
      %v1947 = vld [vmem:[%s246 + $0x70] sm:$0xff]
      %v1948 = vld [vmem:[%s246 + $0x78] sm:$0xff]
      %v1949 = vld [vmem:[%s246 + $0x80] sm:$0xff]
      %v1950 = vld [vmem:[%s246 + $0x88] sm:$0xff]
      %v1951 = vld [vmem:[%s246 + $0x90] sm:$0xff]
      %v1952 = vld [vmem:[%s246 + $0x98] sm:$0xff]
      %v1953 = vld [vmem:[%s246 + $0xa0] sm:$0xff]
      %v1954 = vld [vmem:[%s246 + $0xa8] sm:$0xff]
      %v1955 = vld [vmem:[%s246 + $0xb0] sm:$0xff]
      %v1956 = vld [vmem:[%s246 + $0xb8] sm:$0xff]
      %v1957 = vld [vmem:[%s246 + $0xc0] sm:$0xff]
      %v1958 = vld [vmem:[%s246 + $0xc8] sm:$0xff]
      %v1959 = vld [vmem:[%s246 + $0xd0] sm:$0xff]
      %v1960 = vld [vmem:[%s246 + $0xd8] sm:$0xff]
      %v1961 = vld [vmem:[%s246 + $0xe0] sm:$0xff]
      %v1962 = vld [vmem:[%s246 + $0xe8] sm:$0xff]
      %v1963 = vld [vmem:[%s246 + $0xf0] sm:$0xff]
      %v1964 = vld [vmem:[%s246 + $0xf8] sm:$0xff]
      %v1965 = vpack.c.bf16 %v1938, %v1937
      %v1966 = vpack.c.bf16 %v1940, %v1939
      %v1967 = vpack.c.bf16 %v1942, %v1941
      %v1968 = vpack.c.bf16 %v1944, %v1943
      %v1969 = vpack.c.bf16 %v1946, %v1945
      %v1970 = vpack.c.bf16 %v1948, %v1947
      %v1971 = vpack.c.bf16 %v1950, %v1949
      %v1972 = vpack.c.bf16 %v1952, %v1951
      %v1973 = vpack.c.bf16 %v1954, %v1953
      %v1974 = vpack.c.bf16 %v1956, %v1955
      %v1975 = vpack.c.bf16 %v1958, %v1957
      %v1976 = vpack.c.bf16 %v1960, %v1959
      %v1977 = vpack.c.bf16 %v1962, %v1961
      %v1978 = vpack.c.bf16 %v1964, %v1963
      %s1979 = scalar_lea.vmem %s1, 192
      %v1980 = vld [vmem:[%s1979] sm:$0xf]
      %v1981 = vld [vmem:[%s1979 + $0x4] sm:$0xf]
      %v1982 = vld [vmem:[%s1979 + $0x8] sm:$0xf]
      %v1983 = vld [vmem:[%s1979 + $0xc] sm:$0xf]
      %v1984 = vld [vmem:[%s1979 + $0x10] sm:$0xf]
      %v1985 = vld [vmem:[%s1979 + $0x14] sm:$0xf]
      %v1986 = vld [vmem:[%s1979 + $0x18] sm:$0xf]
      %v1987 = vld [vmem:[%s1979 + $0x1c] sm:$0xf]
      %v1996 = vunpack.c.l.b16 %v1980
      %v1997 = vunpack.c.l.b16 %v1981
      %v1998 = vunpack.c.l.b16 %v1982
      %v1999 = vunpack.c.l.b16 %v1983
      %v2000 = vunpack.c.l.b16 %v1984
      %v2001 = vunpack.c.l.b16 %v1985
      %v2002 = vunpack.c.l.b16 %v1986
      %v2003 = vunpack.c.l.b16 %v1987
      %v2004 = vpack.c.b16 %v1997, %v1996
      %v2005 = vpack.c.b16 %v1999, %v1998
      %v2006 = vpack.c.b16 %v2001, %v2000
      %v2007 = vpack.c.b16 %v2003, %v2002
      %v2013 = vsel %vm378, %v1965, 0
      %v2016 = vsel %vm378, %v1966, 0
      %v2019 = vsel %vm378, %v1967, 0
      %v2022 = vsel %vm378, %v1968, 0
      %v2025 = vsel %vm378, %v1969, 0
      %v2028 = vsel %vm378, %v1970, 0
      %v2031 = vsel %vm378, %v1971, 0
      %v2034 = vsel %vm378, %v1972, 0
      %v2037 = vsel %vm378, %v1973, 0
      %v2040 = vsel %vm378, %v1974, 0
      %v2043 = vsel %vm378, %v1975, 0
      %v2046 = vsel %vm378, %v1976, 0
      %v2049 = vsel %vm378, %v1977, 0
      %v2052 = vsel %vm378, %v1978, 0
      %2054 = vmatprep.subr.bf16.mxu0 0
      %2055 = vmatpush1.bf16.msra.mxu0 %v2004
      %2056 = vmatprep.subr.bf16.mxu0 0
      %2057 = vmatpush1.bf16.msra.mxu0 %v2005
      %2058 = vmatprep.subr.bf16.mxu0 0
      %2059 = vmatpush1.bf16.msra.mxu0 %v2006
      %2060 = vmatprep.subr.bf16.mxu0 0
      %2061 = vmatpush1.bf16.msra.mxu0 %v2007
      %2062 = vmatprep.subr.bf16.mxu0 0
      %2063 = vmatpush1.bf16.msra.mxu0 0
      %2064 = vmatprep.subr.bf16.mxu0 0
      %2065 = vmatpush1.bf16.msra.mxu0 0
      %2066 = vmatprep.subr.bf16.mxu0 0
      %2067 = vmatpush1.bf16.msra.mxu0 0
      %2068 = vmatprep.subr.bf16.mxu0 0
      %2069 = vmatpush1.bf16.msra.mxu0 0
      %2070 = vmatprep.subr.bf16.mxu0 0
      %2071 = vmatpush1.bf16.msra.mxu0 0
      %2072 = vmatprep.subr.bf16.mxu0 0
      %2073 = vmatpush1.bf16.msra.mxu0 0
      %2074 = vmatprep.subr.bf16.mxu0 0
      %2075 = vmatpush1.bf16.msra.mxu0 0
      %2076 = vmatprep.subr.bf16.mxu0 0
      %2077 = vmatpush1.bf16.msra.mxu0 0
      %2078 = vmatprep.subr.bf16.mxu0 0
      %2079 = vmatpush1.bf16.msra.mxu0 0
      %2080 = vmatprep.subr.bf16.mxu0 0
      %2081 = vmatpush1.bf16.msra.mxu0 0
      %2082 = vmatprep.subr.bf16.mxu0 0
      %2083 = vmatpush1.bf16.msra.mxu0 0
      %2084 = vmatprep.subr.bf16.mxu0 0
      %2085 = vmatpush1.bf16.msra.mxu0 0
      %2086 = vmatprep.mubr.bf16.mxu0 0
      %2087 = vmatmul.mubr.bf16.gmra.mrb[0].mxu0 %v2013
      %v2088 = vpop.f32.mrb[0].mxu0
      %v2089 = vadd.f32 0.0, %v2088
      %v2090 = vpop.f32.mrb[0].mxu0
      %v2091 = vpop.f32.mrb[0].mxu0
      %v2092 = vadd.f32 0.0, %v2091
      %v2093 = vpop.f32.mrb[0].mxu0
      %2094 = vmatprep.mubr.bf16.mxu0 0
      %2095 = vmatmul.mubr.bf16.gmra.mrb[0].mxu0 %v2016
      %v2096 = vpop.f32.mrb[0].mxu0
      %v2097 = vadd.f32 0.0, %v2096
      %v2098 = vpop.f32.mrb[0].mxu0
      %v2099 = vpop.f32.mrb[0].mxu0
      %v2100 = vadd.f32 0.0, %v2099
      %v2101 = vpop.f32.mrb[0].mxu0
      %2102 = vmatprep.mubr.bf16.mxu0 0
      %2103 = vmatmul.mubr.bf16.gmra.mrb[0].mxu0 %v2019
      %v2104 = vpop.f32.mrb[0].mxu0
      %v2105 = vadd.f32 0.0, %v2104
      %v2106 = vpop.f32.mrb[0].mxu0
      %v2107 = vpop.f32.mrb[0].mxu0
      %v2108 = vadd.f32 0.0, %v2107
      %v2109 = vpop.f32.mrb[0].mxu0
      %2110 = vmatprep.mubr.bf16.mxu0 0
      %2111 = vmatmul.mubr.bf16.gmra.mrb[0].mxu0 %v2022
      %v2112 = vpop.f32.mrb[0].mxu0
      %v2113 = vadd.f32 0.0, %v2112
      %v2114 = vpop.f32.mrb[0].mxu0
      %v2115 = vpop.f32.mrb[0].mxu0
      %v2116 = vadd.f32 0.0, %v2115
      %v2117 = vpop.f32.mrb[0].mxu0
      %2118 = vmatprep.mubr.bf16.mxu0 0
      %2119 = vmatmul.mubr.bf16.gmra.mrb[0].mxu0 %v2025
      %v2120 = vpop.f32.mrb[0].mxu0
      %v2121 = vadd.f32 0.0, %v2120
      %v2122 = vpop.f32.mrb[0].mxu0
      %v2123 = vpop.f32.mrb[0].mxu0
      %v2124 = vadd.f32 0.0, %v2123
      %v2125 = vpop.f32.mrb[0].mxu0
      %2126 = vmatprep.mubr.bf16.mxu0 0
      %2127 = vmatmul.mubr.bf16.gmra.mrb[0].mxu0 %v2028
      %v2128 = vpop.f32.mrb[0].mxu0
      %v2129 = vadd.f32 0.0, %v2128
      %v2130 = vpop.f32.mrb[0].mxu0
      %v2131 = vpop.f32.mrb[0].mxu0
      %v2132 = vadd.f32 0.0, %v2131
      %v2133 = vpop.f32.mrb[0].mxu0
      %2134 = vmatprep.mubr.bf16.mxu0 0
      %2135 = vmatmul.mubr.bf16.gmra.mrb[0].mxu0 %v2031
      %v2136 = vpop.f32.mrb[0].mxu0
      %v2137 = vadd.f32 0.0, %v2136
      %v2138 = vpop.f32.mrb[0].mxu0
      %v2139 = vpop.f32.mrb[0].mxu0
      %v2140 = vadd.f32 0.0, %v2139
      %v2141 = vpop.f32.mrb[0].mxu0
      %2142 = vmatprep.mubr.bf16.mxu0 0
      %2143 = vmatmul.mubr.bf16.gmra.mrb[0].mxu0 %v2034
      %v2144 = vpop.f32.mrb[0].mxu0
      %v2145 = vadd.f32 0.0, %v2144
      %v2146 = vpop.f32.mrb[0].mxu0
      %v2147 = vpop.f32.mrb[0].mxu0
      %v2148 = vadd.f32 0.0, %v2147
      %v2149 = vpop.f32.mrb[0].mxu0
      %2150 = vmatprep.mubr.bf16.mxu0 0
      %2151 = vmatmul.mubr.bf16.gmra.mrb[0].mxu0 %v2037
      %v2152 = vpop.f32.mrb[0].mxu0
      %v2153 = vadd.f32 0.0, %v2152
      %v2154 = vpop.f32.mrb[0].mxu0
      %v2155 = vpop.f32.mrb[0].mxu0
      %v2156 = vadd.f32 0.0, %v2155
      %v2157 = vpop.f32.mrb[0].mxu0
      %2158 = vmatprep.mubr.bf16.mxu0 0
      %2159 = vmatmul.mubr.bf16.gmra.mrb[0].mxu0 %v2040
      %v2160 = vpop.f32.mrb[0].mxu0
      %v2161 = vadd.f32 0.0, %v2160
      %v2162 = vpop.f32.mrb[0].mxu0
      %v2163 = vpop.f32.mrb[0].mxu0
      %v2164 = vadd.f32 0.0, %v2163
      %v2165 = vpop.f32.mrb[0].mxu0
      %2166 = vmatprep.mubr.bf16.mxu0 0
      %2167 = vmatmul.mubr.bf16.gmra.mrb[0].mxu0 %v2043
      %v2168 = vpop.f32.mrb[0].mxu0
      %v2169 = vadd.f32 0.0, %v2168
      %v2170 = vpop.f32.mrb[0].mxu0
      %v2171 = vpop.f32.mrb[0].mxu0
      %v2172 = vadd.f32 0.0, %v2171
      %v2173 = vpop.f32.mrb[0].mxu0
      %2174 = vmatprep.mubr.bf16.mxu0 0
      %2175 = vmatmul.mubr.bf16.gmra.mrb[0].mxu0 %v2046
      %v2176 = vpop.f32.mrb[0].mxu0
      %v2177 = vadd.f32 0.0, %v2176
      %v2178 = vpop.f32.mrb[0].mxu0
      %v2179 = vpop.f32.mrb[0].mxu0
      %v2180 = vadd.f32 0.0, %v2179
      %v2181 = vpop.f32.mrb[0].mxu0
      %2182 = vmatprep.mubr.bf16.mxu0 0
      %2183 = vmatmul.mubr.bf16.gmra.mrb[0].mxu0 %v2049
      %v2184 = vpop.f32.mrb[0].mxu0
      %v2185 = vadd.f32 0.0, %v2184
      %v2186 = vpop.f32.mrb[0].mxu0
      %v2187 = vpop.f32.mrb[0].mxu0
      %v2188 = vadd.f32 0.0, %v2187
      %v2189 = vpop.f32.mrb[0].mxu0
      %2190 = vmatprep.mubr.bf16.mxu0 0
      %2191 = vmatmul.mubr.bf16.gmra.mrb[0].mxu0 %v2052
      %v2192 = vpop.f32.mrb[0].mxu0
      %v2193 = vadd.f32 0.0, %v2192
      %v2194 = vpop.f32.mrb[0].mxu0
      %v2195 = vpop.f32.mrb[0].mxu0
      %v2196 = vadd.f32 0.0, %v2195
      %v2197 = vpop.f32.mrb[0].mxu0
      %2198 = vdwg.mxu0
      %v2199 = vadd.f32 %v1909, %v2089
      %v2200 = vadd.f32 %v1910, %v2092
      %v2201 = vadd.f32 %v1911, %v2097
      %v2202 = vadd.f32 %v1912, %v2100
      %v2203 = vadd.f32 %v1913, %v2105
      %v2204 = vadd.f32 %v1914, %v2108
      %v2205 = vadd.f32 %v1915, %v2113
      %v2206 = vadd.f32 %v1916, %v2116
      %v2207 = vadd.f32 %v1917, %v2121
      %v2208 = vadd.f32 %v1918, %v2124
      %v2209 = vadd.f32 %v1919, %v2129
      %v2210 = vadd.f32 %v1920, %v2132
      %v2211 = vadd.f32 %v1921, %v2137
      %v2212 = vadd.f32 %v1922, %v2140
      %v2213 = vadd.f32 %v1923, %v2145
      %v2214 = vadd.f32 %v1924, %v2148
      %v2215 = vadd.f32 %v1925, %v2153
      %v2216 = vadd.f32 %v1926, %v2156
      %v2217 = vadd.f32 %v1927, %v2161
      %v2218 = vadd.f32 %v1928, %v2164
      %v2219 = vadd.f32 %v1929, %v2169
      %v2220 = vadd.f32 %v1930, %v2172
      %v2221 = vadd.f32 %v1931, %v2177
      %v2222 = vadd.f32 %v1932, %v2180
      %v2223 = vadd.f32 %v1933, %v2185
      %v2224 = vadd.f32 %v1934, %v2188
      %v2225 = vadd.f32 %v1935, %v2193
      %v2226 = vadd.f32 %v1936, %v2196
      %v2227 = vld [vmem:[%s246 + $0x21] sm:$0xff]
      %v2228 = vld [vmem:[%s246 + $0x29] sm:$0xff]
      %v2229 = vld [vmem:[%s246 + $0x31] sm:$0xff]
      %v2230 = vld [vmem:[%s246 + $0x39] sm:$0xff]
      %v2231 = vld [vmem:[%s246 + $0x41] sm:$0xff]
      %v2232 = vld [vmem:[%s246 + $0x49] sm:$0xff]
      %v2233 = vld [vmem:[%s246 + $0x51] sm:$0xff]
      %v2234 = vld [vmem:[%s246 + $0x59] sm:$0xff]
      %v2235 = vld [vmem:[%s246 + $0x61] sm:$0xff]
      %v2236 = vld [vmem:[%s246 + $0x69] sm:$0xff]
      %v2237 = vld [vmem:[%s246 + $0x71] sm:$0xff]
      %v2238 = vld [vmem:[%s246 + $0x79] sm:$0xff]
      %v2239 = vld [vmem:[%s246 + $0x81] sm:$0xff]
      %v2240 = vld [vmem:[%s246 + $0x89] sm:$0xff]
      %v2241 = vld [vmem:[%s246 + $0x91] sm:$0xff]
      %v2242 = vld [vmem:[%s246 + $0x99] sm:$0xff]
      %v2243 = vld [vmem:[%s246 + $0xa1] sm:$0xff]
      %v2244 = vld [vmem:[%s246 + $0xa9] sm:$0xff]
      %v2245 = vld [vmem:[%s246 + $0xb1] sm:$0xff]
      %v2246 = vld [vmem:[%s246 + $0xb9] sm:$0xff]
      %v2247 = vld [vmem:[%s246 + $0xc1] sm:$0xff]
      %v2248 = vld [vmem:[%s246 + $0xc9] sm:$0xff]
      %v2249 = vld [vmem:[%s246 + $0xd1] sm:$0xff]
      %v2250 = vld [vmem:[%s246 + $0xd9] sm:$0xff]
      %v2251 = vld [vmem:[%s246 + $0xe1] sm:$0xff]
      %v2252 = vld [vmem:[%s246 + $0xe9] sm:$0xff]
      %v2253 = vld [vmem:[%s246 + $0xf1] sm:$0xff]
      %v2254 = vld [vmem:[%s246 + $0xf9] sm:$0xff]
      %v2255 = vpack.c.bf16 %v2228, %v2227
      %v2256 = vpack.c.bf16 %v2230, %v2229
      %v2257 = vpack.c.bf16 %v2232, %v2231
      %v2258 = vpack.c.bf16 %v2234, %v2233
      %v2259 = vpack.c.bf16 %v2236, %v2235
      %v2260 = vpack.c.bf16 %v2238, %v2237
      %v2261 = vpack.c.bf16 %v2240, %v2239
      %v2262 = vpack.c.bf16 %v2242, %v2241
      %v2263 = vpack.c.bf16 %v2244, %v2243
      %v2264 = vpack.c.bf16 %v2246, %v2245
      %v2265 = vpack.c.bf16 %v2248, %v2247
      %v2266 = vpack.c.bf16 %v2250, %v2249
      %v2267 = vpack.c.bf16 %v2252, %v2251
      %v2268 = vpack.c.bf16 %v2254, %v2253
      %s2269 = scalar_lea.vmem %s1, 224
      %v2270 = vld [vmem:[%s2269] sm:$0xf]
      %v2271 = vld [vmem:[%s2269 + $0x4] sm:$0xf]
      %v2272 = vld [vmem:[%s2269 + $0x8] sm:$0xf]
      %v2273 = vld [vmem:[%s2269 + $0xc] sm:$0xf]
      %v2274 = vld [vmem:[%s2269 + $0x10] sm:$0xf]
      %v2275 = vld [vmem:[%s2269 + $0x14] sm:$0xf]
      %v2276 = vld [vmem:[%s2269 + $0x18] sm:$0xf]
      %v2277 = vld [vmem:[%s2269 + $0x1c] sm:$0xf]
      %v2286 = vunpack.c.l.b16 %v2270
      %v2287 = vunpack.c.l.b16 %v2271
      %v2288 = vunpack.c.l.b16 %v2272
      %v2289 = vunpack.c.l.b16 %v2273
      %v2290 = vunpack.c.l.b16 %v2274
      %v2291 = vunpack.c.l.b16 %v2275
      %v2292 = vunpack.c.l.b16 %v2276
      %v2293 = vunpack.c.l.b16 %v2277
      %v2294 = vpack.c.b16 %v2287, %v2286
      %v2295 = vpack.c.b16 %v2289, %v2288
      %v2296 = vpack.c.b16 %v2291, %v2290
      %v2297 = vpack.c.b16 %v2293, %v2292
      %v2303 = vsel %vm378, %v2255, 0
      %v2306 = vsel %vm378, %v2256, 0
      %v2309 = vsel %vm378, %v2257, 0
      %v2312 = vsel %vm378, %v2258, 0
      %v2315 = vsel %vm378, %v2259, 0
      %v2318 = vsel %vm378, %v2260, 0
      %v2321 = vsel %vm378, %v2261, 0
      %v2324 = vsel %vm378, %v2262, 0
      %v2327 = vsel %vm378, %v2263, 0
      %v2330 = vsel %vm378, %v2264, 0
      %v2333 = vsel %vm378, %v2265, 0
      %v2336 = vsel %vm378, %v2266, 0
      %v2339 = vsel %vm378, %v2267, 0
      %v2342 = vsel %vm378, %v2268, 0
      %2344 = vmatprep.subr.bf16.mxu0 0
      %2345 = vmatpush1.bf16.msra.mxu0 %v2294
      %2346 = vmatprep.subr.bf16.mxu0 0
      %2347 = vmatpush1.bf16.msra.mxu0 %v2295
      %2348 = vmatprep.subr.bf16.mxu0 0
      %2349 = vmatpush1.bf16.msra.mxu0 %v2296
      %2350 = vmatprep.subr.bf16.mxu0 0
      %2351 = vmatpush1.bf16.msra.mxu0 %v2297
      %2352 = vmatprep.subr.bf16.mxu0 0
      %2353 = vmatpush1.bf16.msra.mxu0 0
      %2354 = vmatprep.subr.bf16.mxu0 0
      %2355 = vmatpush1.bf16.msra.mxu0 0
      %2356 = vmatprep.subr.bf16.mxu0 0
      %2357 = vmatpush1.bf16.msra.mxu0 0
      %2358 = vmatprep.subr.bf16.mxu0 0
      %2359 = vmatpush1.bf16.msra.mxu0 0
      %2360 = vmatprep.subr.bf16.mxu0 0
      %2361 = vmatpush1.bf16.msra.mxu0 0
      %2362 = vmatprep.subr.bf16.mxu0 0
      %2363 = vmatpush1.bf16.msra.mxu0 0
      %2364 = vmatprep.subr.bf16.mxu0 0
      %2365 = vmatpush1.bf16.msra.mxu0 0
      %2366 = vmatprep.subr.bf16.mxu0 0
      %2367 = vmatpush1.bf16.msra.mxu0 0
      %2368 = vmatprep.subr.bf16.mxu0 0
      %2369 = vmatpush1.bf16.msra.mxu0 0
      %2370 = vmatprep.subr.bf16.mxu0 0
      %2371 = vmatpush1.bf16.msra.mxu0 0
      %2372 = vmatprep.subr.bf16.mxu0 0
      %2373 = vmatpush1.bf16.msra.mxu0 0
      %2374 = vmatprep.subr.bf16.mxu0 0
      %2375 = vmatpush1.bf16.msra.mxu0 0
      %2376 = vmatprep.mubr.bf16.mxu0 0
      %2377 = vmatmul.mubr.bf16.gmra.mrb[0].mxu0 %v2303
      %v2378 = vpop.f32.mrb[0].mxu0
      %v2379 = vadd.f32 0.0, %v2378
      %v2380 = vpop.f32.mrb[0].mxu0
      %v2381 = vpop.f32.mrb[0].mxu0
      %v2382 = vadd.f32 0.0, %v2381
      %v2383 = vpop.f32.mrb[0].mxu0
      %2384 = vmatprep.mubr.bf16.mxu0 0
      %2385 = vmatmul.mubr.bf16.gmra.mrb[0].mxu0 %v2306
      %v2386 = vpop.f32.mrb[0].mxu0
      %v2387 = vadd.f32 0.0, %v2386
      %v2388 = vpop.f32.mrb[0].mxu0
      %v2389 = vpop.f32.mrb[0].mxu0
      %v2390 = vadd.f32 0.0, %v2389
      %v2391 = vpop.f32.mrb[0].mxu0
      %2392 = vmatprep.mubr.bf16.mxu0 0
      %2393 = vmatmul.mubr.bf16.gmra.mrb[0].mxu0 %v2309
      %v2394 = vpop.f32.mrb[0].mxu0
      %v2395 = vadd.f32 0.0, %v2394
      %v2396 = vpop.f32.mrb[0].mxu0
      %v2397 = vpop.f32.mrb[0].mxu0
      %v2398 = vadd.f32 0.0, %v2397
      %v2399 = vpop.f32.mrb[0].mxu0
      %2400 = vmatprep.mubr.bf16.mxu0 0
      %2401 = vmatmul.mubr.bf16.gmra.mrb[0].mxu0 %v2312
      %v2402 = vpop.f32.mrb[0].mxu0
      %v2403 = vadd.f32 0.0, %v2402
      %v2404 = vpop.f32.mrb[0].mxu0
      %v2405 = vpop.f32.mrb[0].mxu0
      %v2406 = vadd.f32 0.0, %v2405
      %v2407 = vpop.f32.mrb[0].mxu0
      %2408 = vmatprep.mubr.bf16.mxu0 0
      %2409 = vmatmul.mubr.bf16.gmra.mrb[0].mxu0 %v2315
      %v2410 = vpop.f32.mrb[0].mxu0
      %v2411 = vadd.f32 0.0, %v2410
      %v2412 = vpop.f32.mrb[0].mxu0
      %v2413 = vpop.f32.mrb[0].mxu0
      %v2414 = vadd.f32 0.0, %v2413
      %v2415 = vpop.f32.mrb[0].mxu0
      %2416 = vmatprep.mubr.bf16.mxu0 0
      %2417 = vmatmul.mubr.bf16.gmra.mrb[0].mxu0 %v2318
      %v2418 = vpop.f32.mrb[0].mxu0
      %v2419 = vadd.f32 0.0, %v2418
      %v2420 = vpop.f32.mrb[0].mxu0
      %v2421 = vpop.f32.mrb[0].mxu0
      %v2422 = vadd.f32 0.0, %v2421
      %v2423 = vpop.f32.mrb[0].mxu0
      %2424 = vmatprep.mubr.bf16.mxu0 0
      %2425 = vmatmul.mubr.bf16.gmra.mrb[0].mxu0 %v2321
      %v2426 = vpop.f32.mrb[0].mxu0
      %v2427 = vadd.f32 0.0, %v2426
      %v2428 = vpop.f32.mrb[0].mxu0
      %v2429 = vpop.f32.mrb[0].mxu0
      %v2430 = vadd.f32 0.0, %v2429
      %v2431 = vpop.f32.mrb[0].mxu0
      %2432 = vmatprep.mubr.bf16.mxu0 0
      %2433 = vmatmul.mubr.bf16.gmra.mrb[0].mxu0 %v2324
      %v2434 = vpop.f32.mrb[0].mxu0
      %v2435 = vadd.f32 0.0, %v2434
      %v2436 = vpop.f32.mrb[0].mxu0
      %v2437 = vpop.f32.mrb[0].mxu0
      %v2438 = vadd.f32 0.0, %v2437
      %v2439 = vpop.f32.mrb[0].mxu0
      %2440 = vmatprep.mubr.bf16.mxu0 0
      %2441 = vmatmul.mubr.bf16.gmra.mrb[0].mxu0 %v2327
      %v2442 = vpop.f32.mrb[0].mxu0
      %v2443 = vadd.f32 0.0, %v2442
      %v2444 = vpop.f32.mrb[0].mxu0
      %v2445 = vpop.f32.mrb[0].mxu0
      %v2446 = vadd.f32 0.0, %v2445
      %v2447 = vpop.f32.mrb[0].mxu0
      %2448 = vmatprep.mubr.bf16.mxu0 0
      %2449 = vmatmul.mubr.bf16.gmra.mrb[0].mxu0 %v2330
      %v2450 = vpop.f32.mrb[0].mxu0
      %v2451 = vadd.f32 0.0, %v2450
      %v2452 = vpop.f32.mrb[0].mxu0
      %v2453 = vpop.f32.mrb[0].mxu0
      %v2454 = vadd.f32 0.0, %v2453
      %v2455 = vpop.f32.mrb[0].mxu0
      %2456 = vmatprep.mubr.bf16.mxu0 0
      %2457 = vmatmul.mubr.bf16.gmra.mrb[0].mxu0 %v2333
      %v2458 = vpop.f32.mrb[0].mxu0
      %v2459 = vadd.f32 0.0, %v2458
      %v2460 = vpop.f32.mrb[0].mxu0
      %v2461 = vpop.f32.mrb[0].mxu0
      %v2462 = vadd.f32 0.0, %v2461
      %v2463 = vpop.f32.mrb[0].mxu0
      %2464 = vmatprep.mubr.bf16.mxu0 0
      %2465 = vmatmul.mubr.bf16.gmra.mrb[0].mxu0 %v2336
      %v2466 = vpop.f32.mrb[0].mxu0
      %v2467 = vadd.f32 0.0, %v2466
      %v2468 = vpop.f32.mrb[0].mxu0
      %v2469 = vpop.f32.mrb[0].mxu0
      %v2470 = vadd.f32 0.0, %v2469
      %v2471 = vpop.f32.mrb[0].mxu0
      %2472 = vmatprep.mubr.bf16.mxu0 0
      %2473 = vmatmul.mubr.bf16.gmra.mrb[0].mxu0 %v2339
      %v2474 = vpop.f32.mrb[0].mxu0
      %v2475 = vadd.f32 0.0, %v2474
      %v2476 = vpop.f32.mrb[0].mxu0
      %v2477 = vpop.f32.mrb[0].mxu0
      %v2478 = vadd.f32 0.0, %v2477
      %v2479 = vpop.f32.mrb[0].mxu0
      %2480 = vmatprep.mubr.bf16.mxu0 0
      %2481 = vmatmul.mubr.bf16.gmra.mrb[0].mxu0 %v2342
      %v2482 = vpop.f32.mrb[0].mxu0
      %v2483 = vadd.f32 0.0, %v2482
      %v2484 = vpop.f32.mrb[0].mxu0
      %v2485 = vpop.f32.mrb[0].mxu0
      %v2486 = vadd.f32 0.0, %v2485
      %v2487 = vpop.f32.mrb[0].mxu0
      %2488 = vdwg.mxu0
      %v2489 = vadd.f32 %v2199, %v2379
      %v2490 = vadd.f32 %v2200, %v2382
      %v2491 = vadd.f32 %v2201, %v2387
      %v2492 = vadd.f32 %v2202, %v2390
      %v2493 = vadd.f32 %v2203, %v2395
      %v2494 = vadd.f32 %v2204, %v2398
      %v2495 = vadd.f32 %v2205, %v2403
      %v2496 = vadd.f32 %v2206, %v2406
      %v2497 = vadd.f32 %v2207, %v2411
      %v2498 = vadd.f32 %v2208, %v2414
      %v2499 = vadd.f32 %v2209, %v2419
      %v2500 = vadd.f32 %v2210, %v2422
      %v2501 = vadd.f32 %v2211, %v2427
      %v2502 = vadd.f32 %v2212, %v2430
      %v2503 = vadd.f32 %v2213, %v2435
      %v2504 = vadd.f32 %v2214, %v2438
      %v2505 = vadd.f32 %v2215, %v2443
      %v2506 = vadd.f32 %v2216, %v2446
      %v2507 = vadd.f32 %v2217, %v2451
      %v2508 = vadd.f32 %v2218, %v2454
      %v2509 = vadd.f32 %v2219, %v2459
      %v2510 = vadd.f32 %v2220, %v2462
      %v2511 = vadd.f32 %v2221, %v2467
      %v2512 = vadd.f32 %v2222, %v2470
      %v2513 = vadd.f32 %v2223, %v2475
      %v2514 = vadd.f32 %v2224, %v2478
      %v2515 = vadd.f32 %v2225, %v2483
      %v2516 = vadd.f32 %v2226, %v2486
      %v2517 = vld [vmem:[%s246 + $0x22] sm:$0xff]
      %v2518 = vld [vmem:[%s246 + $0x2a] sm:$0xff]
      %v2519 = vld [vmem:[%s246 + $0x32] sm:$0xff]
      %v2520 = vld [vmem:[%s246 + $0x3a] sm:$0xff]
      %v2521 = vld [vmem:[%s246 + $0x42] sm:$0xff]
      %v2522 = vld [vmem:[%s246 + $0x4a] sm:$0xff]
      %v2523 = vld [vmem:[%s246 + $0x52] sm:$0xff]
      %v2524 = vld [vmem:[%s246 + $0x5a] sm:$0xff]
      %v2525 = vld [vmem:[%s246 + $0x62] sm:$0xff]
      %v2526 = vld [vmem:[%s246 + $0x6a] sm:$0xff]
      %v2527 = vld [vmem:[%s246 + $0x72] sm:$0xff]
      %v2528 = vld [vmem:[%s246 + $0x7a] sm:$0xff]
      %v2529 = vld [vmem:[%s246 + $0x82] sm:$0xff]
      %v2530 = vld [vmem:[%s246 + $0x8a] sm:$0xff]
      %v2531 = vld [vmem:[%s246 + $0x92] sm:$0xff]
      %v2532 = vld [vmem:[%s246 + $0x9a] sm:$0xff]
      %v2533 = vld [vmem:[%s246 + $0xa2] sm:$0xff]
      %v2534 = vld [vmem:[%s246 + $0xaa] sm:$0xff]
      %v2535 = vld [vmem:[%s246 + $0xb2] sm:$0xff]
      %v2536 = vld [vmem:[%s246 + $0xba] sm:$0xff]
      %v2537 = vld [vmem:[%s246 + $0xc2] sm:$0xff]
      %v2538 = vld [vmem:[%s246 + $0xca] sm:$0xff]
      %v2539 = vld [vmem:[%s246 + $0xd2] sm:$0xff]
      %v2540 = vld [vmem:[%s246 + $0xda] sm:$0xff]
      %v2541 = vld [vmem:[%s246 + $0xe2] sm:$0xff]
      %v2542 = vld [vmem:[%s246 + $0xea] sm:$0xff]
      %v2543 = vld [vmem:[%s246 + $0xf2] sm:$0xff]
      %v2544 = vld [vmem:[%s246 + $0xfa] sm:$0xff]
      %v2545 = vpack.c.bf16 %v2518, %v2517
      %v2546 = vpack.c.bf16 %v2520, %v2519
      %v2547 = vpack.c.bf16 %v2522, %v2521
      %v2548 = vpack.c.bf16 %v2524, %v2523
      %v2549 = vpack.c.bf16 %v2526, %v2525
      %v2550 = vpack.c.bf16 %v2528, %v2527
      %v2551 = vpack.c.bf16 %v2530, %v2529
      %v2552 = vpack.c.bf16 %v2532, %v2531
      %v2553 = vpack.c.bf16 %v2534, %v2533
      %v2554 = vpack.c.bf16 %v2536, %v2535
      %v2555 = vpack.c.bf16 %v2538, %v2537
      %v2556 = vpack.c.bf16 %v2540, %v2539
      %v2557 = vpack.c.bf16 %v2542, %v2541
      %v2558 = vpack.c.bf16 %v2544, %v2543
      %s2559 = scalar_lea.vmem %s1, 256
      %v2560 = vld [vmem:[%s2559] sm:$0xf]
      %v2561 = vld [vmem:[%s2559 + $0x4] sm:$0xf]
      %v2562 = vld [vmem:[%s2559 + $0x8] sm:$0xf]
      %v2563 = vld [vmem:[%s2559 + $0xc] sm:$0xf]
      %v2564 = vld [vmem:[%s2559 + $0x10] sm:$0xf]
      %v2565 = vld [vmem:[%s2559 + $0x14] sm:$0xf]
      %v2566 = vld [vmem:[%s2559 + $0x18] sm:$0xf]
      %v2567 = vld [vmem:[%s2559 + $0x1c] sm:$0xf]
      %v2576 = vunpack.c.l.b16 %v2560
      %v2577 = vunpack.c.l.b16 %v2561
      %v2578 = vunpack.c.l.b16 %v2562
      %v2579 = vunpack.c.l.b16 %v2563
      %v2580 = vunpack.c.l.b16 %v2564
      %v2581 = vunpack.c.l.b16 %v2565
      %v2582 = vunpack.c.l.b16 %v2566
      %v2583 = vunpack.c.l.b16 %v2567
      %v2584 = vpack.c.b16 %v2577, %v2576
      %v2585 = vpack.c.b16 %v2579, %v2578
      %v2586 = vpack.c.b16 %v2581, %v2580
      %v2587 = vpack.c.b16 %v2583, %v2582
      %v2593 = vsel %vm378, %v2545, 0
      %v2596 = vsel %vm378, %v2546, 0
      %v2599 = vsel %vm378, %v2547, 0
      %v2602 = vsel %vm378, %v2548, 0
      %v2605 = vsel %vm378, %v2549, 0
      %v2608 = vsel %vm378, %v2550, 0
      %v2611 = vsel %vm378, %v2551, 0
      %v2614 = vsel %vm378, %v2552, 0
      %v2617 = vsel %vm378, %v2553, 0
      %v2620 = vsel %vm378, %v2554, 0
      %v2623 = vsel %vm378, %v2555, 0
      %v2626 = vsel %vm378, %v2556, 0
      %v2629 = vsel %vm378, %v2557, 0
      %v2632 = vsel %vm378, %v2558, 0
      %2634 = vmatprep.subr.bf16.mxu0 0
      %2635 = vmatpush1.bf16.msra.mxu0 %v2584
      %2636 = vmatprep.subr.bf16.mxu0 0
      %2637 = vmatpush1.bf16.msra.mxu0 %v2585
      %2638 = vmatprep.subr.bf16.mxu0 0
      %2639 = vmatpush1.bf16.msra.mxu0 %v2586
      %2640 = vmatprep.subr.bf16.mxu0 0
      %2641 = vmatpush1.bf16.msra.mxu0 %v2587
      %2642 = vmatprep.subr.bf16.mxu0 0
      %2643 = vmatpush1.bf16.msra.mxu0 0
      %2644 = vmatprep.subr.bf16.mxu0 0
      %2645 = vmatpush1.bf16.msra.mxu0 0
      %2646 = vmatprep.subr.bf16.mxu0 0
      %2647 = vmatpush1.bf16.msra.mxu0 0
      %2648 = vmatprep.subr.bf16.mxu0 0
      %2649 = vmatpush1.bf16.msra.mxu0 0
      %2650 = vmatprep.subr.bf16.mxu0 0
      %2651 = vmatpush1.bf16.msra.mxu0 0
      %2652 = vmatprep.subr.bf16.mxu0 0
      %2653 = vmatpush1.bf16.msra.mxu0 0
      %2654 = vmatprep.subr.bf16.mxu0 0
      %2655 = vmatpush1.bf16.msra.mxu0 0
      %2656 = vmatprep.subr.bf16.mxu0 0
      %2657 = vmatpush1.bf16.msra.mxu0 0
      %2658 = vmatprep.subr.bf16.mxu0 0
      %2659 = vmatpush1.bf16.msra.mxu0 0
      %2660 = vmatprep.subr.bf16.mxu0 0
      %2661 = vmatpush1.bf16.msra.mxu0 0
      %2662 = vmatprep.subr.bf16.mxu0 0
      %2663 = vmatpush1.bf16.msra.mxu0 0
      %2664 = vmatprep.subr.bf16.mxu0 0
      %2665 = vmatpush1.bf16.msra.mxu0 0
      %2666 = vmatprep.mubr.bf16.mxu0 0
      %2667 = vmatmul.mubr.bf16.gmra.mrb[0].mxu0 %v2593
      %v2668 = vpop.f32.mrb[0].mxu0
      %v2669 = vadd.f32 0.0, %v2668
      %v2670 = vpop.f32.mrb[0].mxu0
      %v2671 = vpop.f32.mrb[0].mxu0
      %v2672 = vadd.f32 0.0, %v2671
      %v2673 = vpop.f32.mrb[0].mxu0
      %2674 = vmatprep.mubr.bf16.mxu0 0
      %2675 = vmatmul.mubr.bf16.gmra.mrb[0].mxu0 %v2596
      %v2676 = vpop.f32.mrb[0].mxu0
      %v2677 = vadd.f32 0.0, %v2676
      %v2678 = vpop.f32.mrb[0].mxu0
      %v2679 = vpop.f32.mrb[0].mxu0
      %v2680 = vadd.f32 0.0, %v2679
      %v2681 = vpop.f32.mrb[0].mxu0
      %2682 = vmatprep.mubr.bf16.mxu0 0
      %2683 = vmatmul.mubr.bf16.gmra.mrb[0].mxu0 %v2599
      %v2684 = vpop.f32.mrb[0].mxu0
      %v2685 = vadd.f32 0.0, %v2684
      %v2686 = vpop.f32.mrb[0].mxu0
      %v2687 = vpop.f32.mrb[0].mxu0
      %v2688 = vadd.f32 0.0, %v2687
      %v2689 = vpop.f32.mrb[0].mxu0
      %2690 = vmatprep.mubr.bf16.mxu0 0
      %2691 = vmatmul.mubr.bf16.gmra.mrb[0].mxu0 %v2602
      %v2692 = vpop.f32.mrb[0].mxu0
      %v2693 = vadd.f32 0.0, %v2692
      %v2694 = vpop.f32.mrb[0].mxu0
      %v2695 = vpop.f32.mrb[0].mxu0
      %v2696 = vadd.f32 0.0, %v2695
      %v2697 = vpop.f32.mrb[0].mxu0
      %2698 = vmatprep.mubr.bf16.mxu0 0
      %2699 = vmatmul.mubr.bf16.gmra.mrb[0].mxu0 %v2605
      %v2700 = vpop.f32.mrb[0].mxu0
      %v2701 = vadd.f32 0.0, %v2700
      %v2702 = vpop.f32.mrb[0].mxu0
      %v2703 = vpop.f32.mrb[0].mxu0
      %v2704 = vadd.f32 0.0, %v2703
      %v2705 = vpop.f32.mrb[0].mxu0
      %2706 = vmatprep.mubr.bf16.mxu0 0
      %2707 = vmatmul.mubr.bf16.gmra.mrb[0].mxu0 %v2608
      %v2708 = vpop.f32.mrb[0].mxu0
      %v2709 = vadd.f32 0.0, %v2708
      %v2710 = vpop.f32.mrb[0].mxu0
      %v2711 = vpop.f32.mrb[0].mxu0
      %v2712 = vadd.f32 0.0, %v2711
      %v2713 = vpop.f32.mrb[0].mxu0
      %2714 = vmatprep.mubr.bf16.mxu0 0
      %2715 = vmatmul.mubr.bf16.gmra.mrb[0].mxu0 %v2611
      %v2716 = vpop.f32.mrb[0].mxu0
      %v2717 = vadd.f32 0.0, %v2716
      %v2718 = vpop.f32.mrb[0].mxu0
      %v2719 = vpop.f32.mrb[0].mxu0
      %v2720 = vadd.f32 0.0, %v2719
      %v2721 = vpop.f32.mrb[0].mxu0
      %2722 = vmatprep.mubr.bf16.mxu0 0
      %2723 = vmatmul.mubr.bf16.gmra.mrb[0].mxu0 %v2614
      %v2724 = vpop.f32.mrb[0].mxu0
      %v2725 = vadd.f32 0.0, %v2724
      %v2726 = vpop.f32.mrb[0].mxu0
      %v2727 = vpop.f32.mrb[0].mxu0
      %v2728 = vadd.f32 0.0, %v2727
      %v2729 = vpop.f32.mrb[0].mxu0
      %2730 = vmatprep.mubr.bf16.mxu0 0
      %2731 = vmatmul.mubr.bf16.gmra.mrb[0].mxu0 %v2617
      %v2732 = vpop.f32.mrb[0].mxu0
      %v2733 = vadd.f32 0.0, %v2732
      %v2734 = vpop.f32.mrb[0].mxu0
      %v2735 = vpop.f32.mrb[0].mxu0
      %v2736 = vadd.f32 0.0, %v2735
      %v2737 = vpop.f32.mrb[0].mxu0
      %2738 = vmatprep.mubr.bf16.mxu0 0
      %2739 = vmatmul.mubr.bf16.gmra.mrb[0].mxu0 %v2620
      %v2740 = vpop.f32.mrb[0].mxu0
      %v2741 = vadd.f32 0.0, %v2740
      %v2742 = vpop.f32.mrb[0].mxu0
      %v2743 = vpop.f32.mrb[0].mxu0
      %v2744 = vadd.f32 0.0, %v2743
      %v2745 = vpop.f32.mrb[0].mxu0
      %2746 = vmatprep.mubr.bf16.mxu0 0
      %2747 = vmatmul.mubr.bf16.gmra.mrb[0].mxu0 %v2623
      %v2748 = vpop.f32.mrb[0].mxu0
      %v2749 = vadd.f32 0.0, %v2748
      %v2750 = vpop.f32.mrb[0].mxu0
      %v2751 = vpop.f32.mrb[0].mxu0
      %v2752 = vadd.f32 0.0, %v2751
      %v2753 = vpop.f32.mrb[0].mxu0
      %2754 = vmatprep.mubr.bf16.mxu0 0
      %2755 = vmatmul.mubr.bf16.gmra.mrb[0].mxu0 %v2626
      %v2756 = vpop.f32.mrb[0].mxu0
      %v2757 = vadd.f32 0.0, %v2756
      %v2758 = vpop.f32.mrb[0].mxu0
      %v2759 = vpop.f32.mrb[0].mxu0
      %v2760 = vadd.f32 0.0, %v2759
      %v2761 = vpop.f32.mrb[0].mxu0
      %2762 = vmatprep.mubr.bf16.mxu0 0
      %2763 = vmatmul.mubr.bf16.gmra.mrb[0].mxu0 %v2629
      %v2764 = vpop.f32.mrb[0].mxu0
      %v2765 = vadd.f32 0.0, %v2764
      %v2766 = vpop.f32.mrb[0].mxu0
      %v2767 = vpop.f32.mrb[0].mxu0
      %v2768 = vadd.f32 0.0, %v2767
      %v2769 = vpop.f32.mrb[0].mxu0
      %2770 = vmatprep.mubr.bf16.mxu0 0
      %2771 = vmatmul.mubr.bf16.gmra.mrb[0].mxu0 %v2632
      %v2772 = vpop.f32.mrb[0].mxu0
      %v2773 = vadd.f32 0.0, %v2772
      %v2774 = vpop.f32.mrb[0].mxu0
      %v2775 = vpop.f32.mrb[0].mxu0
      %v2776 = vadd.f32 0.0, %v2775
      %v2777 = vpop.f32.mrb[0].mxu0
      %2778 = vdwg.mxu0
      %v2779 = vadd.f32 %v2489, %v2669
      %v2780 = vadd.f32 %v2490, %v2672
      %v2781 = vadd.f32 %v2491, %v2677
      %v2782 = vadd.f32 %v2492, %v2680
      %v2783 = vadd.f32 %v2493, %v2685
      %v2784 = vadd.f32 %v2494, %v2688
      %v2785 = vadd.f32 %v2495, %v2693
      %v2786 = vadd.f32 %v2496, %v2696
      %v2787 = vadd.f32 %v2497, %v2701
      %v2788 = vadd.f32 %v2498, %v2704
      %v2789 = vadd.f32 %v2499, %v2709
      %v2790 = vadd.f32 %v2500, %v2712
      %v2791 = vadd.f32 %v2501, %v2717
      %v2792 = vadd.f32 %v2502, %v2720
      %v2793 = vadd.f32 %v2503, %v2725
      %v2794 = vadd.f32 %v2504, %v2728
      %v2795 = vadd.f32 %v2505, %v2733
      %v2796 = vadd.f32 %v2506, %v2736
      %v2797 = vadd.f32 %v2507, %v2741
      %v2798 = vadd.f32 %v2508, %v2744
      %v2799 = vadd.f32 %v2509, %v2749
      %v2800 = vadd.f32 %v2510, %v2752
      %v2801 = vadd.f32 %v2511, %v2757
      %v2802 = vadd.f32 %v2512, %v2760
      %v2803 = vadd.f32 %v2513, %v2765
      %v2804 = vadd.f32 %v2514, %v2768
      %v2805 = vadd.f32 %v2515, %v2773
      %v2806 = vadd.f32 %v2516, %v2776
      %v2807 = vld [vmem:[%s3] sm:$0x1]
      %v2808 = vlaneseq
      %v2809 = vshrl.u32 %v2808, 7
      %v2810 = vsub.s32 0, %v2809
      %v2811 = vrot.slane %v2807, %v2810
      %v2812 = vadd.f32 %v2779, %v2811
      %v2813 = vadd.f32 %v2780, %v2811
      %v2814 = vadd.f32 %v2781, %v2811
      %v2815 = vadd.f32 %v2782, %v2811
      %v2816 = vadd.f32 %v2783, %v2811
      %v2817 = vadd.f32 %v2784, %v2811
      %v2818 = vadd.f32 %v2785, %v2811
      %v2819 = vadd.f32 %v2786, %v2811
      %v2820 = vadd.f32 %v2787, %v2811
      %v2821 = vadd.f32 %v2788, %v2811
      %v2822 = vadd.f32 %v2789, %v2811
      %v2823 = vadd.f32 %v2790, %v2811
      %v2824 = vadd.f32 %v2791, %v2811
      %v2825 = vadd.f32 %v2792, %v2811
      %v2826 = vadd.f32 %v2793, %v2811
      %v2827 = vadd.f32 %v2794, %v2811
      %v2828 = vadd.f32 %v2795, %v2811
      %v2829 = vadd.f32 %v2796, %v2811
      %v2830 = vadd.f32 %v2797, %v2811
      %v2831 = vadd.f32 %v2798, %v2811
      %v2832 = vadd.f32 %v2799, %v2811
      %v2833 = vadd.f32 %v2800, %v2811
      %v2834 = vadd.f32 %v2801, %v2811
      %v2835 = vadd.f32 %v2802, %v2811
      %v2836 = vadd.f32 %v2803, %v2811
      %v2837 = vadd.f32 %v2804, %v2811
      %v2838 = vadd.f32 %v2805, %v2811
      %v2839 = vadd.f32 %v2806, %v2811
      %v2840 = vld [vmem:[%s4] sm:$0xff]
      %v2841 = vld [vmem:[%s4 + $0x8] sm:$0xff]
      %v2842 = vld [vmem:[%s4 + $0x10] sm:$0xff]
      %v2843 = vld [vmem:[%s4 + $0x18] sm:$0xff]
      %v2844 = vld [vmem:[%s4 + $0x20] sm:$0xff]
      %v2845 = vld [vmem:[%s4 + $0x28] sm:$0xff]
      %v2846 = vld [vmem:[%s4 + $0x30] sm:$0xff]
      %v2847 = vld [vmem:[%s4 + $0x38] sm:$0xff]
      %v2848 = vld [vmem:[%s4 + $0x40] sm:$0xff]
      %v2849 = vld [vmem:[%s4 + $0x48] sm:$0xff]
      %v2850 = vld [vmem:[%s4 + $0x50] sm:$0xff]
      %v2851 = vld [vmem:[%s4 + $0x58] sm:$0xff]
      %v2852 = vld [vmem:[%s4 + $0x60] sm:$0xff]
      %v2853 = vld [vmem:[%s4 + $0x68] sm:$0xff]
      %v2854 = vld [vmem:[%s4 + $0x70] sm:$0xff]
      %v2855 = vld [vmem:[%s4 + $0x78] sm:$0xff]
      %v2856 = vld [vmem:[%s4 + $0x80] sm:$0xff]
      %v2857 = vld [vmem:[%s4 + $0x88] sm:$0xff]
      %v2858 = vld [vmem:[%s4 + $0x90] sm:$0xff]
      %v2859 = vld [vmem:[%s4 + $0x98] sm:$0xff]
      %v2860 = vld [vmem:[%s4 + $0xa0] sm:$0xff]
      %v2861 = vld [vmem:[%s4 + $0xa8] sm:$0xff]
      %v2862 = vld [vmem:[%s4 + $0xb0] sm:$0xff]
      %v2863 = vld [vmem:[%s4 + $0xb8] sm:$0xff]
      %v2864 = vld [vmem:[%s4 + $0xc0] sm:$0xff]
      %v2865 = vld [vmem:[%s4 + $0xc8] sm:$0xff]
      %v2866 = vld [vmem:[%s4 + $0xd0] sm:$0xff]
      %v2867 = vld [vmem:[%s4 + $0xd8] sm:$0xff]
      %2869 = vset.pattern.permute.xlu0 0
      %2870 = vperm.xlu0 %2869, %v2840
      %v2871 = vpop.permute.xlu0 %2870
      %2874 = vset.pattern.permute.xlu0 0
      %2875 = vperm.xlu0 %2874, %v2841
      %v2876 = vpop.permute.xlu0 %2875
      %2879 = vset.pattern.permute.xlu0 0
      %2880 = vperm.xlu0 %2879, %v2842
      %v2881 = vpop.permute.xlu0 %2880
      %2884 = vset.pattern.permute.xlu0 0
      %2885 = vperm.xlu0 %2884, %v2843
      %v2886 = vpop.permute.xlu0 %2885
      %2889 = vset.pattern.permute.xlu0 0
      %2890 = vperm.xlu0 %2889, %v2844
      %v2891 = vpop.permute.xlu0 %2890
      %2894 = vset.pattern.permute.xlu0 0
      %2895 = vperm.xlu0 %2894, %v2845
      %v2896 = vpop.permute.xlu0 %2895
      %2899 = vset.pattern.permute.xlu0 0
      %2900 = vperm.xlu0 %2899, %v2846
      %v2901 = vpop.permute.xlu0 %2900
      %2904 = vset.pattern.permute.xlu0 0
      %2905 = vperm.xlu0 %2904, %v2847
      %v2906 = vpop.permute.xlu0 %2905
      %2909 = vset.pattern.permute.xlu0 0
      %2910 = vperm.xlu0 %2909, %v2848
      %v2911 = vpop.permute.xlu0 %2910
      %2914 = vset.pattern.permute.xlu0 0
      %2915 = vperm.xlu0 %2914, %v2849
      %v2916 = vpop.permute.xlu0 %2915
      %2919 = vset.pattern.permute.xlu0 0
      %2920 = vperm.xlu0 %2919, %v2850
      %v2921 = vpop.permute.xlu0 %2920
      %2924 = vset.pattern.permute.xlu0 0
      %2925 = vperm.xlu0 %2924, %v2851
      %v2926 = vpop.permute.xlu0 %2925
      %2929 = vset.pattern.permute.xlu0 0
      %2930 = vperm.xlu0 %2929, %v2852
      %v2931 = vpop.permute.xlu0 %2930
      %2934 = vset.pattern.permute.xlu0 0
      %2935 = vperm.xlu0 %2934, %v2853
      %v2936 = vpop.permute.xlu0 %2935
      %2939 = vset.pattern.permute.xlu0 0
      %2940 = vperm.xlu0 %2939, %v2854
      %v2941 = vpop.permute.xlu0 %2940
      %2944 = vset.pattern.permute.xlu0 0
      %2945 = vperm.xlu0 %2944, %v2855
      %v2946 = vpop.permute.xlu0 %2945
      %2949 = vset.pattern.permute.xlu0 0
      %2950 = vperm.xlu0 %2949, %v2856
      %v2951 = vpop.permute.xlu0 %2950
      %2954 = vset.pattern.permute.xlu0 0
      %2955 = vperm.xlu0 %2954, %v2857
      %v2956 = vpop.permute.xlu0 %2955
      %2959 = vset.pattern.permute.xlu0 0
      %2960 = vperm.xlu0 %2959, %v2858
      %v2961 = vpop.permute.xlu0 %2960
      %2964 = vset.pattern.permute.xlu0 0
      %2965 = vperm.xlu0 %2964, %v2859
      %v2966 = vpop.permute.xlu0 %2965
      %2969 = vset.pattern.permute.xlu0 0
      %2970 = vperm.xlu0 %2969, %v2860
      %v2971 = vpop.permute.xlu0 %2970
      %2974 = vset.pattern.permute.xlu0 0
      %2975 = vperm.xlu0 %2974, %v2861
      %v2976 = vpop.permute.xlu0 %2975
      %2979 = vset.pattern.permute.xlu0 0
      %2980 = vperm.xlu0 %2979, %v2862
      %v2981 = vpop.permute.xlu0 %2980
      %2984 = vset.pattern.permute.xlu0 0
      %2985 = vperm.xlu0 %2984, %v2863
      %v2986 = vpop.permute.xlu0 %2985
      %2989 = vset.pattern.permute.xlu0 0
      %2990 = vperm.xlu0 %2989, %v2864
      %v2991 = vpop.permute.xlu0 %2990
      %2994 = vset.pattern.permute.xlu0 0
      %2995 = vperm.xlu0 %2994, %v2865
      %v2996 = vpop.permute.xlu0 %2995
      %2999 = vset.pattern.permute.xlu0 0
      %3000 = vperm.xlu0 %2999, %v2866
      %v3001 = vpop.permute.xlu0 %3000
      %3004 = vset.pattern.permute.xlu0 0
      %3005 = vperm.xlu0 %3004, %v2867
      %v3006 = vpop.permute.xlu0 %3005
      %v3008 = vmul.f32 %v2812, %v2871
      %v3009 = vmul.f32 %v2813, %v2876
      %v3010 = vmul.f32 %v2814, %v2881
      %v3011 = vmul.f32 %v2815, %v2886
      %v3012 = vmul.f32 %v2816, %v2891
      %v3013 = vmul.f32 %v2817, %v2896
      %v3014 = vmul.f32 %v2818, %v2901
      %v3015 = vmul.f32 %v2819, %v2906
      %v3016 = vmul.f32 %v2820, %v2911
      %v3017 = vmul.f32 %v2821, %v2916
      %v3018 = vmul.f32 %v2822, %v2921
      %v3019 = vmul.f32 %v2823, %v2926
      %v3020 = vmul.f32 %v2824, %v2931
      %v3021 = vmul.f32 %v2825, %v2936
      %v3022 = vmul.f32 %v2826, %v2941
      %v3023 = vmul.f32 %v2827, %v2946
      %v3024 = vmul.f32 %v2828, %v2951
      %v3025 = vmul.f32 %v2829, %v2956
      %v3026 = vmul.f32 %v2830, %v2961
      %v3027 = vmul.f32 %v2831, %v2966
      %v3028 = vmul.f32 %v2832, %v2971
      %v3029 = vmul.f32 %v2833, %v2976
      %v3030 = vmul.f32 %v2834, %v2981
      %v3031 = vmul.f32 %v2835, %v2986
      %v3032 = vmul.f32 %v2836, %v2991
      %v3033 = vmul.f32 %v2837, %v2996
      %v3034 = vmul.f32 %v2838, %v3001
      %v3035 = vmul.f32 %v2839, %v3006
      %v3036 = vsel %vm378, %v3008, 0.0
      %v3037 = vsel %vm378, %v3009, 0.0
      %v3038 = vadd.f32 %v3036, %v3037
      %v3039 = vsel %vm378, %v3010, 0.0
      %v3040 = vadd.f32 %v3038, %v3039
      %v3041 = vsel %vm378, %v3011, 0.0
      %v3042 = vadd.f32 %v3040, %v3041
      %v3043 = vsel %vm378, %v3012, 0.0
      %v3044 = vadd.f32 %v3042, %v3043
      %v3045 = vsel %vm378, %v3013, 0.0
      %v3046 = vadd.f32 %v3044, %v3045
      %v3047 = vsel %vm378, %v3014, 0.0
      %v3048 = vadd.f32 %v3046, %v3047
      %v3049 = vsel %vm378, %v3015, 0.0
      %v3050 = vadd.f32 %v3048, %v3049
      %v3051 = vsel %vm378, %v3016, 0.0
      %v3052 = vadd.f32 %v3050, %v3051
      %v3053 = vsel %vm378, %v3017, 0.0
      %v3054 = vadd.f32 %v3052, %v3053
      %v3055 = vsel %vm378, %v3018, 0.0
      %v3056 = vadd.f32 %v3054, %v3055
      %v3057 = vsel %vm378, %v3019, 0.0
      %v3058 = vadd.f32 %v3056, %v3057
      %v3059 = vsel %vm378, %v3020, 0.0
      %v3060 = vadd.f32 %v3058, %v3059
      %v3061 = vsel %vm378, %v3021, 0.0
      %v3062 = vadd.f32 %v3060, %v3061
      %v3063 = vsel %vm378, %v3022, 0.0
      %v3064 = vadd.f32 %v3062, %v3063
      %v3065 = vsel %vm378, %v3023, 0.0
      %v3066 = vadd.f32 %v3064, %v3065
      %v3067 = vsel %vm378, %v3024, 0.0
      %v3068 = vadd.f32 %v3066, %v3067
      %v3069 = vsel %vm378, %v3025, 0.0
      %v3070 = vadd.f32 %v3068, %v3069
      %v3071 = vsel %vm378, %v3026, 0.0
      %v3072 = vadd.f32 %v3070, %v3071
      %v3073 = vsel %vm378, %v3027, 0.0
      %v3074 = vadd.f32 %v3072, %v3073
      %v3075 = vsel %vm378, %v3028, 0.0
      %v3076 = vadd.f32 %v3074, %v3075
      %v3077 = vsel %vm378, %v3029, 0.0
      %v3078 = vadd.f32 %v3076, %v3077
      %v3079 = vsel %vm378, %v3030, 0.0
      %v3080 = vadd.f32 %v3078, %v3079
      %v3081 = vsel %vm378, %v3031, 0.0
      %v3082 = vadd.f32 %v3080, %v3081
      %v3083 = vsel %vm378, %v3032, 0.0
      %v3084 = vadd.f32 %v3082, %v3083
      %v3085 = vsel %vm378, %v3033, 0.0
      %v3086 = vadd.f32 %v3084, %v3085
      %v3087 = vsel %vm378, %v3034, 0.0
      %v3088 = vadd.f32 %v3086, %v3087
      %v3089 = vsel %vm378, %v3035, 0.0
      %v3090 = vadd.f32 %v3088, %v3089
      %v3091 = vrot.slane %v3090, 4
      %v3092 = vadd.f32 %v3090, %v3091
      %v3093 = vrot.slane %v3092, 2
      %v3094 = vadd.f32 %v3092, %v3093
      %v3095 = vrot.slane %v3094, 1
      %v3096 = vadd.f32 %v3094, %v3095
      %v3097 = vmul.f32 %v3096, 0.0051020407
      %v3098 = vsub.f32 %v2812, %v3097
      %v3099 = vsub.f32 %v2813, %v3097
      %v3100 = vsub.f32 %v2814, %v3097
      %v3101 = vsub.f32 %v2815, %v3097
      %v3102 = vsub.f32 %v2816, %v3097
      %v3103 = vsub.f32 %v2817, %v3097
      %v3104 = vsub.f32 %v2818, %v3097
      %v3105 = vsub.f32 %v2819, %v3097
      %v3106 = vsub.f32 %v2820, %v3097
      %v3107 = vsub.f32 %v2821, %v3097
      %v3108 = vsub.f32 %v2822, %v3097
      %v3109 = vsub.f32 %v2823, %v3097
      %v3110 = vsub.f32 %v2824, %v3097
      %v3111 = vsub.f32 %v2825, %v3097
      %v3112 = vsub.f32 %v2826, %v3097
      %v3113 = vsub.f32 %v2827, %v3097
      %v3114 = vsub.f32 %v2828, %v3097
      %v3115 = vsub.f32 %v2829, %v3097
      %v3116 = vsub.f32 %v2830, %v3097
      %v3117 = vsub.f32 %v2831, %v3097
      %v3118 = vsub.f32 %v2832, %v3097
      %v3119 = vsub.f32 %v2833, %v3097
      %v3120 = vsub.f32 %v2834, %v3097
      %v3121 = vsub.f32 %v2835, %v3097
      %v3122 = vsub.f32 %v2836, %v3097
      %v3123 = vsub.f32 %v2837, %v3097
      %v3124 = vsub.f32 %v2838, %v3097
      %v3125 = vsub.f32 %v2839, %v3097
      %v3126 = vmul.f32 %v3098, %v3098
      %v3127 = vmul.f32 %v3099, %v3099
      %v3128 = vmul.f32 %v3100, %v3100
      %v3129 = vmul.f32 %v3101, %v3101
      %v3130 = vmul.f32 %v3102, %v3102
      %v3131 = vmul.f32 %v3103, %v3103
      %v3132 = vmul.f32 %v3104, %v3104
      %v3133 = vmul.f32 %v3105, %v3105
      %v3134 = vmul.f32 %v3106, %v3106
      %v3135 = vmul.f32 %v3107, %v3107
      %v3136 = vmul.f32 %v3108, %v3108
      %v3137 = vmul.f32 %v3109, %v3109
      %v3138 = vmul.f32 %v3110, %v3110
      %v3139 = vmul.f32 %v3111, %v3111
      %v3140 = vmul.f32 %v3112, %v3112
      %v3141 = vmul.f32 %v3113, %v3113
      %v3142 = vmul.f32 %v3114, %v3114
      %v3143 = vmul.f32 %v3115, %v3115
      %v3144 = vmul.f32 %v3116, %v3116
      %v3145 = vmul.f32 %v3117, %v3117
      %v3146 = vmul.f32 %v3118, %v3118
      %v3147 = vmul.f32 %v3119, %v3119
      %v3148 = vmul.f32 %v3120, %v3120
      %v3149 = vmul.f32 %v3121, %v3121
      %v3150 = vmul.f32 %v3122, %v3122
      %v3151 = vmul.f32 %v3123, %v3123
      %v3152 = vmul.f32 %v3124, %v3124
      %v3153 = vmul.f32 %v3125, %v3125
      %v3154 = vmul.f32 %v3126, %v2871
      %v3155 = vmul.f32 %v3127, %v2876
      %v3156 = vmul.f32 %v3128, %v2881
      %v3157 = vmul.f32 %v3129, %v2886
      %v3158 = vmul.f32 %v3130, %v2891
      %v3159 = vmul.f32 %v3131, %v2896
      %v3160 = vmul.f32 %v3132, %v2901
      %v3161 = vmul.f32 %v3133, %v2906
      %v3162 = vmul.f32 %v3134, %v2911
      %v3163 = vmul.f32 %v3135, %v2916
      %v3164 = vmul.f32 %v3136, %v2921
      %v3165 = vmul.f32 %v3137, %v2926
      %v3166 = vmul.f32 %v3138, %v2931
      %v3167 = vmul.f32 %v3139, %v2936
      %v3168 = vmul.f32 %v3140, %v2941
      %v3169 = vmul.f32 %v3141, %v2946
      %v3170 = vmul.f32 %v3142, %v2951
      %v3171 = vmul.f32 %v3143, %v2956
      %v3172 = vmul.f32 %v3144, %v2961
      %v3173 = vmul.f32 %v3145, %v2966
      %v3174 = vmul.f32 %v3146, %v2971
      %v3175 = vmul.f32 %v3147, %v2976
      %v3176 = vmul.f32 %v3148, %v2981
      %v3177 = vmul.f32 %v3149, %v2986
      %v3178 = vmul.f32 %v3150, %v2991
      %v3179 = vmul.f32 %v3151, %v2996
      %v3180 = vmul.f32 %v3152, %v3001
      %v3181 = vmul.f32 %v3153, %v3006
      %v3182 = vsel %vm378, %v3154, 0.0
      %v3183 = vsel %vm378, %v3155, 0.0
      %v3184 = vadd.f32 %v3182, %v3183
      %v3185 = vsel %vm378, %v3156, 0.0
      %v3186 = vadd.f32 %v3184, %v3185
      %v3187 = vsel %vm378, %v3157, 0.0
      %v3188 = vadd.f32 %v3186, %v3187
      %v3189 = vsel %vm378, %v3158, 0.0
      %v3190 = vadd.f32 %v3188, %v3189
      %v3191 = vsel %vm378, %v3159, 0.0
      %v3192 = vadd.f32 %v3190, %v3191
      %v3193 = vsel %vm378, %v3160, 0.0
      %v3194 = vadd.f32 %v3192, %v3193
      %v3195 = vsel %vm378, %v3161, 0.0
      %v3196 = vadd.f32 %v3194, %v3195
      %v3197 = vsel %vm378, %v3162, 0.0
      %v3198 = vadd.f32 %v3196, %v3197
      %v3199 = vsel %vm378, %v3163, 0.0
      %v3200 = vadd.f32 %v3198, %v3199
      %v3201 = vsel %vm378, %v3164, 0.0
      %v3202 = vadd.f32 %v3200, %v3201
      %v3203 = vsel %vm378, %v3165, 0.0
      %v3204 = vadd.f32 %v3202, %v3203
      %v3205 = vsel %vm378, %v3166, 0.0
      %v3206 = vadd.f32 %v3204, %v3205
      %v3207 = vsel %vm378, %v3167, 0.0
      %v3208 = vadd.f32 %v3206, %v3207
      %v3209 = vsel %vm378, %v3168, 0.0
      %v3210 = vadd.f32 %v3208, %v3209
      %v3211 = vsel %vm378, %v3169, 0.0
      %v3212 = vadd.f32 %v3210, %v3211
      %v3213 = vsel %vm378, %v3170, 0.0
      %v3214 = vadd.f32 %v3212, %v3213
      %v3215 = vsel %vm378, %v3171, 0.0
      %v3216 = vadd.f32 %v3214, %v3215
      %v3217 = vsel %vm378, %v3172, 0.0
      %v3218 = vadd.f32 %v3216, %v3217
      %v3219 = vsel %vm378, %v3173, 0.0
      %v3220 = vadd.f32 %v3218, %v3219
      %v3221 = vsel %vm378, %v3174, 0.0
      %v3222 = vadd.f32 %v3220, %v3221
      %v3223 = vsel %vm378, %v3175, 0.0
      %v3224 = vadd.f32 %v3222, %v3223
      %v3225 = vsel %vm378, %v3176, 0.0
      %v3226 = vadd.f32 %v3224, %v3225
      %v3227 = vsel %vm378, %v3177, 0.0
      %v3228 = vadd.f32 %v3226, %v3227
      %v3229 = vsel %vm378, %v3178, 0.0
      %v3230 = vadd.f32 %v3228, %v3229
      %v3231 = vsel %vm378, %v3179, 0.0
      %v3232 = vadd.f32 %v3230, %v3231
      %v3233 = vsel %vm378, %v3180, 0.0
      %v3234 = vadd.f32 %v3232, %v3233
      %v3235 = vsel %vm378, %v3181, 0.0
      %v3236 = vadd.f32 %v3234, %v3235
      %v3237 = vrot.slane %v3236, 4
      %v3238 = vadd.f32 %v3236, %v3237
      %v3239 = vrot.slane %v3238, 2
      %v3240 = vadd.f32 %v3238, %v3239
      %v3241 = vrot.slane %v3240, 1
      %v3242 = vadd.f32 %v3240, %v3241
      %v3243 = vmul.f32 %v3242, 0.0051020407
      %v3244 = vadd.f32 %v3243, 1e-05
      %v3245 = vrsqrt.pop %v3244
      %v3246 = vmul.f32 %v3098, %v3245
      %v3247 = vmul.f32 %v3099, %v3245
      %v3248 = vmul.f32 %v3100, %v3245
      %v3249 = vmul.f32 %v3101, %v3245
      %v3250 = vmul.f32 %v3102, %v3245
      %v3251 = vmul.f32 %v3103, %v3245
      %v3252 = vmul.f32 %v3104, %v3245
      %v3253 = vmul.f32 %v3105, %v3245
      %v3254 = vmul.f32 %v3106, %v3245
      %v3255 = vmul.f32 %v3107, %v3245
      %v3256 = vmul.f32 %v3108, %v3245
      %v3257 = vmul.f32 %v3109, %v3245
      %v3258 = vmul.f32 %v3110, %v3245
      %v3259 = vmul.f32 %v3111, %v3245
      %v3260 = vmul.f32 %v3112, %v3245
      %v3261 = vmul.f32 %v3113, %v3245
      %v3262 = vmul.f32 %v3114, %v3245
      %v3263 = vmul.f32 %v3115, %v3245
      %v3264 = vmul.f32 %v3116, %v3245
      %v3265 = vmul.f32 %v3117, %v3245
      %v3266 = vmul.f32 %v3118, %v3245
      %v3267 = vmul.f32 %v3119, %v3245
      %v3268 = vmul.f32 %v3120, %v3245
      %v3269 = vmul.f32 %v3121, %v3245
      %v3270 = vmul.f32 %v3122, %v3245
      %v3271 = vmul.f32 %v3123, %v3245
      %v3272 = vmul.f32 %v3124, %v3245
      %v3273 = vmul.f32 %v3125, %v3245
      %v3274 = vld [vmem:[%s3 + $0x1] sm:$0x1]
      %v3275 = vlaneseq
      %v3276 = vshrl.u32 %v3275, 7
      %v3277 = vsub.s32 0, %v3276
      %v3278 = vrot.slane %v3274, %v3277
      %v3279 = vmul.f32 %v3246, %v3278
      %v3280 = vmul.f32 %v3247, %v3278
      %v3281 = vmul.f32 %v3248, %v3278
      %v3282 = vmul.f32 %v3249, %v3278
      %v3283 = vmul.f32 %v3250, %v3278
      %v3284 = vmul.f32 %v3251, %v3278
      %v3285 = vmul.f32 %v3252, %v3278
      %v3286 = vmul.f32 %v3253, %v3278
      %v3287 = vmul.f32 %v3254, %v3278
      %v3288 = vmul.f32 %v3255, %v3278
      %v3289 = vmul.f32 %v3256, %v3278
      %v3290 = vmul.f32 %v3257, %v3278
      %v3291 = vmul.f32 %v3258, %v3278
      %v3292 = vmul.f32 %v3259, %v3278
      %v3293 = vmul.f32 %v3260, %v3278
      %v3294 = vmul.f32 %v3261, %v3278
      %v3295 = vmul.f32 %v3262, %v3278
      %v3296 = vmul.f32 %v3263, %v3278
      %v3297 = vmul.f32 %v3264, %v3278
      %v3298 = vmul.f32 %v3265, %v3278
      %v3299 = vmul.f32 %v3266, %v3278
      %v3300 = vmul.f32 %v3267, %v3278
      %v3301 = vmul.f32 %v3268, %v3278
      %v3302 = vmul.f32 %v3269, %v3278
      %v3303 = vmul.f32 %v3270, %v3278
      %v3304 = vmul.f32 %v3271, %v3278
      %v3305 = vmul.f32 %v3272, %v3278
      %v3306 = vmul.f32 %v3273, %v3278
      %v3307 = vld [vmem:[%s3 + $0x2] sm:$0x1]
      %v3308 = vlaneseq
      %v3309 = vshrl.u32 %v3308, 7
      %v3310 = vsub.s32 0, %v3309
      %v3311 = vrot.slane %v3307, %v3310
      %v3312 = vadd.f32 %v3279, %v3311
      %v3313 = vadd.f32 %v3280, %v3311
      %v3314 = vadd.f32 %v3281, %v3311
      %v3315 = vadd.f32 %v3282, %v3311
      %v3316 = vadd.f32 %v3283, %v3311
      %v3317 = vadd.f32 %v3284, %v3311
      %v3318 = vadd.f32 %v3285, %v3311
      %v3319 = vadd.f32 %v3286, %v3311
      %v3320 = vadd.f32 %v3287, %v3311
      %v3321 = vadd.f32 %v3288, %v3311
      %v3322 = vadd.f32 %v3289, %v3311
      %v3323 = vadd.f32 %v3290, %v3311
      %v3324 = vadd.f32 %v3291, %v3311
      %v3325 = vadd.f32 %v3292, %v3311
      %v3326 = vadd.f32 %v3293, %v3311
      %v3327 = vadd.f32 %v3294, %v3311
      %v3328 = vadd.f32 %v3295, %v3311
      %v3329 = vadd.f32 %v3296, %v3311
      %v3330 = vadd.f32 %v3297, %v3311
      %v3331 = vadd.f32 %v3298, %v3311
      %v3332 = vadd.f32 %v3299, %v3311
      %v3333 = vadd.f32 %v3300, %v3311
      %v3334 = vadd.f32 %v3301, %v3311
      %v3335 = vadd.f32 %v3302, %v3311
      %v3336 = vadd.f32 %v3303, %v3311
      %v3337 = vadd.f32 %v3304, %v3311
      %v3338 = vadd.f32 %v3305, %v3311
      %v3339 = vadd.f32 %v3306, %v3311
      %v3340 = vmax.f32 %v3312, 0.0
      %v3341 = vmax.f32 %v3313, 0.0
      %v3342 = vmax.f32 %v3314, 0.0
      %v3343 = vmax.f32 %v3315, 0.0
      %v3344 = vmax.f32 %v3316, 0.0
      %v3345 = vmax.f32 %v3317, 0.0
      %v3346 = vmax.f32 %v3318, 0.0
      %v3347 = vmax.f32 %v3319, 0.0
      %v3348 = vmax.f32 %v3320, 0.0
      %v3349 = vmax.f32 %v3321, 0.0
      %v3350 = vmax.f32 %v3322, 0.0
      %v3351 = vmax.f32 %v3323, 0.0
      %v3352 = vmax.f32 %v3324, 0.0
      %v3353 = vmax.f32 %v3325, 0.0
      %v3354 = vmax.f32 %v3326, 0.0
      %v3355 = vmax.f32 %v3327, 0.0
      %v3356 = vmax.f32 %v3328, 0.0
      %v3357 = vmax.f32 %v3329, 0.0
      %v3358 = vmax.f32 %v3330, 0.0
      %v3359 = vmax.f32 %v3331, 0.0
      %v3360 = vmax.f32 %v3332, 0.0
      %v3361 = vmax.f32 %v3333, 0.0
      %v3362 = vmax.f32 %v3334, 0.0
      %v3363 = vmax.f32 %v3335, 0.0
      %v3364 = vmax.f32 %v3336, 0.0
      %v3365 = vmax.f32 %v3337, 0.0
      %v3366 = vmax.f32 %v3338, 0.0
      %v3367 = vmax.f32 %v3339, 0.0
      %3368 = vst.msk [vmem:[#allocation2 + $0xe0] sm:$0xff] %vm378, 0.0
      %3369 = vst.msk [vmem:[#allocation2] sm:$0xff] %vm378, %v3340
      %3370 = vst.msk [vmem:[#allocation2 + $0x8] sm:$0xff] %vm378, %v3341
      %3371 = vst.msk [vmem:[#allocation2 + $0x10] sm:$0xff] %vm378, %v3342
      %3372 = vst.msk [vmem:[#allocation2 + $0x18] sm:$0xff] %vm378, %v3343
      %3373 = vst.msk [vmem:[#allocation2 + $0x20] sm:$0xff] %vm378, %v3344
      %3374 = vst.msk [vmem:[#allocation2 + $0x28] sm:$0xff] %vm378, %v3345
      %3375 = vst.msk [vmem:[#allocation2 + $0x30] sm:$0xff] %vm378, %v3346
      %3376 = vst.msk [vmem:[#allocation2 + $0x38] sm:$0xff] %vm378, %v3347
      %3377 = vst.msk [vmem:[#allocation2 + $0x40] sm:$0xff] %vm378, %v3348
      %3378 = vst.msk [vmem:[#allocation2 + $0x48] sm:$0xff] %vm378, %v3349
      %3379 = vst.msk [vmem:[#allocation2 + $0x50] sm:$0xff] %vm378, %v3350
      %3380 = vst.msk [vmem:[#allocation2 + $0x58] sm:$0xff] %vm378, %v3351
      %3381 = vst.msk [vmem:[#allocation2 + $0x60] sm:$0xff] %vm378, %v3352
      %3382 = vst.msk [vmem:[#allocation2 + $0x68] sm:$0xff] %vm378, %v3353
      %3383 = vst.msk [vmem:[#allocation2 + $0x70] sm:$0xff] %vm378, %v3354
      %3384 = vst.msk [vmem:[#allocation2 + $0x78] sm:$0xff] %vm378, %v3355
      %3385 = vst.msk [vmem:[#allocation2 + $0x80] sm:$0xff] %vm378, %v3356
      %3386 = vst.msk [vmem:[#allocation2 + $0x88] sm:$0xff] %vm378, %v3357
      %3387 = vst.msk [vmem:[#allocation2 + $0x90] sm:$0xff] %vm378, %v3358
      %3388 = vst.msk [vmem:[#allocation2 + $0x98] sm:$0xff] %vm378, %v3359
      %3389 = vst.msk [vmem:[#allocation2 + $0xa0] sm:$0xff] %vm378, %v3360
      %3390 = vst.msk [vmem:[#allocation2 + $0xa8] sm:$0xff] %vm378, %v3361
      %3391 = vst.msk [vmem:[#allocation2 + $0xb0] sm:$0xff] %vm378, %v3362
      %3392 = vst.msk [vmem:[#allocation2 + $0xb8] sm:$0xff] %vm378, %v3363
      %3393 = vst.msk [vmem:[#allocation2 + $0xc0] sm:$0xff] %vm378, %v3364
      %3394 = vst.msk [vmem:[#allocation2 + $0xc8] sm:$0xff] %vm378, %v3365
      %3395 = vst.msk [vmem:[#allocation2 + $0xd0] sm:$0xff] %vm378, %v3366
      %3396 = vst.msk [vmem:[#allocation2 + $0xd8] sm:$0xff] %vm378, %v3367
      %v3397 = vld [vmem:[#allocation2] sm:$0xff]
      %v3398 = vld [vmem:[#allocation2 + $0x8] sm:$0xff]
      %v3399 = vld [vmem:[#allocation2 + $0x10] sm:$0xff]
      %v3400 = vld [vmem:[#allocation2 + $0x18] sm:$0xff]
      %v3401 = vld [vmem:[#allocation2 + $0x20] sm:$0xff]
      %v3402 = vld [vmem:[#allocation2 + $0x28] sm:$0xff]
      %v3403 = vld [vmem:[#allocation2 + $0x30] sm:$0xff]
      %v3404 = vld [vmem:[#allocation2 + $0x38] sm:$0xff]
      %v3405 = vld [vmem:[#allocation2 + $0x40] sm:$0xff]
      %v3406 = vld [vmem:[#allocation2 + $0x48] sm:$0xff]
      %v3407 = vld [vmem:[#allocation2 + $0x50] sm:$0xff]
      %v3408 = vld [vmem:[#allocation2 + $0x58] sm:$0xff]
      %v3409 = vld [vmem:[#allocation2 + $0x60] sm:$0xff]
      %v3410 = vld [vmem:[#allocation2 + $0x68] sm:$0xff]
      %v3411 = vld [vmem:[#allocation2 + $0x70] sm:$0xff]
      %v3412 = vld [vmem:[#allocation2 + $0x78] sm:$0xff]
      %v3413 = vld [vmem:[#allocation2 + $0x80] sm:$0xff]
      %v3414 = vld [vmem:[#allocation2 + $0x88] sm:$0xff]
      %v3415 = vld [vmem:[#allocation2 + $0x90] sm:$0xff]
      %v3416 = vld [vmem:[#allocation2 + $0x98] sm:$0xff]
      %v3417 = vld [vmem:[#allocation2 + $0xa0] sm:$0xff]
      %v3418 = vld [vmem:[#allocation2 + $0xa8] sm:$0xff]
      %v3419 = vld [vmem:[#allocation2 + $0xb0] sm:$0xff]
      %v3420 = vld [vmem:[#allocation2 + $0xb8] sm:$0xff]
      %v3421 = vpack.c.bf16 %v3398, %v3397
      %v3422 = vpack.c.bf16 %v3400, %v3399
      %v3423 = vpack.c.bf16 %v3402, %v3401
      %v3424 = vpack.c.bf16 %v3404, %v3403
      %v3425 = vpack.c.bf16 %v3406, %v3405
      %v3426 = vpack.c.bf16 %v3408, %v3407
      %v3427 = vpack.c.bf16 %v3410, %v3409
      %v3428 = vpack.c.bf16 %v3412, %v3411
      %v3429 = vpack.c.bf16 %v3414, %v3413
      %v3430 = vpack.c.bf16 %v3416, %v3415
      %v3431 = vpack.c.bf16 %v3418, %v3417
      %v3432 = vpack.c.bf16 %v3420, %v3419
      %v3433 = vld [vmem:[%s2] sm:$0xf]
      %v3434 = vld [vmem:[%s2 + $0x4] sm:$0xf]
      %v3435 = vld [vmem:[%s2 + $0x8] sm:$0xf]
      %v3436 = vld [vmem:[%s2 + $0xc] sm:$0xf]
      %v3437 = vld [vmem:[%s2 + $0x10] sm:$0xf]
      %v3438 = vld [vmem:[%s2 + $0x14] sm:$0xf]
      %v3439 = vld [vmem:[%s2 + $0x18] sm:$0xf]
      %v3440 = vld [vmem:[%s2 + $0x1c] sm:$0xf]
      %v3441 = vld [vmem:[#allocation2 + $0x1] sm:$0xff]
      %v3442 = vld [vmem:[#allocation2 + $0x9] sm:$0xff]
      %v3443 = vld [vmem:[#allocation2 + $0x11] sm:$0xff]
      %v3444 = vld [vmem:[#allocation2 + $0x19] sm:$0xff]
      %v3445 = vld [vmem:[#allocation2 + $0x21] sm:$0xff]
      %v3446 = vld [vmem:[#allocation2 + $0x29] sm:$0xff]
      %v3447 = vld [vmem:[#allocation2 + $0x31] sm:$0xff]
      %v3448 = vld [vmem:[#allocation2 + $0x39] sm:$0xff]
      %v3449 = vld [vmem:[#allocation2 + $0x41] sm:$0xff]
      %v3450 = vld [vmem:[#allocation2 + $0x49] sm:$0xff]
      %v3451 = vld [vmem:[#allocation2 + $0x51] sm:$0xff]
      %v3452 = vld [vmem:[#allocation2 + $0x59] sm:$0xff]
      %v3453 = vld [vmem:[#allocation2 + $0x61] sm:$0xff]
      %v3454 = vld [vmem:[#allocation2 + $0x69] sm:$0xff]
      %v3455 = vld [vmem:[#allocation2 + $0x71] sm:$0xff]
      %v3456 = vld [vmem:[#allocation2 + $0x79] sm:$0xff]
      %v3457 = vld [vmem:[#allocation2 + $0x81] sm:$0xff]
      %v3458 = vld [vmem:[#allocation2 + $0x89] sm:$0xff]
      %v3459 = vld [vmem:[#allocation2 + $0x91] sm:$0xff]
      %v3460 = vld [vmem:[#allocation2 + $0x99] sm:$0xff]
      %v3461 = vld [vmem:[#allocation2 + $0xa1] sm:$0xff]
      %v3462 = vld [vmem:[#allocation2 + $0xa9] sm:$0xff]
      %v3463 = vld [vmem:[#allocation2 + $0xb1] sm:$0xff]
      %v3464 = vld [vmem:[#allocation2 + $0xb9] sm:$0xff]
      %v3465 = vpack.c.bf16 %v3442, %v3441
      %v3466 = vpack.c.bf16 %v3444, %v3443
      %v3467 = vpack.c.bf16 %v3446, %v3445
      %v3468 = vpack.c.bf16 %v3448, %v3447
      %v3469 = vpack.c.bf16 %v3450, %v3449
      %v3470 = vpack.c.bf16 %v3452, %v3451
      %v3471 = vpack.c.bf16 %v3454, %v3453
      %v3472 = vpack.c.bf16 %v3456, %v3455
      %v3473 = vpack.c.bf16 %v3458, %v3457
      %v3474 = vpack.c.bf16 %v3460, %v3459
      %v3475 = vpack.c.bf16 %v3462, %v3461
      %v3476 = vpack.c.bf16 %v3464, %v3463
      %s3477 = scalar_lea.vmem %s2, 32
      %v3478 = vld [vmem:[%s3477] sm:$0xf]
      %v3479 = vld [vmem:[%s3477 + $0x4] sm:$0xf]
      %v3480 = vld [vmem:[%s3477 + $0x8] sm:$0xf]
      %v3481 = vld [vmem:[%s3477 + $0xc] sm:$0xf]
      %v3482 = vld [vmem:[%s3477 + $0x10] sm:$0xf]
      %v3483 = vld [vmem:[%s3477 + $0x14] sm:$0xf]
      %v3484 = vld [vmem:[%s3477 + $0x18] sm:$0xf]
      %v3485 = vld [vmem:[%s3477 + $0x1c] sm:$0xf]
      %v3494 = vunpack.c.l.b16 %v3478
      %v3495 = vunpack.c.l.b16 %v3479
      %v3496 = vunpack.c.l.b16 %v3480
      %v3497 = vunpack.c.l.b16 %v3481
      %v3498 = vunpack.c.l.b16 %v3482
      %v3499 = vunpack.c.l.b16 %v3483
      %v3500 = vunpack.c.l.b16 %v3484
      %v3501 = vunpack.c.l.b16 %v3485
      %v3502 = vpack.c.b16 %v3495, %v3494
      %v3503 = vpack.c.b16 %v3497, %v3496
      %v3504 = vpack.c.b16 %v3499, %v3498
      %v3505 = vpack.c.b16 %v3501, %v3500
      %v3511 = vsel %vm378, %v3465, 0
      %v3514 = vsel %vm378, %v3466, 0
      %v3517 = vsel %vm378, %v3467, 0
      %v3520 = vsel %vm378, %v3468, 0
      %v3523 = vsel %vm378, %v3469, 0
      %v3526 = vsel %vm378, %v3470, 0
      %v3529 = vsel %vm378, %v3471, 0
      %v3532 = vsel %vm378, %v3472, 0
      %v3535 = vsel %vm378, %v3473, 0
      %v3538 = vsel %vm378, %v3474, 0
      %v3541 = vsel %vm378, %v3475, 0
      %v3544 = vsel %vm378, %v3476, 0
      %3546 = vmatprep.subr.bf16.mxu0 0
      %3547 = vmatpush1.bf16.msra.mxu0 %v3502
      %3548 = vmatprep.subr.bf16.mxu0 0
      %3549 = vmatpush1.bf16.msra.mxu0 %v3503
      %3550 = vmatprep.subr.bf16.mxu0 0
      %3551 = vmatpush1.bf16.msra.mxu0 %v3504
      %3552 = vmatprep.subr.bf16.mxu0 0
      %3553 = vmatpush1.bf16.msra.mxu0 %v3505
      %3554 = vmatprep.subr.bf16.mxu0 0
      %3555 = vmatpush1.bf16.msra.mxu0 0
      %3556 = vmatprep.subr.bf16.mxu0 0
      %3557 = vmatpush1.bf16.msra.mxu0 0
      %3558 = vmatprep.subr.bf16.mxu0 0
      %3559 = vmatpush1.bf16.msra.mxu0 0
      %3560 = vmatprep.subr.bf16.mxu0 0
      %3561 = vmatpush1.bf16.msra.mxu0 0
      %3562 = vmatprep.subr.bf16.mxu0 0
      %3563 = vmatpush1.bf16.msra.mxu0 0
      %3564 = vmatprep.subr.bf16.mxu0 0
      %3565 = vmatpush1.bf16.msra.mxu0 0
      %3566 = vmatprep.subr.bf16.mxu0 0
      %3567 = vmatpush1.bf16.msra.mxu0 0
      %3568 = vmatprep.subr.bf16.mxu0 0
      %3569 = vmatpush1.bf16.msra.mxu0 0
      %3570 = vmatprep.subr.bf16.mxu0 0
      %3571 = vmatpush1.bf16.msra.mxu0 0
      %3572 = vmatprep.subr.bf16.mxu0 0
      %3573 = vmatpush1.bf16.msra.mxu0 0
      %3574 = vmatprep.subr.bf16.mxu0 0
      %3575 = vmatpush1.bf16.msra.mxu0 0
      %3576 = vmatprep.subr.bf16.mxu0 0
      %3577 = vmatpush1.bf16.msra.mxu0 0
      %3578 = vmatprep.mubr.bf16.mxu0 0
      %3579 = vmatmul.mubr.bf16.gmra.mrb[0].mxu0 %v3511
      %v3580 = vpop.f32.mrb[0].mxu0
      %v3581 = vadd.f32 0.0, %v3580
      %v3582 = vpop.f32.mrb[0].mxu0
      %v3583 = vpop.f32.mrb[0].mxu0
      %v3584 = vadd.f32 0.0, %v3583
      %v3585 = vpop.f32.mrb[0].mxu0
      %3586 = vmatprep.mubr.bf16.mxu0 0
      %3587 = vmatmul.mubr.bf16.gmra.mrb[0].mxu0 %v3514
      %v3588 = vpop.f32.mrb[0].mxu0
      %v3589 = vadd.f32 0.0, %v3588
      %v3590 = vpop.f32.mrb[0].mxu0
      %v3591 = vpop.f32.mrb[0].mxu0
      %v3592 = vadd.f32 0.0, %v3591
      %v3593 = vpop.f32.mrb[0].mxu0
      %3594 = vmatprep.mubr.bf16.mxu0 0
      %3595 = vmatmul.mubr.bf16.gmra.mrb[0].mxu0 %v3517
      %v3596 = vpop.f32.mrb[0].mxu0
      %v3597 = vadd.f32 0.0, %v3596
      %v3598 = vpop.f32.mrb[0].mxu0
      %v3599 = vpop.f32.mrb[0].mxu0
      %v3600 = vadd.f32 0.0, %v3599
      %v3601 = vpop.f32.mrb[0].mxu0
      %3602 = vmatprep.mubr.bf16.mxu0 0
      %3603 = vmatmul.mubr.bf16.gmra.mrb[0].mxu0 %v3520
      %v3604 = vpop.f32.mrb[0].mxu0
      %v3605 = vadd.f32 0.0, %v3604
      %v3606 = vpop.f32.mrb[0].mxu0
      %v3607 = vpop.f32.mrb[0].mxu0
      %v3608 = vadd.f32 0.0, %v3607
      %v3609 = vpop.f32.mrb[0].mxu0
      %3610 = vmatprep.mubr.bf16.mxu0 0
      %3611 = vmatmul.mubr.bf16.gmra.mrb[0].mxu0 %v3523
      %v3612 = vpop.f32.mrb[0].mxu0
      %v3613 = vadd.f32 0.0, %v3612
      %v3614 = vpop.f32.mrb[0].mxu0
      %v3615 = vpop.f32.mrb[0].mxu0
      %v3616 = vadd.f32 0.0, %v3615
      %v3617 = vpop.f32.mrb[0].mxu0
      %3618 = vmatprep.mubr.bf16.mxu0 0
      %3619 = vmatmul.mubr.bf16.gmra.mrb[0].mxu0 %v3526
      %v3620 = vpop.f32.mrb[0].mxu0
      %v3621 = vadd.f32 0.0, %v3620
      %v3622 = vpop.f32.mrb[0].mxu0
      %v3623 = vpop.f32.mrb[0].mxu0
      %v3624 = vadd.f32 0.0, %v3623
      %v3625 = vpop.f32.mrb[0].mxu0
      %3626 = vmatprep.mubr.bf16.mxu0 0
      %3627 = vmatmul.mubr.bf16.gmra.mrb[0].mxu0 %v3529
      %v3628 = vpop.f32.mrb[0].mxu0
      %v3629 = vadd.f32 0.0, %v3628
      %v3630 = vpop.f32.mrb[0].mxu0
      %v3631 = vpop.f32.mrb[0].mxu0
      %v3632 = vadd.f32 0.0, %v3631
      %v3633 = vpop.f32.mrb[0].mxu0
      %3634 = vmatprep.mubr.bf16.mxu0 0
      %3635 = vmatmul.mubr.bf16.gmra.mrb[0].mxu0 %v3532
      %v3636 = vpop.f32.mrb[0].mxu0
      %v3637 = vadd.f32 0.0, %v3636
      %v3638 = vpop.f32.mrb[0].mxu0
      %v3639 = vpop.f32.mrb[0].mxu0
      %v3640 = vadd.f32 0.0, %v3639
      %v3641 = vpop.f32.mrb[0].mxu0
      %3642 = vmatprep.mubr.bf16.mxu0 0
      %3643 = vmatmul.mubr.bf16.gmra.mrb[0].mxu0 %v3535
      %v3644 = vpop.f32.mrb[0].mxu0
      %v3645 = vadd.f32 0.0, %v3644
      %v3646 = vpop.f32.mrb[0].mxu0
      %v3647 = vpop.f32.mrb[0].mxu0
      %v3648 = vadd.f32 0.0, %v3647
      %v3649 = vpop.f32.mrb[0].mxu0
      %3650 = vmatprep.mubr.bf16.mxu0 0
      %3651 = vmatmul.mubr.bf16.gmra.mrb[0].mxu0 %v3538
      %v3652 = vpop.f32.mrb[0].mxu0
      %v3653 = vadd.f32 0.0, %v3652
      %v3654 = vpop.f32.mrb[0].mxu0
      %v3655 = vpop.f32.mrb[0].mxu0
      %v3656 = vadd.f32 0.0, %v3655
      %v3657 = vpop.f32.mrb[0].mxu0
      %3658 = vmatprep.mubr.bf16.mxu0 0
      %3659 = vmatmul.mubr.bf16.gmra.mrb[0].mxu0 %v3541
      %v3660 = vpop.f32.mrb[0].mxu0
      %v3661 = vadd.f32 0.0, %v3660
      %v3662 = vpop.f32.mrb[0].mxu0
      %v3663 = vpop.f32.mrb[0].mxu0
      %v3664 = vadd.f32 0.0, %v3663
      %v3665 = vpop.f32.mrb[0].mxu0
      %3666 = vmatprep.mubr.bf16.mxu0 0
      %3667 = vmatmul.mubr.bf16.gmra.mrb[0].mxu0 %v3544
      %v3668 = vpop.f32.mrb[0].mxu0
      %v3669 = vadd.f32 0.0, %v3668
      %v3670 = vpop.f32.mrb[0].mxu0
      %v3671 = vpop.f32.mrb[0].mxu0
      %v3672 = vadd.f32 0.0, %v3671
      %v3673 = vpop.f32.mrb[0].mxu0
      %3674 = vdwg.mxu0
      %v3683 = vunpack.c.l.b16 %v3433
      %v3684 = vunpack.c.l.b16 %v3434
      %v3685 = vunpack.c.l.b16 %v3435
      %v3686 = vunpack.c.l.b16 %v3436
      %v3687 = vunpack.c.l.b16 %v3437
      %v3688 = vunpack.c.l.b16 %v3438
      %v3689 = vunpack.c.l.b16 %v3439
      %v3690 = vunpack.c.l.b16 %v3440
      %v3691 = vpack.c.b16 %v3684, %v3683
      %v3692 = vpack.c.b16 %v3686, %v3685
      %v3693 = vpack.c.b16 %v3688, %v3687
      %v3694 = vpack.c.b16 %v3690, %v3689
      %v3700 = vsel %vm378, %v3421, 0
      %v3703 = vsel %vm378, %v3422, 0
      %v3706 = vsel %vm378, %v3423, 0
      %v3709 = vsel %vm378, %v3424, 0
      %v3712 = vsel %vm378, %v3425, 0
      %v3715 = vsel %vm378, %v3426, 0
      %v3718 = vsel %vm378, %v3427, 0
      %v3721 = vsel %vm378, %v3428, 0
      %v3724 = vsel %vm378, %v3429, 0
      %v3727 = vsel %vm378, %v3430, 0
      %v3730 = vsel %vm378, %v3431, 0
      %v3733 = vsel %vm378, %v3432, 0
      %3735 = vmatprep.subr.bf16.mxu0 0
      %3736 = vmatpush1.bf16.msra.mxu0 %v3691
      %3737 = vmatprep.subr.bf16.mxu0 0
      %3738 = vmatpush1.bf16.msra.mxu0 %v3692
      %3739 = vmatprep.subr.bf16.mxu0 0
      %3740 = vmatpush1.bf16.msra.mxu0 %v3693
      %3741 = vmatprep.subr.bf16.mxu0 0
      %3742 = vmatpush1.bf16.msra.mxu0 %v3694
      %3743 = vmatprep.subr.bf16.mxu0 0
      %3744 = vmatpush1.bf16.msra.mxu0 0
      %3745 = vmatprep.subr.bf16.mxu0 0
      %3746 = vmatpush1.bf16.msra.mxu0 0
      %3747 = vmatprep.subr.bf16.mxu0 0
      %3748 = vmatpush1.bf16.msra.mxu0 0
      %3749 = vmatprep.subr.bf16.mxu0 0
      %3750 = vmatpush1.bf16.msra.mxu0 0
      %3751 = vmatprep.subr.bf16.mxu0 0
      %3752 = vmatpush1.bf16.msra.mxu0 0
      %3753 = vmatprep.subr.bf16.mxu0 0
      %3754 = vmatpush1.bf16.msra.mxu0 0
      %3755 = vmatprep.subr.bf16.mxu0 0
      %3756 = vmatpush1.bf16.msra.mxu0 0
      %3757 = vmatprep.subr.bf16.mxu0 0
      %3758 = vmatpush1.bf16.msra.mxu0 0
      %3759 = vmatprep.subr.bf16.mxu0 0
      %3760 = vmatpush1.bf16.msra.mxu0 0
      %3761 = vmatprep.subr.bf16.mxu0 0
      %3762 = vmatpush1.bf16.msra.mxu0 0
      %3763 = vmatprep.subr.bf16.mxu0 0
      %3764 = vmatpush1.bf16.msra.mxu0 0
      %3765 = vmatprep.subr.bf16.mxu0 0
      %3766 = vmatpush1.bf16.msra.mxu0 0
      %3767 = vmatprep.mubr.bf16.mxu0 0
      %3768 = vmatmul.mubr.bf16.gmra.mrb[0].mxu0 %v3700
      %v3769 = vpop.f32.mrb[0].mxu0
      %v3770 = vadd.f32 %v3581, %v3769
      %v3771 = vpop.f32.mrb[0].mxu0
      %v3772 = vpop.f32.mrb[0].mxu0
      %v3773 = vadd.f32 %v3584, %v3772
      %v3774 = vpop.f32.mrb[0].mxu0
      %3775 = vmatprep.mubr.bf16.mxu0 0
      %3776 = vmatmul.mubr.bf16.gmra.mrb[0].mxu0 %v3703
      %v3777 = vpop.f32.mrb[0].mxu0
      %v3778 = vadd.f32 %v3589, %v3777
      %v3779 = vpop.f32.mrb[0].mxu0
      %v3780 = vpop.f32.mrb[0].mxu0
      %v3781 = vadd.f32 %v3592, %v3780
      %v3782 = vpop.f32.mrb[0].mxu0
      %3783 = vmatprep.mubr.bf16.mxu0 0
      %3784 = vmatmul.mubr.bf16.gmra.mrb[0].mxu0 %v3706
      %v3785 = vpop.f32.mrb[0].mxu0
      %v3786 = vadd.f32 %v3597, %v3785
      %v3787 = vpop.f32.mrb[0].mxu0
      %v3788 = vpop.f32.mrb[0].mxu0
      %v3789 = vadd.f32 %v3600, %v3788
      %v3790 = vpop.f32.mrb[0].mxu0
      %3791 = vmatprep.mubr.bf16.mxu0 0
      %3792 = vmatmul.mubr.bf16.gmra.mrb[0].mxu0 %v3709
      %v3793 = vpop.f32.mrb[0].mxu0
      %v3794 = vadd.f32 %v3605, %v3793
      %v3795 = vpop.f32.mrb[0].mxu0
      %v3796 = vpop.f32.mrb[0].mxu0
      %v3797 = vadd.f32 %v3608, %v3796
      %v3798 = vpop.f32.mrb[0].mxu0
      %3799 = vmatprep.mubr.bf16.mxu0 0
      %3800 = vmatmul.mubr.bf16.gmra.mrb[0].mxu0 %v3712
      %v3801 = vpop.f32.mrb[0].mxu0
      %v3802 = vadd.f32 %v3613, %v3801
      %v3803 = vpop.f32.mrb[0].mxu0
      %v3804 = vpop.f32.mrb[0].mxu0
      %v3805 = vadd.f32 %v3616, %v3804
      %v3806 = vpop.f32.mrb[0].mxu0
      %3807 = vmatprep.mubr.bf16.mxu0 0
      %3808 = vmatmul.mubr.bf16.gmra.mrb[0].mxu0 %v3715
      %v3809 = vpop.f32.mrb[0].mxu0
      %v3810 = vadd.f32 %v3621, %v3809
      %v3811 = vpop.f32.mrb[0].mxu0
      %v3812 = vpop.f32.mrb[0].mxu0
      %v3813 = vadd.f32 %v3624, %v3812
      %v3814 = vpop.f32.mrb[0].mxu0
      %3815 = vmatprep.mubr.bf16.mxu0 0
      %3816 = vmatmul.mubr.bf16.gmra.mrb[0].mxu0 %v3718
      %v3817 = vpop.f32.mrb[0].mxu0
      %v3818 = vadd.f32 %v3629, %v3817
      %v3819 = vpop.f32.mrb[0].mxu0
      %v3820 = vpop.f32.mrb[0].mxu0
      %v3821 = vadd.f32 %v3632, %v3820
      %v3822 = vpop.f32.mrb[0].mxu0
      %3823 = vmatprep.mubr.bf16.mxu0 0
      %3824 = vmatmul.mubr.bf16.gmra.mrb[0].mxu0 %v3721
      %v3825 = vpop.f32.mrb[0].mxu0
      %v3826 = vadd.f32 %v3637, %v3825
      %v3827 = vpop.f32.mrb[0].mxu0
      %v3828 = vpop.f32.mrb[0].mxu0
      %v3829 = vadd.f32 %v3640, %v3828
      %v3830 = vpop.f32.mrb[0].mxu0
      %3831 = vmatprep.mubr.bf16.mxu0 0
      %3832 = vmatmul.mubr.bf16.gmra.mrb[0].mxu0 %v3724
      %v3833 = vpop.f32.mrb[0].mxu0
      %v3834 = vadd.f32 %v3645, %v3833
      %v3835 = vpop.f32.mrb[0].mxu0
      %v3836 = vpop.f32.mrb[0].mxu0
      %v3837 = vadd.f32 %v3648, %v3836
      %v3838 = vpop.f32.mrb[0].mxu0
      %3839 = vmatprep.mubr.bf16.mxu0 0
      %3840 = vmatmul.mubr.bf16.gmra.mrb[0].mxu0 %v3727
      %v3841 = vpop.f32.mrb[0].mxu0
      %v3842 = vadd.f32 %v3653, %v3841
      %v3843 = vpop.f32.mrb[0].mxu0
      %v3844 = vpop.f32.mrb[0].mxu0
      %v3845 = vadd.f32 %v3656, %v3844
      %v3846 = vpop.f32.mrb[0].mxu0
      %3847 = vmatprep.mubr.bf16.mxu0 0
      %3848 = vmatmul.mubr.bf16.gmra.mrb[0].mxu0 %v3730
      %v3849 = vpop.f32.mrb[0].mxu0
      %v3850 = vadd.f32 %v3661, %v3849
      %v3851 = vpop.f32.mrb[0].mxu0
      %v3852 = vpop.f32.mrb[0].mxu0
      %v3853 = vadd.f32 %v3664, %v3852
      %v3854 = vpop.f32.mrb[0].mxu0
      %3855 = vmatprep.mubr.bf16.mxu0 0
      %3856 = vmatmul.mubr.bf16.gmra.mrb[0].mxu0 %v3733
      %v3857 = vpop.f32.mrb[0].mxu0
      %v3858 = vadd.f32 %v3669, %v3857
      %v3859 = vpop.f32.mrb[0].mxu0
      %v3860 = vpop.f32.mrb[0].mxu0
      %v3861 = vadd.f32 %v3672, %v3860
      %v3862 = vpop.f32.mrb[0].mxu0
      %3863 = vdwg.mxu0
      %v3864 = vld [vmem:[#allocation2 + $0x2] sm:$0xff]
      %v3865 = vld [vmem:[#allocation2 + $0xa] sm:$0xff]
      %v3866 = vld [vmem:[#allocation2 + $0x12] sm:$0xff]
      %v3867 = vld [vmem:[#allocation2 + $0x1a] sm:$0xff]
      %v3868 = vld [vmem:[#allocation2 + $0x22] sm:$0xff]
      %v3869 = vld [vmem:[#allocation2 + $0x2a] sm:$0xff]
      %v3870 = vld [vmem:[#allocation2 + $0x32] sm:$0xff]
      %v3871 = vld [vmem:[#allocation2 + $0x3a] sm:$0xff]
      %v3872 = vld [vmem:[#allocation2 + $0x42] sm:$0xff]
      %v3873 = vld [vmem:[#allocation2 + $0x4a] sm:$0xff]
      %v3874 = vld [vmem:[#allocation2 + $0x52] sm:$0xff]
      %v3875 = vld [vmem:[#allocation2 + $0x5a] sm:$0xff]
      %v3876 = vld [vmem:[#allocation2 + $0x62] sm:$0xff]
      %v3877 = vld [vmem:[#allocation2 + $0x6a] sm:$0xff]
      %v3878 = vld [vmem:[#allocation2 + $0x72] sm:$0xff]
      %v3879 = vld [vmem:[#allocation2 + $0x7a] sm:$0xff]
      %v3880 = vld [vmem:[#allocation2 + $0x82] sm:$0xff]
      %v3881 = vld [vmem:[#allocation2 + $0x8a] sm:$0xff]
      %v3882 = vld [vmem:[#allocation2 + $0x92] sm:$0xff]
      %v3883 = vld [vmem:[#allocation2 + $0x9a] sm:$0xff]
      %v3884 = vld [vmem:[#allocation2 + $0xa2] sm:$0xff]
      %v3885 = vld [vmem:[#allocation2 + $0xaa] sm:$0xff]
      %v3886 = vld [vmem:[#allocation2 + $0xb2] sm:$0xff]
      %v3887 = vld [vmem:[#allocation2 + $0xba] sm:$0xff]
      %v3888 = vpack.c.bf16 %v3865, %v3864
      %v3889 = vpack.c.bf16 %v3867, %v3866
      %v3890 = vpack.c.bf16 %v3869, %v3868
      %v3891 = vpack.c.bf16 %v3871, %v3870
      %v3892 = vpack.c.bf16 %v3873, %v3872
      %v3893 = vpack.c.bf16 %v3875, %v3874
      %v3894 = vpack.c.bf16 %v3877, %v3876
      %v3895 = vpack.c.bf16 %v3879, %v3878
      %v3896 = vpack.c.bf16 %v3881, %v3880
      %v3897 = vpack.c.bf16 %v3883, %v3882
      %v3898 = vpack.c.bf16 %v3885, %v3884
      %v3899 = vpack.c.bf16 %v3887, %v3886
      %s3900 = scalar_lea.vmem %s2, 64
      %v3901 = vld [vmem:[%s3900] sm:$0xf]
      %v3902 = vld [vmem:[%s3900 + $0x4] sm:$0xf]
      %v3903 = vld [vmem:[%s3900 + $0x8] sm:$0xf]
      %v3904 = vld [vmem:[%s3900 + $0xc] sm:$0xf]
      %v3905 = vld [vmem:[%s3900 + $0x10] sm:$0xf]
      %v3906 = vld [vmem:[%s3900 + $0x14] sm:$0xf]
      %v3907 = vld [vmem:[%s3900 + $0x18] sm:$0xf]
      %v3908 = vld [vmem:[%s3900 + $0x1c] sm:$0xf]
      %v3917 = vunpack.c.l.b16 %v3901
      %v3918 = vunpack.c.l.b16 %v3902
      %v3919 = vunpack.c.l.b16 %v3903
      %v3920 = vunpack.c.l.b16 %v3904
      %v3921 = vunpack.c.l.b16 %v3905
      %v3922 = vunpack.c.l.b16 %v3906
      %v3923 = vunpack.c.l.b16 %v3907
      %v3924 = vunpack.c.l.b16 %v3908
      %v3925 = vpack.c.b16 %v3918, %v3917
      %v3926 = vpack.c.b16 %v3920, %v3919
      %v3927 = vpack.c.b16 %v3922, %v3921
      %v3928 = vpack.c.b16 %v3924, %v3923
      %v3934 = vsel %vm378, %v3888, 0
      %v3937 = vsel %vm378, %v3889, 0
      %v3940 = vsel %vm378, %v3890, 0
      %v3943 = vsel %vm378, %v3891, 0
      %v3946 = vsel %vm378, %v3892, 0
      %v3949 = vsel %vm378, %v3893, 0
      %v3952 = vsel %vm378, %v3894, 0
      %v3955 = vsel %vm378, %v3895, 0
      %v3958 = vsel %vm378, %v3896, 0
      %v3961 = vsel %vm378, %v3897, 0
      %v3964 = vsel %vm378, %v3898, 0
      %v3967 = vsel %vm378, %v3899, 0
      %3969 = vmatprep.subr.bf16.mxu0 0
      %3970 = vmatpush1.bf16.msra.mxu0 %v3925
      %3971 = vmatprep.subr.bf16.mxu0 0
      %3972 = vmatpush1.bf16.msra.mxu0 %v3926
      %3973 = vmatprep.subr.bf16.mxu0 0
      %3974 = vmatpush1.bf16.msra.mxu0 %v3927
      %3975 = vmatprep.subr.bf16.mxu0 0
      %3976 = vmatpush1.bf16.msra.mxu0 %v3928
      %3977 = vmatprep.subr.bf16.mxu0 0
      %3978 = vmatpush1.bf16.msra.mxu0 0
      %3979 = vmatprep.subr.bf16.mxu0 0
      %3980 = vmatpush1.bf16.msra.mxu0 0
      %3981 = vmatprep.subr.bf16.mxu0 0
      %3982 = vmatpush1.bf16.msra.mxu0 0
      %3983 = vmatprep.subr.bf16.mxu0 0
      %3984 = vmatpush1.bf16.msra.mxu0 0
      %3985 = vmatprep.subr.bf16.mxu0 0
      %3986 = vmatpush1.bf16.msra.mxu0 0
      %3987 = vmatprep.subr.bf16.mxu0 0
      %3988 = vmatpush1.bf16.msra.mxu0 0
      %3989 = vmatprep.subr.bf16.mxu0 0
      %3990 = vmatpush1.bf16.msra.mxu0 0
      %3991 = vmatprep.subr.bf16.mxu0 0
      %3992 = vmatpush1.bf16.msra.mxu0 0
      %3993 = vmatprep.subr.bf16.mxu0 0
      %3994 = vmatpush1.bf16.msra.mxu0 0
      %3995 = vmatprep.subr.bf16.mxu0 0
      %3996 = vmatpush1.bf16.msra.mxu0 0
      %3997 = vmatprep.subr.bf16.mxu0 0
      %3998 = vmatpush1.bf16.msra.mxu0 0
      %3999 = vmatprep.subr.bf16.mxu0 0
      %4000 = vmatpush1.bf16.msra.mxu0 0
      %4001 = vmatprep.mubr.bf16.mxu0 0
      %4002 = vmatmul.mubr.bf16.gmra.mrb[0].mxu0 %v3934
      %v4003 = vpop.f32.mrb[0].mxu0
      %v4004 = vadd.f32 0.0, %v4003
      %v4005 = vpop.f32.mrb[0].mxu0
      %v4006 = vpop.f32.mrb[0].mxu0
      %v4007 = vadd.f32 0.0, %v4006
      %v4008 = vpop.f32.mrb[0].mxu0
      %4009 = vmatprep.mubr.bf16.mxu0 0
      %4010 = vmatmul.mubr.bf16.gmra.mrb[0].mxu0 %v3937
      %v4011 = vpop.f32.mrb[0].mxu0
      %v4012 = vadd.f32 0.0, %v4011
      %v4013 = vpop.f32.mrb[0].mxu0
      %v4014 = vpop.f32.mrb[0].mxu0
      %v4015 = vadd.f32 0.0, %v4014
      %v4016 = vpop.f32.mrb[0].mxu0
      %4017 = vmatprep.mubr.bf16.mxu0 0
      %4018 = vmatmul.mubr.bf16.gmra.mrb[0].mxu0 %v3940
      %v4019 = vpop.f32.mrb[0].mxu0
      %v4020 = vadd.f32 0.0, %v4019
      %v4021 = vpop.f32.mrb[0].mxu0
      %v4022 = vpop.f32.mrb[0].mxu0
      %v4023 = vadd.f32 0.0, %v4022
      %v4024 = vpop.f32.mrb[0].mxu0
      %4025 = vmatprep.mubr.bf16.mxu0 0
      %4026 = vmatmul.mubr.bf16.gmra.mrb[0].mxu0 %v3943
      %v4027 = vpop.f32.mrb[0].mxu0
      %v4028 = vadd.f32 0.0, %v4027
      %v4029 = vpop.f32.mrb[0].mxu0
      %v4030 = vpop.f32.mrb[0].mxu0
      %v4031 = vadd.f32 0.0, %v4030
      %v4032 = vpop.f32.mrb[0].mxu0
      %4033 = vmatprep.mubr.bf16.mxu0 0
      %4034 = vmatmul.mubr.bf16.gmra.mrb[0].mxu0 %v3946
      %v4035 = vpop.f32.mrb[0].mxu0
      %v4036 = vadd.f32 0.0, %v4035
      %v4037 = vpop.f32.mrb[0].mxu0
      %v4038 = vpop.f32.mrb[0].mxu0
      %v4039 = vadd.f32 0.0, %v4038
      %v4040 = vpop.f32.mrb[0].mxu0
      %4041 = vmatprep.mubr.bf16.mxu0 0
      %4042 = vmatmul.mubr.bf16.gmra.mrb[0].mxu0 %v3949
      %v4043 = vpop.f32.mrb[0].mxu0
      %v4044 = vadd.f32 0.0, %v4043
      %v4045 = vpop.f32.mrb[0].mxu0
      %v4046 = vpop.f32.mrb[0].mxu0
      %v4047 = vadd.f32 0.0, %v4046
      %v4048 = vpop.f32.mrb[0].mxu0
      %4049 = vmatprep.mubr.bf16.mxu0 0
      %4050 = vmatmul.mubr.bf16.gmra.mrb[0].mxu0 %v3952
      %v4051 = vpop.f32.mrb[0].mxu0
      %v4052 = vadd.f32 0.0, %v4051
      %v4053 = vpop.f32.mrb[0].mxu0
      %v4054 = vpop.f32.mrb[0].mxu0
      %v4055 = vadd.f32 0.0, %v4054
      %v4056 = vpop.f32.mrb[0].mxu0
      %4057 = vmatprep.mubr.bf16.mxu0 0
      %4058 = vmatmul.mubr.bf16.gmra.mrb[0].mxu0 %v3955
      %v4059 = vpop.f32.mrb[0].mxu0
      %v4060 = vadd.f32 0.0, %v4059
      %v4061 = vpop.f32.mrb[0].mxu0
      %v4062 = vpop.f32.mrb[0].mxu0
      %v4063 = vadd.f32 0.0, %v4062
      %v4064 = vpop.f32.mrb[0].mxu0
      %4065 = vmatprep.mubr.bf16.mxu0 0
      %4066 = vmatmul.mubr.bf16.gmra.mrb[0].mxu0 %v3958
      %v4067 = vpop.f32.mrb[0].mxu0
      %v4068 = vadd.f32 0.0, %v4067
      %v4069 = vpop.f32.mrb[0].mxu0
      %v4070 = vpop.f32.mrb[0].mxu0
      %v4071 = vadd.f32 0.0, %v4070
      %v4072 = vpop.f32.mrb[0].mxu0
      %4073 = vmatprep.mubr.bf16.mxu0 0
      %4074 = vmatmul.mubr.bf16.gmra.mrb[0].mxu0 %v3961
      %v4075 = vpop.f32.mrb[0].mxu0
      %v4076 = vadd.f32 0.0, %v4075
      %v4077 = vpop.f32.mrb[0].mxu0
      %v4078 = vpop.f32.mrb[0].mxu0
      %v4079 = vadd.f32 0.0, %v4078
      %v4080 = vpop.f32.mrb[0].mxu0
      %4081 = vmatprep.mubr.bf16.mxu0 0
      %4082 = vmatmul.mubr.bf16.gmra.mrb[0].mxu0 %v3964
      %v4083 = vpop.f32.mrb[0].mxu0
      %v4084 = vadd.f32 0.0, %v4083
      %v4085 = vpop.f32.mrb[0].mxu0
      %v4086 = vpop.f32.mrb[0].mxu0
      %v4087 = vadd.f32 0.0, %v4086
      %v4088 = vpop.f32.mrb[0].mxu0
      %4089 = vmatprep.mubr.bf16.mxu0 0
      %4090 = vmatmul.mubr.bf16.gmra.mrb[0].mxu0 %v3967
      %v4091 = vpop.f32.mrb[0].mxu0
      %v4092 = vadd.f32 0.0, %v4091
      %v4093 = vpop.f32.mrb[0].mxu0
      %v4094 = vpop.f32.mrb[0].mxu0
      %v4095 = vadd.f32 0.0, %v4094
      %v4096 = vpop.f32.mrb[0].mxu0
      %4097 = vdwg.mxu0
      %v4098 = vadd.f32 %v3770, %v4004
      %v4099 = vadd.f32 %v3773, %v4007
      %v4100 = vadd.f32 %v3778, %v4012
      %v4101 = vadd.f32 %v3781, %v4015
      %v4102 = vadd.f32 %v3786, %v4020
      %v4103 = vadd.f32 %v3789, %v4023
      %v4104 = vadd.f32 %v3794, %v4028
      %v4105 = vadd.f32 %v3797, %v4031
      %v4106 = vadd.f32 %v3802, %v4036
      %v4107 = vadd.f32 %v3805, %v4039
      %v4108 = vadd.f32 %v3810, %v4044
      %v4109 = vadd.f32 %v3813, %v4047
      %v4110 = vadd.f32 %v3818, %v4052
      %v4111 = vadd.f32 %v3821, %v4055
      %v4112 = vadd.f32 %v3826, %v4060
      %v4113 = vadd.f32 %v3829, %v4063
      %v4114 = vadd.f32 %v3834, %v4068
      %v4115 = vadd.f32 %v3837, %v4071
      %v4116 = vadd.f32 %v3842, %v4076
      %v4117 = vadd.f32 %v3845, %v4079
      %v4118 = vadd.f32 %v3850, %v4084
      %v4119 = vadd.f32 %v3853, %v4087
      %v4120 = vadd.f32 %v3858, %v4092
      %v4121 = vadd.f32 %v3861, %v4095
      %v4122 = vld [vmem:[#allocation2 + $0x10] sm:$0xff]
      %v4123 = vld [vmem:[#allocation2 + $0x18] sm:$0xff]
      %v4124 = vld [vmem:[#allocation2 + $0x20] sm:$0xff]
      %v4125 = vld [vmem:[#allocation2 + $0x28] sm:$0xff]
      %v4126 = vld [vmem:[#allocation2 + $0x30] sm:$0xff]
      %v4127 = vld [vmem:[#allocation2 + $0x38] sm:$0xff]
      %v4128 = vld [vmem:[#allocation2 + $0x40] sm:$0xff]
      %v4129 = vld [vmem:[#allocation2 + $0x48] sm:$0xff]
      %v4130 = vld [vmem:[#allocation2 + $0x50] sm:$0xff]
      %v4131 = vld [vmem:[#allocation2 + $0x58] sm:$0xff]
      %v4132 = vld [vmem:[#allocation2 + $0x60] sm:$0xff]
      %v4133 = vld [vmem:[#allocation2 + $0x68] sm:$0xff]
      %v4134 = vld [vmem:[#allocation2 + $0x70] sm:$0xff]
      %v4135 = vld [vmem:[#allocation2 + $0x78] sm:$0xff]
      %v4136 = vld [vmem:[#allocation2 + $0x80] sm:$0xff]
      %v4137 = vld [vmem:[#allocation2 + $0x88] sm:$0xff]
      %v4138 = vld [vmem:[#allocation2 + $0x90] sm:$0xff]
      %v4139 = vld [vmem:[#allocation2 + $0x98] sm:$0xff]
      %v4140 = vld [vmem:[#allocation2 + $0xa0] sm:$0xff]
      %v4141 = vld [vmem:[#allocation2 + $0xa8] sm:$0xff]
      %v4142 = vld [vmem:[#allocation2 + $0xb0] sm:$0xff]
      %v4143 = vld [vmem:[#allocation2 + $0xb8] sm:$0xff]
      %v4144 = vld [vmem:[#allocation2 + $0xc0] sm:$0xff]
      %v4145 = vld [vmem:[#allocation2 + $0xc8] sm:$0xff]
      %v4146 = vpack.c.bf16 %v4123, %v4122
      %v4147 = vpack.c.bf16 %v4125, %v4124
      %v4148 = vpack.c.bf16 %v4127, %v4126
      %v4149 = vpack.c.bf16 %v4129, %v4128
      %v4150 = vpack.c.bf16 %v4131, %v4130
      %v4151 = vpack.c.bf16 %v4133, %v4132
      %v4152 = vpack.c.bf16 %v4135, %v4134
      %v4153 = vpack.c.bf16 %v4137, %v4136
      %v4154 = vpack.c.bf16 %v4139, %v4138
      %v4155 = vpack.c.bf16 %v4141, %v4140
      %v4156 = vpack.c.bf16 %v4143, %v4142
      %v4157 = vpack.c.bf16 %v4145, %v4144
      %s4158 = scalar_lea.vmem %s2, 96
      %v4159 = vld [vmem:[%s4158] sm:$0xf]
      %v4160 = vld [vmem:[%s4158 + $0x4] sm:$0xf]
      %v4161 = vld [vmem:[%s4158 + $0x8] sm:$0xf]
      %v4162 = vld [vmem:[%s4158 + $0xc] sm:$0xf]
      %v4163 = vld [vmem:[%s4158 + $0x10] sm:$0xf]
      %v4164 = vld [vmem:[%s4158 + $0x14] sm:$0xf]
      %v4165 = vld [vmem:[%s4158 + $0x18] sm:$0xf]
      %v4166 = vld [vmem:[%s4158 + $0x1c] sm:$0xf]
      %v4175 = vunpack.c.l.b16 %v4159
      %v4176 = vunpack.c.l.b16 %v4160
      %v4177 = vunpack.c.l.b16 %v4161
      %v4178 = vunpack.c.l.b16 %v4162
      %v4179 = vunpack.c.l.b16 %v4163
      %v4180 = vunpack.c.l.b16 %v4164
      %v4181 = vunpack.c.l.b16 %v4165
      %v4182 = vunpack.c.l.b16 %v4166
      %v4183 = vpack.c.b16 %v4176, %v4175
      %v4184 = vpack.c.b16 %v4178, %v4177
      %v4185 = vpack.c.b16 %v4180, %v4179
      %v4186 = vpack.c.b16 %v4182, %v4181
      %v4192 = vsel %vm378, %v4146, 0
      %v4195 = vsel %vm378, %v4147, 0
      %v4198 = vsel %vm378, %v4148, 0
      %v4201 = vsel %vm378, %v4149, 0
      %v4204 = vsel %vm378, %v4150, 0
      %v4207 = vsel %vm378, %v4151, 0
      %v4210 = vsel %vm378, %v4152, 0
      %v4213 = vsel %vm378, %v4153, 0
      %v4216 = vsel %vm378, %v4154, 0
      %v4219 = vsel %vm378, %v4155, 0
      %v4222 = vsel %vm378, %v4156, 0
      %v4225 = vsel %vm378, %v4157, 0
      %4227 = vmatprep.subr.bf16.mxu0 0
      %4228 = vmatpush1.bf16.msra.mxu0 %v4183
      %4229 = vmatprep.subr.bf16.mxu0 0
      %4230 = vmatpush1.bf16.msra.mxu0 %v4184
      %4231 = vmatprep.subr.bf16.mxu0 0
      %4232 = vmatpush1.bf16.msra.mxu0 %v4185
      %4233 = vmatprep.subr.bf16.mxu0 0
      %4234 = vmatpush1.bf16.msra.mxu0 %v4186
      %4235 = vmatprep.subr.bf16.mxu0 0
      %4236 = vmatpush1.bf16.msra.mxu0 0
      %4237 = vmatprep.subr.bf16.mxu0 0
      %4238 = vmatpush1.bf16.msra.mxu0 0
      %4239 = vmatprep.subr.bf16.mxu0 0
      %4240 = vmatpush1.bf16.msra.mxu0 0
      %4241 = vmatprep.subr.bf16.mxu0 0
      %4242 = vmatpush1.bf16.msra.mxu0 0
      %4243 = vmatprep.subr.bf16.mxu0 0
      %4244 = vmatpush1.bf16.msra.mxu0 0
      %4245 = vmatprep.subr.bf16.mxu0 0
      %4246 = vmatpush1.bf16.msra.mxu0 0
      %4247 = vmatprep.subr.bf16.mxu0 0
      %4248 = vmatpush1.bf16.msra.mxu0 0
      %4249 = vmatprep.subr.bf16.mxu0 0
      %4250 = vmatpush1.bf16.msra.mxu0 0
      %4251 = vmatprep.subr.bf16.mxu0 0
      %4252 = vmatpush1.bf16.msra.mxu0 0
      %4253 = vmatprep.subr.bf16.mxu0 0
      %4254 = vmatpush1.bf16.msra.mxu0 0
      %4255 = vmatprep.subr.bf16.mxu0 0
      %4256 = vmatpush1.bf16.msra.mxu0 0
      %4257 = vmatprep.subr.bf16.mxu0 0
      %4258 = vmatpush1.bf16.msra.mxu0 0
      %4259 = vmatprep.mubr.bf16.mxu0 0
      %4260 = vmatmul.mubr.bf16.gmra.mrb[0].mxu0 %v4192
      %v4261 = vpop.f32.mrb[0].mxu0
      %v4262 = vadd.f32 0.0, %v4261
      %v4263 = vpop.f32.mrb[0].mxu0
      %v4264 = vpop.f32.mrb[0].mxu0
      %v4265 = vadd.f32 0.0, %v4264
      %v4266 = vpop.f32.mrb[0].mxu0
      %4267 = vmatprep.mubr.bf16.mxu0 0
      %4268 = vmatmul.mubr.bf16.gmra.mrb[0].mxu0 %v4195
      %v4269 = vpop.f32.mrb[0].mxu0
      %v4270 = vadd.f32 0.0, %v4269
      %v4271 = vpop.f32.mrb[0].mxu0
      %v4272 = vpop.f32.mrb[0].mxu0
      %v4273 = vadd.f32 0.0, %v4272
      %v4274 = vpop.f32.mrb[0].mxu0
      %4275 = vmatprep.mubr.bf16.mxu0 0
      %4276 = vmatmul.mubr.bf16.gmra.mrb[0].mxu0 %v4198
      %v4277 = vpop.f32.mrb[0].mxu0
      %v4278 = vadd.f32 0.0, %v4277
      %v4279 = vpop.f32.mrb[0].mxu0
      %v4280 = vpop.f32.mrb[0].mxu0
      %v4281 = vadd.f32 0.0, %v4280
      %v4282 = vpop.f32.mrb[0].mxu0
      %4283 = vmatprep.mubr.bf16.mxu0 0
      %4284 = vmatmul.mubr.bf16.gmra.mrb[0].mxu0 %v4201
      %v4285 = vpop.f32.mrb[0].mxu0
      %v4286 = vadd.f32 0.0, %v4285
      %v4287 = vpop.f32.mrb[0].mxu0
      %v4288 = vpop.f32.mrb[0].mxu0
      %v4289 = vadd.f32 0.0, %v4288
      %v4290 = vpop.f32.mrb[0].mxu0
      %4291 = vmatprep.mubr.bf16.mxu0 0
      %4292 = vmatmul.mubr.bf16.gmra.mrb[0].mxu0 %v4204
      %v4293 = vpop.f32.mrb[0].mxu0
      %v4294 = vadd.f32 0.0, %v4293
      %v4295 = vpop.f32.mrb[0].mxu0
      %v4296 = vpop.f32.mrb[0].mxu0
      %v4297 = vadd.f32 0.0, %v4296
      %v4298 = vpop.f32.mrb[0].mxu0
      %4299 = vmatprep.mubr.bf16.mxu0 0
      %4300 = vmatmul.mubr.bf16.gmra.mrb[0].mxu0 %v4207
      %v4301 = vpop.f32.mrb[0].mxu0
      %v4302 = vadd.f32 0.0, %v4301
      %v4303 = vpop.f32.mrb[0].mxu0
      %v4304 = vpop.f32.mrb[0].mxu0
      %v4305 = vadd.f32 0.0, %v4304
      %v4306 = vpop.f32.mrb[0].mxu0
      %4307 = vmatprep.mubr.bf16.mxu0 0
      %4308 = vmatmul.mubr.bf16.gmra.mrb[0].mxu0 %v4210
      %v4309 = vpop.f32.mrb[0].mxu0
      %v4310 = vadd.f32 0.0, %v4309
      %v4311 = vpop.f32.mrb[0].mxu0
      %v4312 = vpop.f32.mrb[0].mxu0
      %v4313 = vadd.f32 0.0, %v4312
      %v4314 = vpop.f32.mrb[0].mxu0
      %4315 = vmatprep.mubr.bf16.mxu0 0
      %4316 = vmatmul.mubr.bf16.gmra.mrb[0].mxu0 %v4213
      %v4317 = vpop.f32.mrb[0].mxu0
      %v4318 = vadd.f32 0.0, %v4317
      %v4319 = vpop.f32.mrb[0].mxu0
      %v4320 = vpop.f32.mrb[0].mxu0
      %v4321 = vadd.f32 0.0, %v4320
      %v4322 = vpop.f32.mrb[0].mxu0
      %4323 = vmatprep.mubr.bf16.mxu0 0
      %4324 = vmatmul.mubr.bf16.gmra.mrb[0].mxu0 %v4216
      %v4325 = vpop.f32.mrb[0].mxu0
      %v4326 = vadd.f32 0.0, %v4325
      %v4327 = vpop.f32.mrb[0].mxu0
      %v4328 = vpop.f32.mrb[0].mxu0
      %v4329 = vadd.f32 0.0, %v4328
      %v4330 = vpop.f32.mrb[0].mxu0
      %4331 = vmatprep.mubr.bf16.mxu0 0
      %4332 = vmatmul.mubr.bf16.gmra.mrb[0].mxu0 %v4219
      %v4333 = vpop.f32.mrb[0].mxu0
      %v4334 = vadd.f32 0.0, %v4333
      %v4335 = vpop.f32.mrb[0].mxu0
      %v4336 = vpop.f32.mrb[0].mxu0
      %v4337 = vadd.f32 0.0, %v4336
      %v4338 = vpop.f32.mrb[0].mxu0
      %4339 = vmatprep.mubr.bf16.mxu0 0
      %4340 = vmatmul.mubr.bf16.gmra.mrb[0].mxu0 %v4222
      %v4341 = vpop.f32.mrb[0].mxu0
      %v4342 = vadd.f32 0.0, %v4341
      %v4343 = vpop.f32.mrb[0].mxu0
      %v4344 = vpop.f32.mrb[0].mxu0
      %v4345 = vadd.f32 0.0, %v4344
      %v4346 = vpop.f32.mrb[0].mxu0
      %4347 = vmatprep.mubr.bf16.mxu0 0
      %4348 = vmatmul.mubr.bf16.gmra.mrb[0].mxu0 %v4225
      %v4349 = vpop.f32.mrb[0].mxu0
      %v4350 = vadd.f32 0.0, %v4349
      %v4351 = vpop.f32.mrb[0].mxu0
      %v4352 = vpop.f32.mrb[0].mxu0
      %v4353 = vadd.f32 0.0, %v4352
      %v4354 = vpop.f32.mrb[0].mxu0
      %4355 = vdwg.mxu0
      %v4356 = vadd.f32 %v4098, %v4262
      %v4357 = vadd.f32 %v4099, %v4265
      %v4358 = vadd.f32 %v4100, %v4270
      %v4359 = vadd.f32 %v4101, %v4273
      %v4360 = vadd.f32 %v4102, %v4278
      %v4361 = vadd.f32 %v4103, %v4281
      %v4362 = vadd.f32 %v4104, %v4286
      %v4363 = vadd.f32 %v4105, %v4289
      %v4364 = vadd.f32 %v4106, %v4294
      %v4365 = vadd.f32 %v4107, %v4297
      %v4366 = vadd.f32 %v4108, %v4302
      %v4367 = vadd.f32 %v4109, %v4305
      %v4368 = vadd.f32 %v4110, %v4310
      %v4369 = vadd.f32 %v4111, %v4313
      %v4370 = vadd.f32 %v4112, %v4318
      %v4371 = vadd.f32 %v4113, %v4321
      %v4372 = vadd.f32 %v4114, %v4326
      %v4373 = vadd.f32 %v4115, %v4329
      %v4374 = vadd.f32 %v4116, %v4334
      %v4375 = vadd.f32 %v4117, %v4337
      %v4376 = vadd.f32 %v4118, %v4342
      %v4377 = vadd.f32 %v4119, %v4345
      %v4378 = vadd.f32 %v4120, %v4350
      %v4379 = vadd.f32 %v4121, %v4353
      %v4380 = vld [vmem:[#allocation2 + $0x11] sm:$0xff]
      %v4381 = vld [vmem:[#allocation2 + $0x19] sm:$0xff]
      %v4382 = vld [vmem:[#allocation2 + $0x21] sm:$0xff]
      %v4383 = vld [vmem:[#allocation2 + $0x29] sm:$0xff]
      %v4384 = vld [vmem:[#allocation2 + $0x31] sm:$0xff]
      %v4385 = vld [vmem:[#allocation2 + $0x39] sm:$0xff]
      %v4386 = vld [vmem:[#allocation2 + $0x41] sm:$0xff]
      %v4387 = vld [vmem:[#allocation2 + $0x49] sm:$0xff]
      %v4388 = vld [vmem:[#allocation2 + $0x51] sm:$0xff]
      %v4389 = vld [vmem:[#allocation2 + $0x59] sm:$0xff]
      %v4390 = vld [vmem:[#allocation2 + $0x61] sm:$0xff]
      %v4391 = vld [vmem:[#allocation2 + $0x69] sm:$0xff]
      %v4392 = vld [vmem:[#allocation2 + $0x71] sm:$0xff]
      %v4393 = vld [vmem:[#allocation2 + $0x79] sm:$0xff]
      %v4394 = vld [vmem:[#allocation2 + $0x81] sm:$0xff]
      %v4395 = vld [vmem:[#allocation2 + $0x89] sm:$0xff]
      %v4396 = vld [vmem:[#allocation2 + $0x91] sm:$0xff]
      %v4397 = vld [vmem:[#allocation2 + $0x99] sm:$0xff]
      %v4398 = vld [vmem:[#allocation2 + $0xa1] sm:$0xff]
      %v4399 = vld [vmem:[#allocation2 + $0xa9] sm:$0xff]
      %v4400 = vld [vmem:[#allocation2 + $0xb1] sm:$0xff]
      %v4401 = vld [vmem:[#allocation2 + $0xb9] sm:$0xff]
      %v4402 = vld [vmem:[#allocation2 + $0xc1] sm:$0xff]
      %v4403 = vld [vmem:[#allocation2 + $0xc9] sm:$0xff]
      %v4404 = vpack.c.bf16 %v4381, %v4380
      %v4405 = vpack.c.bf16 %v4383, %v4382
      %v4406 = vpack.c.bf16 %v4385, %v4384
      %v4407 = vpack.c.bf16 %v4387, %v4386
      %v4408 = vpack.c.bf16 %v4389, %v4388
      %v4409 = vpack.c.bf16 %v4391, %v4390
      %v4410 = vpack.c.bf16 %v4393, %v4392
      %v4411 = vpack.c.bf16 %v4395, %v4394
      %v4412 = vpack.c.bf16 %v4397, %v4396
      %v4413 = vpack.c.bf16 %v4399, %v4398
      %v4414 = vpack.c.bf16 %v4401, %v4400
      %v4415 = vpack.c.bf16 %v4403, %v4402
      %s4416 = scalar_lea.vmem %s2, 128
      %v4417 = vld [vmem:[%s4416] sm:$0xf]
      %v4418 = vld [vmem:[%s4416 + $0x4] sm:$0xf]
      %v4419 = vld [vmem:[%s4416 + $0x8] sm:$0xf]
      %v4420 = vld [vmem:[%s4416 + $0xc] sm:$0xf]
      %v4421 = vld [vmem:[%s4416 + $0x10] sm:$0xf]
      %v4422 = vld [vmem:[%s4416 + $0x14] sm:$0xf]
      %v4423 = vld [vmem:[%s4416 + $0x18] sm:$0xf]
      %v4424 = vld [vmem:[%s4416 + $0x1c] sm:$0xf]
      %v4433 = vunpack.c.l.b16 %v4417
      %v4434 = vunpack.c.l.b16 %v4418
      %v4435 = vunpack.c.l.b16 %v4419
      %v4436 = vunpack.c.l.b16 %v4420
      %v4437 = vunpack.c.l.b16 %v4421
      %v4438 = vunpack.c.l.b16 %v4422
      %v4439 = vunpack.c.l.b16 %v4423
      %v4440 = vunpack.c.l.b16 %v4424
      %v4441 = vpack.c.b16 %v4434, %v4433
      %v4442 = vpack.c.b16 %v4436, %v4435
      %v4443 = vpack.c.b16 %v4438, %v4437
      %v4444 = vpack.c.b16 %v4440, %v4439
      %v4450 = vsel %vm378, %v4404, 0
      %v4453 = vsel %vm378, %v4405, 0
      %v4456 = vsel %vm378, %v4406, 0
      %v4459 = vsel %vm378, %v4407, 0
      %v4462 = vsel %vm378, %v4408, 0
      %v4465 = vsel %vm378, %v4409, 0
      %v4468 = vsel %vm378, %v4410, 0
      %v4471 = vsel %vm378, %v4411, 0
      %v4474 = vsel %vm378, %v4412, 0
      %v4477 = vsel %vm378, %v4413, 0
      %v4480 = vsel %vm378, %v4414, 0
      %v4483 = vsel %vm378, %v4415, 0
      %4485 = vmatprep.subr.bf16.mxu0 0
      %4486 = vmatpush1.bf16.msra.mxu0 %v4441
      %4487 = vmatprep.subr.bf16.mxu0 0
      %4488 = vmatpush1.bf16.msra.mxu0 %v4442
      %4489 = vmatprep.subr.bf16.mxu0 0
      %4490 = vmatpush1.bf16.msra.mxu0 %v4443
      %4491 = vmatprep.subr.bf16.mxu0 0
      %4492 = vmatpush1.bf16.msra.mxu0 %v4444
      %4493 = vmatprep.subr.bf16.mxu0 0
      %4494 = vmatpush1.bf16.msra.mxu0 0
      %4495 = vmatprep.subr.bf16.mxu0 0
      %4496 = vmatpush1.bf16.msra.mxu0 0
      %4497 = vmatprep.subr.bf16.mxu0 0
      %4498 = vmatpush1.bf16.msra.mxu0 0
      %4499 = vmatprep.subr.bf16.mxu0 0
      %4500 = vmatpush1.bf16.msra.mxu0 0
      %4501 = vmatprep.subr.bf16.mxu0 0
      %4502 = vmatpush1.bf16.msra.mxu0 0
      %4503 = vmatprep.subr.bf16.mxu0 0
      %4504 = vmatpush1.bf16.msra.mxu0 0
      %4505 = vmatprep.subr.bf16.mxu0 0
      %4506 = vmatpush1.bf16.msra.mxu0 0
      %4507 = vmatprep.subr.bf16.mxu0 0
      %4508 = vmatpush1.bf16.msra.mxu0 0
      %4509 = vmatprep.subr.bf16.mxu0 0
      %4510 = vmatpush1.bf16.msra.mxu0 0
      %4511 = vmatprep.subr.bf16.mxu0 0
      %4512 = vmatpush1.bf16.msra.mxu0 0
      %4513 = vmatprep.subr.bf16.mxu0 0
      %4514 = vmatpush1.bf16.msra.mxu0 0
      %4515 = vmatprep.subr.bf16.mxu0 0
      %4516 = vmatpush1.bf16.msra.mxu0 0
      %4517 = vmatprep.mubr.bf16.mxu0 0
      %4518 = vmatmul.mubr.bf16.gmra.mrb[0].mxu0 %v4450
      %v4519 = vpop.f32.mrb[0].mxu0
      %v4520 = vadd.f32 0.0, %v4519
      %v4521 = vpop.f32.mrb[0].mxu0
      %v4522 = vpop.f32.mrb[0].mxu0
      %v4523 = vadd.f32 0.0, %v4522
      %v4524 = vpop.f32.mrb[0].mxu0
      %4525 = vmatprep.mubr.bf16.mxu0 0
      %4526 = vmatmul.mubr.bf16.gmra.mrb[0].mxu0 %v4453
      %v4527 = vpop.f32.mrb[0].mxu0
      %v4528 = vadd.f32 0.0, %v4527
      %v4529 = vpop.f32.mrb[0].mxu0
      %v4530 = vpop.f32.mrb[0].mxu0
      %v4531 = vadd.f32 0.0, %v4530
      %v4532 = vpop.f32.mrb[0].mxu0
      %4533 = vmatprep.mubr.bf16.mxu0 0
      %4534 = vmatmul.mubr.bf16.gmra.mrb[0].mxu0 %v4456
      %v4535 = vpop.f32.mrb[0].mxu0
      %v4536 = vadd.f32 0.0, %v4535
      %v4537 = vpop.f32.mrb[0].mxu0
      %v4538 = vpop.f32.mrb[0].mxu0
      %v4539 = vadd.f32 0.0, %v4538
      %v4540 = vpop.f32.mrb[0].mxu0
      %4541 = vmatprep.mubr.bf16.mxu0 0
      %4542 = vmatmul.mubr.bf16.gmra.mrb[0].mxu0 %v4459
      %v4543 = vpop.f32.mrb[0].mxu0
      %v4544 = vadd.f32 0.0, %v4543
      %v4545 = vpop.f32.mrb[0].mxu0
      %v4546 = vpop.f32.mrb[0].mxu0
      %v4547 = vadd.f32 0.0, %v4546
      %v4548 = vpop.f32.mrb[0].mxu0
      %4549 = vmatprep.mubr.bf16.mxu0 0
      %4550 = vmatmul.mubr.bf16.gmra.mrb[0].mxu0 %v4462
      %v4551 = vpop.f32.mrb[0].mxu0
      %v4552 = vadd.f32 0.0, %v4551
      %v4553 = vpop.f32.mrb[0].mxu0
      %v4554 = vpop.f32.mrb[0].mxu0
      %v4555 = vadd.f32 0.0, %v4554
      %v4556 = vpop.f32.mrb[0].mxu0
      %4557 = vmatprep.mubr.bf16.mxu0 0
      %4558 = vmatmul.mubr.bf16.gmra.mrb[0].mxu0 %v4465
      %v4559 = vpop.f32.mrb[0].mxu0
      %v4560 = vadd.f32 0.0, %v4559
      %v4561 = vpop.f32.mrb[0].mxu0
      %v4562 = vpop.f32.mrb[0].mxu0
      %v4563 = vadd.f32 0.0, %v4562
      %v4564 = vpop.f32.mrb[0].mxu0
      %4565 = vmatprep.mubr.bf16.mxu0 0
      %4566 = vmatmul.mubr.bf16.gmra.mrb[0].mxu0 %v4468
      %v4567 = vpop.f32.mrb[0].mxu0
      %v4568 = vadd.f32 0.0, %v4567
      %v4569 = vpop.f32.mrb[0].mxu0
      %v4570 = vpop.f32.mrb[0].mxu0
      %v4571 = vadd.f32 0.0, %v4570
      %v4572 = vpop.f32.mrb[0].mxu0
      %4573 = vmatprep.mubr.bf16.mxu0 0
      %4574 = vmatmul.mubr.bf16.gmra.mrb[0].mxu0 %v4471
      %v4575 = vpop.f32.mrb[0].mxu0
      %v4576 = vadd.f32 0.0, %v4575
      %v4577 = vpop.f32.mrb[0].mxu0
      %v4578 = vpop.f32.mrb[0].mxu0
      %v4579 = vadd.f32 0.0, %v4578
      %v4580 = vpop.f32.mrb[0].mxu0
      %4581 = vmatprep.mubr.bf16.mxu0 0
      %4582 = vmatmul.mubr.bf16.gmra.mrb[0].mxu0 %v4474
      %v4583 = vpop.f32.mrb[0].mxu0
      %v4584 = vadd.f32 0.0, %v4583
      %v4585 = vpop.f32.mrb[0].mxu0
      %v4586 = vpop.f32.mrb[0].mxu0
      %v4587 = vadd.f32 0.0, %v4586
      %v4588 = vpop.f32.mrb[0].mxu0
      %4589 = vmatprep.mubr.bf16.mxu0 0
      %4590 = vmatmul.mubr.bf16.gmra.mrb[0].mxu0 %v4477
      %v4591 = vpop.f32.mrb[0].mxu0
      %v4592 = vadd.f32 0.0, %v4591
      %v4593 = vpop.f32.mrb[0].mxu0
      %v4594 = vpop.f32.mrb[0].mxu0
      %v4595 = vadd.f32 0.0, %v4594
      %v4596 = vpop.f32.mrb[0].mxu0
      %4597 = vmatprep.mubr.bf16.mxu0 0
      %4598 = vmatmul.mubr.bf16.gmra.mrb[0].mxu0 %v4480
      %v4599 = vpop.f32.mrb[0].mxu0
      %v4600 = vadd.f32 0.0, %v4599
      %v4601 = vpop.f32.mrb[0].mxu0
      %v4602 = vpop.f32.mrb[0].mxu0
      %v4603 = vadd.f32 0.0, %v4602
      %v4604 = vpop.f32.mrb[0].mxu0
      %4605 = vmatprep.mubr.bf16.mxu0 0
      %4606 = vmatmul.mubr.bf16.gmra.mrb[0].mxu0 %v4483
      %v4607 = vpop.f32.mrb[0].mxu0
      %v4608 = vadd.f32 0.0, %v4607
      %v4609 = vpop.f32.mrb[0].mxu0
      %v4610 = vpop.f32.mrb[0].mxu0
      %v4611 = vadd.f32 0.0, %v4610
      %v4612 = vpop.f32.mrb[0].mxu0
      %4613 = vdwg.mxu0
      %v4614 = vadd.f32 %v4356, %v4520
      %v4615 = vadd.f32 %v4357, %v4523
      %v4616 = vadd.f32 %v4358, %v4528
      %v4617 = vadd.f32 %v4359, %v4531
      %v4618 = vadd.f32 %v4360, %v4536
      %v4619 = vadd.f32 %v4361, %v4539
      %v4620 = vadd.f32 %v4362, %v4544
      %v4621 = vadd.f32 %v4363, %v4547
      %v4622 = vadd.f32 %v4364, %v4552
      %v4623 = vadd.f32 %v4365, %v4555
      %v4624 = vadd.f32 %v4366, %v4560
      %v4625 = vadd.f32 %v4367, %v4563
      %v4626 = vadd.f32 %v4368, %v4568
      %v4627 = vadd.f32 %v4369, %v4571
      %v4628 = vadd.f32 %v4370, %v4576
      %v4629 = vadd.f32 %v4371, %v4579
      %v4630 = vadd.f32 %v4372, %v4584
      %v4631 = vadd.f32 %v4373, %v4587
      %v4632 = vadd.f32 %v4374, %v4592
      %v4633 = vadd.f32 %v4375, %v4595
      %v4634 = vadd.f32 %v4376, %v4600
      %v4635 = vadd.f32 %v4377, %v4603
      %v4636 = vadd.f32 %v4378, %v4608
      %v4637 = vadd.f32 %v4379, %v4611
      %v4638 = vld [vmem:[#allocation2 + $0x12] sm:$0xff]
      %v4639 = vld [vmem:[#allocation2 + $0x1a] sm:$0xff]
      %v4640 = vld [vmem:[#allocation2 + $0x22] sm:$0xff]
      %v4641 = vld [vmem:[#allocation2 + $0x2a] sm:$0xff]
      %v4642 = vld [vmem:[#allocation2 + $0x32] sm:$0xff]
      %v4643 = vld [vmem:[#allocation2 + $0x3a] sm:$0xff]
      %v4644 = vld [vmem:[#allocation2 + $0x42] sm:$0xff]
      %v4645 = vld [vmem:[#allocation2 + $0x4a] sm:$0xff]
      %v4646 = vld [vmem:[#allocation2 + $0x52] sm:$0xff]
      %v4647 = vld [vmem:[#allocation2 + $0x5a] sm:$0xff]
      %v4648 = vld [vmem:[#allocation2 + $0x62] sm:$0xff]
      %v4649 = vld [vmem:[#allocation2 + $0x6a] sm:$0xff]
      %v4650 = vld [vmem:[#allocation2 + $0x72] sm:$0xff]
      %v4651 = vld [vmem:[#allocation2 + $0x7a] sm:$0xff]
      %v4652 = vld [vmem:[#allocation2 + $0x82] sm:$0xff]
      %v4653 = vld [vmem:[#allocation2 + $0x8a] sm:$0xff]
      %v4654 = vld [vmem:[#allocation2 + $0x92] sm:$0xff]
      %v4655 = vld [vmem:[#allocation2 + $0x9a] sm:$0xff]
      %v4656 = vld [vmem:[#allocation2 + $0xa2] sm:$0xff]
      %v4657 = vld [vmem:[#allocation2 + $0xaa] sm:$0xff]
      %v4658 = vld [vmem:[#allocation2 + $0xb2] sm:$0xff]
      %v4659 = vld [vmem:[#allocation2 + $0xba] sm:$0xff]
      %v4660 = vld [vmem:[#allocation2 + $0xc2] sm:$0xff]
      %v4661 = vld [vmem:[#allocation2 + $0xca] sm:$0xff]
      %v4662 = vpack.c.bf16 %v4639, %v4638
      %v4663 = vpack.c.bf16 %v4641, %v4640
      %v4664 = vpack.c.bf16 %v4643, %v4642
      %v4665 = vpack.c.bf16 %v4645, %v4644
      %v4666 = vpack.c.bf16 %v4647, %v4646
      %v4667 = vpack.c.bf16 %v4649, %v4648
      %v4668 = vpack.c.bf16 %v4651, %v4650
      %v4669 = vpack.c.bf16 %v4653, %v4652
      %v4670 = vpack.c.bf16 %v4655, %v4654
      %v4671 = vpack.c.bf16 %v4657, %v4656
      %v4672 = vpack.c.bf16 %v4659, %v4658
      %v4673 = vpack.c.bf16 %v4661, %v4660
      %s4674 = scalar_lea.vmem %s2, 160
      %v4675 = vld [vmem:[%s4674] sm:$0xf]
      %v4676 = vld [vmem:[%s4674 + $0x4] sm:$0xf]
      %v4677 = vld [vmem:[%s4674 + $0x8] sm:$0xf]
      %v4678 = vld [vmem:[%s4674 + $0xc] sm:$0xf]
      %v4679 = vld [vmem:[%s4674 + $0x10] sm:$0xf]
      %v4680 = vld [vmem:[%s4674 + $0x14] sm:$0xf]
      %v4681 = vld [vmem:[%s4674 + $0x18] sm:$0xf]
      %v4682 = vld [vmem:[%s4674 + $0x1c] sm:$0xf]
      %v4691 = vunpack.c.l.b16 %v4675
      %v4692 = vunpack.c.l.b16 %v4676
      %v4693 = vunpack.c.l.b16 %v4677
      %v4694 = vunpack.c.l.b16 %v4678
      %v4695 = vunpack.c.l.b16 %v4679
      %v4696 = vunpack.c.l.b16 %v4680
      %v4697 = vunpack.c.l.b16 %v4681
      %v4698 = vunpack.c.l.b16 %v4682
      %v4699 = vpack.c.b16 %v4692, %v4691
      %v4700 = vpack.c.b16 %v4694, %v4693
      %v4701 = vpack.c.b16 %v4696, %v4695
      %v4702 = vpack.c.b16 %v4698, %v4697
      %v4708 = vsel %vm378, %v4662, 0
      %v4711 = vsel %vm378, %v4663, 0
      %v4714 = vsel %vm378, %v4664, 0
      %v4717 = vsel %vm378, %v4665, 0
      %v4720 = vsel %vm378, %v4666, 0
      %v4723 = vsel %vm378, %v4667, 0
      %v4726 = vsel %vm378, %v4668, 0
      %v4729 = vsel %vm378, %v4669, 0
      %v4732 = vsel %vm378, %v4670, 0
      %v4735 = vsel %vm378, %v4671, 0
      %v4738 = vsel %vm378, %v4672, 0
      %v4741 = vsel %vm378, %v4673, 0
      %4743 = vmatprep.subr.bf16.mxu0 0
      %4744 = vmatpush1.bf16.msra.mxu0 %v4699
      %4745 = vmatprep.subr.bf16.mxu0 0
      %4746 = vmatpush1.bf16.msra.mxu0 %v4700
      %4747 = vmatprep.subr.bf16.mxu0 0
      %4748 = vmatpush1.bf16.msra.mxu0 %v4701
      %4749 = vmatprep.subr.bf16.mxu0 0
      %4750 = vmatpush1.bf16.msra.mxu0 %v4702
      %4751 = vmatprep.subr.bf16.mxu0 0
      %4752 = vmatpush1.bf16.msra.mxu0 0
      %4753 = vmatprep.subr.bf16.mxu0 0
      %4754 = vmatpush1.bf16.msra.mxu0 0
      %4755 = vmatprep.subr.bf16.mxu0 0
      %4756 = vmatpush1.bf16.msra.mxu0 0
      %4757 = vmatprep.subr.bf16.mxu0 0
      %4758 = vmatpush1.bf16.msra.mxu0 0
      %4759 = vmatprep.subr.bf16.mxu0 0
      %4760 = vmatpush1.bf16.msra.mxu0 0
      %4761 = vmatprep.subr.bf16.mxu0 0
      %4762 = vmatpush1.bf16.msra.mxu0 0
      %4763 = vmatprep.subr.bf16.mxu0 0
      %4764 = vmatpush1.bf16.msra.mxu0 0
      %4765 = vmatprep.subr.bf16.mxu0 0
      %4766 = vmatpush1.bf16.msra.mxu0 0
      %4767 = vmatprep.subr.bf16.mxu0 0
      %4768 = vmatpush1.bf16.msra.mxu0 0
      %4769 = vmatprep.subr.bf16.mxu0 0
      %4770 = vmatpush1.bf16.msra.mxu0 0
      %4771 = vmatprep.subr.bf16.mxu0 0
      %4772 = vmatpush1.bf16.msra.mxu0 0
      %4773 = vmatprep.subr.bf16.mxu0 0
      %4774 = vmatpush1.bf16.msra.mxu0 0
      %4775 = vmatprep.mubr.bf16.mxu0 0
      %4776 = vmatmul.mubr.bf16.gmra.mrb[0].mxu0 %v4708
      %v4777 = vpop.f32.mrb[0].mxu0
      %v4778 = vadd.f32 0.0, %v4777
      %v4779 = vpop.f32.mrb[0].mxu0
      %v4780 = vpop.f32.mrb[0].mxu0
      %v4781 = vadd.f32 0.0, %v4780
      %v4782 = vpop.f32.mrb[0].mxu0
      %4783 = vmatprep.mubr.bf16.mxu0 0
      %4784 = vmatmul.mubr.bf16.gmra.mrb[0].mxu0 %v4711
      %v4785 = vpop.f32.mrb[0].mxu0
      %v4786 = vadd.f32 0.0, %v4785
      %v4787 = vpop.f32.mrb[0].mxu0
      %v4788 = vpop.f32.mrb[0].mxu0
      %v4789 = vadd.f32 0.0, %v4788
      %v4790 = vpop.f32.mrb[0].mxu0
      %4791 = vmatprep.mubr.bf16.mxu0 0
      %4792 = vmatmul.mubr.bf16.gmra.mrb[0].mxu0 %v4714
      %v4793 = vpop.f32.mrb[0].mxu0
      %v4794 = vadd.f32 0.0, %v4793
      %v4795 = vpop.f32.mrb[0].mxu0
      %v4796 = vpop.f32.mrb[0].mxu0
      %v4797 = vadd.f32 0.0, %v4796
      %v4798 = vpop.f32.mrb[0].mxu0
      %4799 = vmatprep.mubr.bf16.mxu0 0
      %4800 = vmatmul.mubr.bf16.gmra.mrb[0].mxu0 %v4717
      %v4801 = vpop.f32.mrb[0].mxu0
      %v4802 = vadd.f32 0.0, %v4801
      %v4803 = vpop.f32.mrb[0].mxu0
      %v4804 = vpop.f32.mrb[0].mxu0
      %v4805 = vadd.f32 0.0, %v4804
      %v4806 = vpop.f32.mrb[0].mxu0
      %4807 = vmatprep.mubr.bf16.mxu0 0
      %4808 = vmatmul.mubr.bf16.gmra.mrb[0].mxu0 %v4720
      %v4809 = vpop.f32.mrb[0].mxu0
      %v4810 = vadd.f32 0.0, %v4809
      %v4811 = vpop.f32.mrb[0].mxu0
      %v4812 = vpop.f32.mrb[0].mxu0
      %v4813 = vadd.f32 0.0, %v4812
      %v4814 = vpop.f32.mrb[0].mxu0
      %4815 = vmatprep.mubr.bf16.mxu0 0
      %4816 = vmatmul.mubr.bf16.gmra.mrb[0].mxu0 %v4723
      %v4817 = vpop.f32.mrb[0].mxu0
      %v4818 = vadd.f32 0.0, %v4817
      %v4819 = vpop.f32.mrb[0].mxu0
      %v4820 = vpop.f32.mrb[0].mxu0
      %v4821 = vadd.f32 0.0, %v4820
      %v4822 = vpop.f32.mrb[0].mxu0
      %4823 = vmatprep.mubr.bf16.mxu0 0
      %4824 = vmatmul.mubr.bf16.gmra.mrb[0].mxu0 %v4726
      %v4825 = vpop.f32.mrb[0].mxu0
      %v4826 = vadd.f32 0.0, %v4825
      %v4827 = vpop.f32.mrb[0].mxu0
      %v4828 = vpop.f32.mrb[0].mxu0
      %v4829 = vadd.f32 0.0, %v4828
      %v4830 = vpop.f32.mrb[0].mxu0
      %4831 = vmatprep.mubr.bf16.mxu0 0
      %4832 = vmatmul.mubr.bf16.gmra.mrb[0].mxu0 %v4729
      %v4833 = vpop.f32.mrb[0].mxu0
      %v4834 = vadd.f32 0.0, %v4833
      %v4835 = vpop.f32.mrb[0].mxu0
      %v4836 = vpop.f32.mrb[0].mxu0
      %v4837 = vadd.f32 0.0, %v4836
      %v4838 = vpop.f32.mrb[0].mxu0
      %4839 = vmatprep.mubr.bf16.mxu0 0
      %4840 = vmatmul.mubr.bf16.gmra.mrb[0].mxu0 %v4732
      %v4841 = vpop.f32.mrb[0].mxu0
      %v4842 = vadd.f32 0.0, %v4841
      %v4843 = vpop.f32.mrb[0].mxu0
      %v4844 = vpop.f32.mrb[0].mxu0
      %v4845 = vadd.f32 0.0, %v4844
      %v4846 = vpop.f32.mrb[0].mxu0
      %4847 = vmatprep.mubr.bf16.mxu0 0
      %4848 = vmatmul.mubr.bf16.gmra.mrb[0].mxu0 %v4735
      %v4849 = vpop.f32.mrb[0].mxu0
      %v4850 = vadd.f32 0.0, %v4849
      %v4851 = vpop.f32.mrb[0].mxu0
      %v4852 = vpop.f32.mrb[0].mxu0
      %v4853 = vadd.f32 0.0, %v4852
      %v4854 = vpop.f32.mrb[0].mxu0
      %4855 = vmatprep.mubr.bf16.mxu0 0
      %4856 = vmatmul.mubr.bf16.gmra.mrb[0].mxu0 %v4738
      %v4857 = vpop.f32.mrb[0].mxu0
      %v4858 = vadd.f32 0.0, %v4857
      %v4859 = vpop.f32.mrb[0].mxu0
      %v4860 = vpop.f32.mrb[0].mxu0
      %v4861 = vadd.f32 0.0, %v4860
      %v4862 = vpop.f32.mrb[0].mxu0
      %4863 = vmatprep.mubr.bf16.mxu0 0
      %4864 = vmatmul.mubr.bf16.gmra.mrb[0].mxu0 %v4741
      %v4865 = vpop.f32.mrb[0].mxu0
      %v4866 = vadd.f32 0.0, %v4865
      %v4867 = vpop.f32.mrb[0].mxu0
      %v4868 = vpop.f32.mrb[0].mxu0
      %v4869 = vadd.f32 0.0, %v4868
      %v4870 = vpop.f32.mrb[0].mxu0
      %4871 = vdwg.mxu0
      %v4872 = vadd.f32 %v4614, %v4778
      %v4873 = vadd.f32 %v4615, %v4781
      %v4874 = vadd.f32 %v4616, %v4786
      %v4875 = vadd.f32 %v4617, %v4789
      %v4876 = vadd.f32 %v4618, %v4794
      %v4877 = vadd.f32 %v4619, %v4797
      %v4878 = vadd.f32 %v4620, %v4802
      %v4879 = vadd.f32 %v4621, %v4805
      %v4880 = vadd.f32 %v4622, %v4810
      %v4881 = vadd.f32 %v4623, %v4813
      %v4882 = vadd.f32 %v4624, %v4818
      %v4883 = vadd.f32 %v4625, %v4821
      %v4884 = vadd.f32 %v4626, %v4826
      %v4885 = vadd.f32 %v4627, %v4829
      %v4886 = vadd.f32 %v4628, %v4834
      %v4887 = vadd.f32 %v4629, %v4837
      %v4888 = vadd.f32 %v4630, %v4842
      %v4889 = vadd.f32 %v4631, %v4845
      %v4890 = vadd.f32 %v4632, %v4850
      %v4891 = vadd.f32 %v4633, %v4853
      %v4892 = vadd.f32 %v4634, %v4858
      %v4893 = vadd.f32 %v4635, %v4861
      %v4894 = vadd.f32 %v4636, %v4866
      %v4895 = vadd.f32 %v4637, %v4869
      %v4896 = vld [vmem:[#allocation2 + $0x20] sm:$0xff]
      %v4897 = vld [vmem:[#allocation2 + $0x28] sm:$0xff]
      %v4898 = vld [vmem:[#allocation2 + $0x30] sm:$0xff]
      %v4899 = vld [vmem:[#allocation2 + $0x38] sm:$0xff]
      %v4900 = vld [vmem:[#allocation2 + $0x40] sm:$0xff]
      %v4901 = vld [vmem:[#allocation2 + $0x48] sm:$0xff]
      %v4902 = vld [vmem:[#allocation2 + $0x50] sm:$0xff]
      %v4903 = vld [vmem:[#allocation2 + $0x58] sm:$0xff]
      %v4904 = vld [vmem:[#allocation2 + $0x60] sm:$0xff]
      %v4905 = vld [vmem:[#allocation2 + $0x68] sm:$0xff]
      %v4906 = vld [vmem:[#allocation2 + $0x70] sm:$0xff]
      %v4907 = vld [vmem:[#allocation2 + $0x78] sm:$0xff]
      %v4908 = vld [vmem:[#allocation2 + $0x80] sm:$0xff]
      %v4909 = vld [vmem:[#allocation2 + $0x88] sm:$0xff]
      %v4910 = vld [vmem:[#allocation2 + $0x90] sm:$0xff]
      %v4911 = vld [vmem:[#allocation2 + $0x98] sm:$0xff]
      %v4912 = vld [vmem:[#allocation2 + $0xa0] sm:$0xff]
      %v4913 = vld [vmem:[#allocation2 + $0xa8] sm:$0xff]
      %v4914 = vld [vmem:[#allocation2 + $0xb0] sm:$0xff]
      %v4915 = vld [vmem:[#allocation2 + $0xb8] sm:$0xff]
      %v4916 = vld [vmem:[#allocation2 + $0xc0] sm:$0xff]
      %v4917 = vld [vmem:[#allocation2 + $0xc8] sm:$0xff]
      %v4918 = vld [vmem:[#allocation2 + $0xd0] sm:$0xff]
      %v4919 = vld [vmem:[#allocation2 + $0xd8] sm:$0xff]
      %v4920 = vpack.c.bf16 %v4897, %v4896
      %v4921 = vpack.c.bf16 %v4899, %v4898
      %v4922 = vpack.c.bf16 %v4901, %v4900
      %v4923 = vpack.c.bf16 %v4903, %v4902
      %v4924 = vpack.c.bf16 %v4905, %v4904
      %v4925 = vpack.c.bf16 %v4907, %v4906
      %v4926 = vpack.c.bf16 %v4909, %v4908
      %v4927 = vpack.c.bf16 %v4911, %v4910
      %v4928 = vpack.c.bf16 %v4913, %v4912
      %v4929 = vpack.c.bf16 %v4915, %v4914
      %v4930 = vpack.c.bf16 %v4917, %v4916
      %v4931 = vpack.c.bf16 %v4919, %v4918
      %s4932 = scalar_lea.vmem %s2, 192
      %v4933 = vld [vmem:[%s4932] sm:$0xf]
      %v4934 = vld [vmem:[%s4932 + $0x4] sm:$0xf]
      %v4935 = vld [vmem:[%s4932 + $0x8] sm:$0xf]
      %v4936 = vld [vmem:[%s4932 + $0xc] sm:$0xf]
      %v4937 = vld [vmem:[%s4932 + $0x10] sm:$0xf]
      %v4938 = vld [vmem:[%s4932 + $0x14] sm:$0xf]
      %v4939 = vld [vmem:[%s4932 + $0x18] sm:$0xf]
      %v4940 = vld [vmem:[%s4932 + $0x1c] sm:$0xf]
      %v4949 = vunpack.c.l.b16 %v4933
      %v4950 = vunpack.c.l.b16 %v4934
      %v4951 = vunpack.c.l.b16 %v4935
      %v4952 = vunpack.c.l.b16 %v4936
      %v4953 = vunpack.c.l.b16 %v4937
      %v4954 = vunpack.c.l.b16 %v4938
      %v4955 = vunpack.c.l.b16 %v4939
      %v4956 = vunpack.c.l.b16 %v4940
      %v4957 = vpack.c.b16 %v4950, %v4949
      %v4958 = vpack.c.b16 %v4952, %v4951
      %v4959 = vpack.c.b16 %v4954, %v4953
      %v4960 = vpack.c.b16 %v4956, %v4955
      %v4966 = vsel %vm378, %v4920, 0
      %v4969 = vsel %vm378, %v4921, 0
      %v4972 = vsel %vm378, %v4922, 0
      %v4975 = vsel %vm378, %v4923, 0
      %v4978 = vsel %vm378, %v4924, 0
      %v4981 = vsel %vm378, %v4925, 0
      %v4984 = vsel %vm378, %v4926, 0
      %v4987 = vsel %vm378, %v4927, 0
      %v4990 = vsel %vm378, %v4928, 0
      %v4993 = vsel %vm378, %v4929, 0
      %v4996 = vsel %vm378, %v4930, 0
      %v4999 = vsel %vm378, %v4931, 0
      %5001 = vmatprep.subr.bf16.mxu0 0
      %5002 = vmatpush1.bf16.msra.mxu0 %v4957
      %5003 = vmatprep.subr.bf16.mxu0 0
      %5004 = vmatpush1.bf16.msra.mxu0 %v4958
      %5005 = vmatprep.subr.bf16.mxu0 0
      %5006 = vmatpush1.bf16.msra.mxu0 %v4959
      %5007 = vmatprep.subr.bf16.mxu0 0
      %5008 = vmatpush1.bf16.msra.mxu0 %v4960
      %5009 = vmatprep.subr.bf16.mxu0 0
      %5010 = vmatpush1.bf16.msra.mxu0 0
      %5011 = vmatprep.subr.bf16.mxu0 0
      %5012 = vmatpush1.bf16.msra.mxu0 0
      %5013 = vmatprep.subr.bf16.mxu0 0
      %5014 = vmatpush1.bf16.msra.mxu0 0
      %5015 = vmatprep.subr.bf16.mxu0 0
      %5016 = vmatpush1.bf16.msra.mxu0 0
      %5017 = vmatprep.subr.bf16.mxu0 0
      %5018 = vmatpush1.bf16.msra.mxu0 0
      %5019 = vmatprep.subr.bf16.mxu0 0
      %5020 = vmatpush1.bf16.msra.mxu0 0
      %5021 = vmatprep.subr.bf16.mxu0 0
      %5022 = vmatpush1.bf16.msra.mxu0 0
      %5023 = vmatprep.subr.bf16.mxu0 0
      %5024 = vmatpush1.bf16.msra.mxu0 0
      %5025 = vmatprep.subr.bf16.mxu0 0
      %5026 = vmatpush1.bf16.msra.mxu0 0
      %5027 = vmatprep.subr.bf16.mxu0 0
      %5028 = vmatpush1.bf16.msra.mxu0 0
      %5029 = vmatprep.subr.bf16.mxu0 0
      %5030 = vmatpush1.bf16.msra.mxu0 0
      %5031 = vmatprep.subr.bf16.mxu0 0
      %5032 = vmatpush1.bf16.msra.mxu0 0
      %5033 = vmatprep.mubr.bf16.mxu0 0
      %5034 = vmatmul.mubr.bf16.gmra.mrb[0].mxu0 %v4966
      %v5035 = vpop.f32.mrb[0].mxu0
      %v5036 = vadd.f32 0.0, %v5035
      %v5037 = vpop.f32.mrb[0].mxu0
      %v5038 = vpop.f32.mrb[0].mxu0
      %v5039 = vadd.f32 0.0, %v5038
      %v5040 = vpop.f32.mrb[0].mxu0
      %5041 = vmatprep.mubr.bf16.mxu0 0
      %5042 = vmatmul.mubr.bf16.gmra.mrb[0].mxu0 %v4969
      %v5043 = vpop.f32.mrb[0].mxu0
      %v5044 = vadd.f32 0.0, %v5043
      %v5045 = vpop.f32.mrb[0].mxu0
      %v5046 = vpop.f32.mrb[0].mxu0
      %v5047 = vadd.f32 0.0, %v5046
      %v5048 = vpop.f32.mrb[0].mxu0
      %5049 = vmatprep.mubr.bf16.mxu0 0
      %5050 = vmatmul.mubr.bf16.gmra.mrb[0].mxu0 %v4972
      %v5051 = vpop.f32.mrb[0].mxu0
      %v5052 = vadd.f32 0.0, %v5051
      %v5053 = vpop.f32.mrb[0].mxu0
      %v5054 = vpop.f32.mrb[0].mxu0
      %v5055 = vadd.f32 0.0, %v5054
      %v5056 = vpop.f32.mrb[0].mxu0
      %5057 = vmatprep.mubr.bf16.mxu0 0
      %5058 = vmatmul.mubr.bf16.gmra.mrb[0].mxu0 %v4975
      %v5059 = vpop.f32.mrb[0].mxu0
      %v5060 = vadd.f32 0.0, %v5059
      %v5061 = vpop.f32.mrb[0].mxu0
      %v5062 = vpop.f32.mrb[0].mxu0
      %v5063 = vadd.f32 0.0, %v5062
      %v5064 = vpop.f32.mrb[0].mxu0
      %5065 = vmatprep.mubr.bf16.mxu0 0
      %5066 = vmatmul.mubr.bf16.gmra.mrb[0].mxu0 %v4978
      %v5067 = vpop.f32.mrb[0].mxu0
      %v5068 = vadd.f32 0.0, %v5067
      %v5069 = vpop.f32.mrb[0].mxu0
      %v5070 = vpop.f32.mrb[0].mxu0
      %v5071 = vadd.f32 0.0, %v5070
      %v5072 = vpop.f32.mrb[0].mxu0
      %5073 = vmatprep.mubr.bf16.mxu0 0
      %5074 = vmatmul.mubr.bf16.gmra.mrb[0].mxu0 %v4981
      %v5075 = vpop.f32.mrb[0].mxu0
      %v5076 = vadd.f32 0.0, %v5075
      %v5077 = vpop.f32.mrb[0].mxu0
      %v5078 = vpop.f32.mrb[0].mxu0
      %v5079 = vadd.f32 0.0, %v5078
      %v5080 = vpop.f32.mrb[0].mxu0
      %5081 = vmatprep.mubr.bf16.mxu0 0
      %5082 = vmatmul.mubr.bf16.gmra.mrb[0].mxu0 %v4984
      %v5083 = vpop.f32.mrb[0].mxu0
      %v5084 = vadd.f32 0.0, %v5083
      %v5085 = vpop.f32.mrb[0].mxu0
      %v5086 = vpop.f32.mrb[0].mxu0
      %v5087 = vadd.f32 0.0, %v5086
      %v5088 = vpop.f32.mrb[0].mxu0
      %5089 = vmatprep.mubr.bf16.mxu0 0
      %5090 = vmatmul.mubr.bf16.gmra.mrb[0].mxu0 %v4987
      %v5091 = vpop.f32.mrb[0].mxu0
      %v5092 = vadd.f32 0.0, %v5091
      %v5093 = vpop.f32.mrb[0].mxu0
      %v5094 = vpop.f32.mrb[0].mxu0
      %v5095 = vadd.f32 0.0, %v5094
      %v5096 = vpop.f32.mrb[0].mxu0
      %5097 = vmatprep.mubr.bf16.mxu0 0
      %5098 = vmatmul.mubr.bf16.gmra.mrb[0].mxu0 %v4990
      %v5099 = vpop.f32.mrb[0].mxu0
      %v5100 = vadd.f32 0.0, %v5099
      %v5101 = vpop.f32.mrb[0].mxu0
      %v5102 = vpop.f32.mrb[0].mxu0
      %v5103 = vadd.f32 0.0, %v5102
      %v5104 = vpop.f32.mrb[0].mxu0
      %5105 = vmatprep.mubr.bf16.mxu0 0
      %5106 = vmatmul.mubr.bf16.gmra.mrb[0].mxu0 %v4993
      %v5107 = vpop.f32.mrb[0].mxu0
      %v5108 = vadd.f32 0.0, %v5107
      %v5109 = vpop.f32.mrb[0].mxu0
      %v5110 = vpop.f32.mrb[0].mxu0
      %v5111 = vadd.f32 0.0, %v5110
      %v5112 = vpop.f32.mrb[0].mxu0
      %5113 = vmatprep.mubr.bf16.mxu0 0
      %5114 = vmatmul.mubr.bf16.gmra.mrb[0].mxu0 %v4996
      %v5115 = vpop.f32.mrb[0].mxu0
      %v5116 = vadd.f32 0.0, %v5115
      %v5117 = vpop.f32.mrb[0].mxu0
      %v5118 = vpop.f32.mrb[0].mxu0
      %v5119 = vadd.f32 0.0, %v5118
      %v5120 = vpop.f32.mrb[0].mxu0
      %5121 = vmatprep.mubr.bf16.mxu0 0
      %5122 = vmatmul.mubr.bf16.gmra.mrb[0].mxu0 %v4999
      %v5123 = vpop.f32.mrb[0].mxu0
      %v5124 = vadd.f32 0.0, %v5123
      %v5125 = vpop.f32.mrb[0].mxu0
      %v5126 = vpop.f32.mrb[0].mxu0
      %v5127 = vadd.f32 0.0, %v5126
      %v5128 = vpop.f32.mrb[0].mxu0
      %5129 = vdwg.mxu0
      %v5130 = vadd.f32 %v4872, %v5036
      %v5131 = vadd.f32 %v4873, %v5039
      %v5132 = vadd.f32 %v4874, %v5044
      %v5133 = vadd.f32 %v4875, %v5047
      %v5134 = vadd.f32 %v4876, %v5052
      %v5135 = vadd.f32 %v4877, %v5055
      %v5136 = vadd.f32 %v4878, %v5060
      %v5137 = vadd.f32 %v4879, %v5063
      %v5138 = vadd.f32 %v4880, %v5068
      %v5139 = vadd.f32 %v4881, %v5071
      %v5140 = vadd.f32 %v4882, %v5076
      %v5141 = vadd.f32 %v4883, %v5079
      %v5142 = vadd.f32 %v4884, %v5084
      %v5143 = vadd.f32 %v4885, %v5087
      %v5144 = vadd.f32 %v4886, %v5092
      %v5145 = vadd.f32 %v4887, %v5095
      %v5146 = vadd.f32 %v4888, %v5100
      %v5147 = vadd.f32 %v4889, %v5103
      %v5148 = vadd.f32 %v4890, %v5108
      %v5149 = vadd.f32 %v4891, %v5111
      %v5150 = vadd.f32 %v4892, %v5116
      %v5151 = vadd.f32 %v4893, %v5119
      %v5152 = vadd.f32 %v4894, %v5124
      %v5153 = vadd.f32 %v4895, %v5127
      %v5154 = vld [vmem:[#allocation2 + $0x21] sm:$0xff]
      %v5155 = vld [vmem:[#allocation2 + $0x29] sm:$0xff]
      %v5156 = vld [vmem:[#allocation2 + $0x31] sm:$0xff]
      %v5157 = vld [vmem:[#allocation2 + $0x39] sm:$0xff]
      %v5158 = vld [vmem:[#allocation2 + $0x41] sm:$0xff]
      %v5159 = vld [vmem:[#allocation2 + $0x49] sm:$0xff]
      %v5160 = vld [vmem:[#allocation2 + $0x51] sm:$0xff]
      %v5161 = vld [vmem:[#allocation2 + $0x59] sm:$0xff]
      %v5162 = vld [vmem:[#allocation2 + $0x61] sm:$0xff]
      %v5163 = vld [vmem:[#allocation2 + $0x69] sm:$0xff]
      %v5164 = vld [vmem:[#allocation2 + $0x71] sm:$0xff]
      %v5165 = vld [vmem:[#allocation2 + $0x79] sm:$0xff]
      %v5166 = vld [vmem:[#allocation2 + $0x81] sm:$0xff]
      %v5167 = vld [vmem:[#allocation2 + $0x89] sm:$0xff]
      %v5168 = vld [vmem:[#allocation2 + $0x91] sm:$0xff]
      %v5169 = vld [vmem:[#allocation2 + $0x99] sm:$0xff]
      %v5170 = vld [vmem:[#allocation2 + $0xa1] sm:$0xff]
      %v5171 = vld [vmem:[#allocation2 + $0xa9] sm:$0xff]
      %v5172 = vld [vmem:[#allocation2 + $0xb1] sm:$0xff]
      %v5173 = vld [vmem:[#allocation2 + $0xb9] sm:$0xff]
      %v5174 = vld [vmem:[#allocation2 + $0xc1] sm:$0xff]
      %v5175 = vld [vmem:[#allocation2 + $0xc9] sm:$0xff]
      %v5176 = vld [vmem:[#allocation2 + $0xd1] sm:$0xff]
      %v5177 = vld [vmem:[#allocation2 + $0xd9] sm:$0xff]
      %v5178 = vpack.c.bf16 %v5155, %v5154
      %v5179 = vpack.c.bf16 %v5157, %v5156
      %v5180 = vpack.c.bf16 %v5159, %v5158
      %v5181 = vpack.c.bf16 %v5161, %v5160
      %v5182 = vpack.c.bf16 %v5163, %v5162
      %v5183 = vpack.c.bf16 %v5165, %v5164
      %v5184 = vpack.c.bf16 %v5167, %v5166
      %v5185 = vpack.c.bf16 %v5169, %v5168
      %v5186 = vpack.c.bf16 %v5171, %v5170
      %v5187 = vpack.c.bf16 %v5173, %v5172
      %v5188 = vpack.c.bf16 %v5175, %v5174
      %v5189 = vpack.c.bf16 %v5177, %v5176
      %s5190 = scalar_lea.vmem %s2, 224
      %v5191 = vld [vmem:[%s5190] sm:$0xf]
      %v5192 = vld [vmem:[%s5190 + $0x4] sm:$0xf]
      %v5193 = vld [vmem:[%s5190 + $0x8] sm:$0xf]
      %v5194 = vld [vmem:[%s5190 + $0xc] sm:$0xf]
      %v5195 = vld [vmem:[%s5190 + $0x10] sm:$0xf]
      %v5196 = vld [vmem:[%s5190 + $0x14] sm:$0xf]
      %v5197 = vld [vmem:[%s5190 + $0x18] sm:$0xf]
      %v5198 = vld [vmem:[%s5190 + $0x1c] sm:$0xf]
      %v5207 = vunpack.c.l.b16 %v5191
      %v5208 = vunpack.c.l.b16 %v5192
      %v5209 = vunpack.c.l.b16 %v5193
      %v5210 = vunpack.c.l.b16 %v5194
      %v5211 = vunpack.c.l.b16 %v5195
      %v5212 = vunpack.c.l.b16 %v5196
      %v5213 = vunpack.c.l.b16 %v5197
      %v5214 = vunpack.c.l.b16 %v5198
      %v5215 = vpack.c.b16 %v5208, %v5207
      %v5216 = vpack.c.b16 %v5210, %v5209
      %v5217 = vpack.c.b16 %v5212, %v5211
      %v5218 = vpack.c.b16 %v5214, %v5213
      %v5224 = vsel %vm378, %v5178, 0
      %v5227 = vsel %vm378, %v5179, 0
      %v5230 = vsel %vm378, %v5180, 0
      %v5233 = vsel %vm378, %v5181, 0
      %v5236 = vsel %vm378, %v5182, 0
      %v5239 = vsel %vm378, %v5183, 0
      %v5242 = vsel %vm378, %v5184, 0
      %v5245 = vsel %vm378, %v5185, 0
      %v5248 = vsel %vm378, %v5186, 0
      %v5251 = vsel %vm378, %v5187, 0
      %v5254 = vsel %vm378, %v5188, 0
      %v5257 = vsel %vm378, %v5189, 0
      %5259 = vmatprep.subr.bf16.mxu0 0
      %5260 = vmatpush1.bf16.msra.mxu0 %v5215
      %5261 = vmatprep.subr.bf16.mxu0 0
      %5262 = vmatpush1.bf16.msra.mxu0 %v5216
      %5263 = vmatprep.subr.bf16.mxu0 0
      %5264 = vmatpush1.bf16.msra.mxu0 %v5217
      %5265 = vmatprep.subr.bf16.mxu0 0
      %5266 = vmatpush1.bf16.msra.mxu0 %v5218
      %5267 = vmatprep.subr.bf16.mxu0 0
      %5268 = vmatpush1.bf16.msra.mxu0 0
      %5269 = vmatprep.subr.bf16.mxu0 0
      %5270 = vmatpush1.bf16.msra.mxu0 0
      %5271 = vmatprep.subr.bf16.mxu0 0
      %5272 = vmatpush1.bf16.msra.mxu0 0
      %5273 = vmatprep.subr.bf16.mxu0 0
      %5274 = vmatpush1.bf16.msra.mxu0 0
      %5275 = vmatprep.subr.bf16.mxu0 0
      %5276 = vmatpush1.bf16.msra.mxu0 0
      %5277 = vmatprep.subr.bf16.mxu0 0
      %5278 = vmatpush1.bf16.msra.mxu0 0
      %5279 = vmatprep.subr.bf16.mxu0 0
      %5280 = vmatpush1.bf16.msra.mxu0 0
      %5281 = vmatprep.subr.bf16.mxu0 0
      %5282 = vmatpush1.bf16.msra.mxu0 0
      %5283 = vmatprep.subr.bf16.mxu0 0
      %5284 = vmatpush1.bf16.msra.mxu0 0
      %5285 = vmatprep.subr.bf16.mxu0 0
      %5286 = vmatpush1.bf16.msra.mxu0 0
      %5287 = vmatprep.subr.bf16.mxu0 0
      %5288 = vmatpush1.bf16.msra.mxu0 0
      %5289 = vmatprep.subr.bf16.mxu0 0
      %5290 = vmatpush1.bf16.msra.mxu0 0
      %5291 = vmatprep.mubr.bf16.mxu0 0
      %5292 = vmatmul.mubr.bf16.gmra.mrb[0].mxu0 %v5224
      %v5293 = vpop.f32.mrb[0].mxu0
      %v5294 = vadd.f32 0.0, %v5293
      %v5295 = vpop.f32.mrb[0].mxu0
      %v5296 = vpop.f32.mrb[0].mxu0
      %v5297 = vadd.f32 0.0, %v5296
      %v5298 = vpop.f32.mrb[0].mxu0
      %5299 = vmatprep.mubr.bf16.mxu0 0
      %5300 = vmatmul.mubr.bf16.gmra.mrb[0].mxu0 %v5227
      %v5301 = vpop.f32.mrb[0].mxu0
      %v5302 = vadd.f32 0.0, %v5301
      %v5303 = vpop.f32.mrb[0].mxu0
      %v5304 = vpop.f32.mrb[0].mxu0
      %v5305 = vadd.f32 0.0, %v5304
      %v5306 = vpop.f32.mrb[0].mxu0
      %5307 = vmatprep.mubr.bf16.mxu0 0
      %5308 = vmatmul.mubr.bf16.gmra.mrb[0].mxu0 %v5230
      %v5309 = vpop.f32.mrb[0].mxu0
      %v5310 = vadd.f32 0.0, %v5309
      %v5311 = vpop.f32.mrb[0].mxu0
      %v5312 = vpop.f32.mrb[0].mxu0
      %v5313 = vadd.f32 0.0, %v5312
      %v5314 = vpop.f32.mrb[0].mxu0
      %5315 = vmatprep.mubr.bf16.mxu0 0
      %5316 = vmatmul.mubr.bf16.gmra.mrb[0].mxu0 %v5233
      %v5317 = vpop.f32.mrb[0].mxu0
      %v5318 = vadd.f32 0.0, %v5317
      %v5319 = vpop.f32.mrb[0].mxu0
      %v5320 = vpop.f32.mrb[0].mxu0
      %v5321 = vadd.f32 0.0, %v5320
      %v5322 = vpop.f32.mrb[0].mxu0
      %5323 = vmatprep.mubr.bf16.mxu0 0
      %5324 = vmatmul.mubr.bf16.gmra.mrb[0].mxu0 %v5236
      %v5325 = vpop.f32.mrb[0].mxu0
      %v5326 = vadd.f32 0.0, %v5325
      %v5327 = vpop.f32.mrb[0].mxu0
      %v5328 = vpop.f32.mrb[0].mxu0
      %v5329 = vadd.f32 0.0, %v5328
      %v5330 = vpop.f32.mrb[0].mxu0
      %5331 = vmatprep.mubr.bf16.mxu0 0
      %5332 = vmatmul.mubr.bf16.gmra.mrb[0].mxu0 %v5239
      %v5333 = vpop.f32.mrb[0].mxu0
      %v5334 = vadd.f32 0.0, %v5333
      %v5335 = vpop.f32.mrb[0].mxu0
      %v5336 = vpop.f32.mrb[0].mxu0
      %v5337 = vadd.f32 0.0, %v5336
      %v5338 = vpop.f32.mrb[0].mxu0
      %5339 = vmatprep.mubr.bf16.mxu0 0
      %5340 = vmatmul.mubr.bf16.gmra.mrb[0].mxu0 %v5242
      %v5341 = vpop.f32.mrb[0].mxu0
      %v5342 = vadd.f32 0.0, %v5341
      %v5343 = vpop.f32.mrb[0].mxu0
      %v5344 = vpop.f32.mrb[0].mxu0
      %v5345 = vadd.f32 0.0, %v5344
      %v5346 = vpop.f32.mrb[0].mxu0
      %5347 = vmatprep.mubr.bf16.mxu0 0
      %5348 = vmatmul.mubr.bf16.gmra.mrb[0].mxu0 %v5245
      %v5349 = vpop.f32.mrb[0].mxu0
      %v5350 = vadd.f32 0.0, %v5349
      %v5351 = vpop.f32.mrb[0].mxu0
      %v5352 = vpop.f32.mrb[0].mxu0
      %v5353 = vadd.f32 0.0, %v5352
      %v5354 = vpop.f32.mrb[0].mxu0
      %5355 = vmatprep.mubr.bf16.mxu0 0
      %5356 = vmatmul.mubr.bf16.gmra.mrb[0].mxu0 %v5248
      %v5357 = vpop.f32.mrb[0].mxu0
      %v5358 = vadd.f32 0.0, %v5357
      %v5359 = vpop.f32.mrb[0].mxu0
      %v5360 = vpop.f32.mrb[0].mxu0
      %v5361 = vadd.f32 0.0, %v5360
      %v5362 = vpop.f32.mrb[0].mxu0
      %5363 = vmatprep.mubr.bf16.mxu0 0
      %5364 = vmatmul.mubr.bf16.gmra.mrb[0].mxu0 %v5251
      %v5365 = vpop.f32.mrb[0].mxu0
      %v5366 = vadd.f32 0.0, %v5365
      %v5367 = vpop.f32.mrb[0].mxu0
      %v5368 = vpop.f32.mrb[0].mxu0
      %v5369 = vadd.f32 0.0, %v5368
      %v5370 = vpop.f32.mrb[0].mxu0
      %5371 = vmatprep.mubr.bf16.mxu0 0
      %5372 = vmatmul.mubr.bf16.gmra.mrb[0].mxu0 %v5254
      %v5373 = vpop.f32.mrb[0].mxu0
      %v5374 = vadd.f32 0.0, %v5373
      %v5375 = vpop.f32.mrb[0].mxu0
      %v5376 = vpop.f32.mrb[0].mxu0
      %v5377 = vadd.f32 0.0, %v5376
      %v5378 = vpop.f32.mrb[0].mxu0
      %5379 = vmatprep.mubr.bf16.mxu0 0
      %5380 = vmatmul.mubr.bf16.gmra.mrb[0].mxu0 %v5257
      %v5381 = vpop.f32.mrb[0].mxu0
      %v5382 = vadd.f32 0.0, %v5381
      %v5383 = vpop.f32.mrb[0].mxu0
      %v5384 = vpop.f32.mrb[0].mxu0
      %v5385 = vadd.f32 0.0, %v5384
      %v5386 = vpop.f32.mrb[0].mxu0
      %5387 = vdwg.mxu0
      %v5388 = vadd.f32 %v5130, %v5294
      %v5389 = vadd.f32 %v5131, %v5297
      %v5390 = vadd.f32 %v5132, %v5302
      %v5391 = vadd.f32 %v5133, %v5305
      %v5392 = vadd.f32 %v5134, %v5310
      %v5393 = vadd.f32 %v5135, %v5313
      %v5394 = vadd.f32 %v5136, %v5318
      %v5395 = vadd.f32 %v5137, %v5321
      %v5396 = vadd.f32 %v5138, %v5326
      %v5397 = vadd.f32 %v5139, %v5329
      %v5398 = vadd.f32 %v5140, %v5334
      %v5399 = vadd.f32 %v5141, %v5337
      %v5400 = vadd.f32 %v5142, %v5342
      %v5401 = vadd.f32 %v5143, %v5345
      %v5402 = vadd.f32 %v5144, %v5350
      %v5403 = vadd.f32 %v5145, %v5353
      %v5404 = vadd.f32 %v5146, %v5358
      %v5405 = vadd.f32 %v5147, %v5361
      %v5406 = vadd.f32 %v5148, %v5366
      %v5407 = vadd.f32 %v5149, %v5369
      %v5408 = vadd.f32 %v5150, %v5374
      %v5409 = vadd.f32 %v5151, %v5377
      %v5410 = vadd.f32 %v5152, %v5382
      %v5411 = vadd.f32 %v5153, %v5385
      %v5412 = vld [vmem:[#allocation2 + $0x22] sm:$0xff]
      %v5413 = vld [vmem:[#allocation2 + $0x2a] sm:$0xff]
      %v5414 = vld [vmem:[#allocation2 + $0x32] sm:$0xff]
      %v5415 = vld [vmem:[#allocation2 + $0x3a] sm:$0xff]
      %v5416 = vld [vmem:[#allocation2 + $0x42] sm:$0xff]
      %v5417 = vld [vmem:[#allocation2 + $0x4a] sm:$0xff]
      %v5418 = vld [vmem:[#allocation2 + $0x52] sm:$0xff]
      %v5419 = vld [vmem:[#allocation2 + $0x5a] sm:$0xff]
      %v5420 = vld [vmem:[#allocation2 + $0x62] sm:$0xff]
      %v5421 = vld [vmem:[#allocation2 + $0x6a] sm:$0xff]
      %v5422 = vld [vmem:[#allocation2 + $0x72] sm:$0xff]
      %v5423 = vld [vmem:[#allocation2 + $0x7a] sm:$0xff]
      %v5424 = vld [vmem:[#allocation2 + $0x82] sm:$0xff]
      %v5425 = vld [vmem:[#allocation2 + $0x8a] sm:$0xff]
      %v5426 = vld [vmem:[#allocation2 + $0x92] sm:$0xff]
      %v5427 = vld [vmem:[#allocation2 + $0x9a] sm:$0xff]
      %v5428 = vld [vmem:[#allocation2 + $0xa2] sm:$0xff]
      %v5429 = vld [vmem:[#allocation2 + $0xaa] sm:$0xff]
      %v5430 = vld [vmem:[#allocation2 + $0xb2] sm:$0xff]
      %v5431 = vld [vmem:[#allocation2 + $0xba] sm:$0xff]
      %v5432 = vld [vmem:[#allocation2 + $0xc2] sm:$0xff]
      %v5433 = vld [vmem:[#allocation2 + $0xca] sm:$0xff]
      %v5434 = vld [vmem:[#allocation2 + $0xd2] sm:$0xff]
      %v5435 = vld [vmem:[#allocation2 + $0xda] sm:$0xff]
      %v5436 = vpack.c.bf16 %v5413, %v5412
      %v5437 = vpack.c.bf16 %v5415, %v5414
      %v5438 = vpack.c.bf16 %v5417, %v5416
      %v5439 = vpack.c.bf16 %v5419, %v5418
      %v5440 = vpack.c.bf16 %v5421, %v5420
      %v5441 = vpack.c.bf16 %v5423, %v5422
      %v5442 = vpack.c.bf16 %v5425, %v5424
      %v5443 = vpack.c.bf16 %v5427, %v5426
      %v5444 = vpack.c.bf16 %v5429, %v5428
      %v5445 = vpack.c.bf16 %v5431, %v5430
      %v5446 = vpack.c.bf16 %v5433, %v5432
      %v5447 = vpack.c.bf16 %v5435, %v5434
      %s5448 = scalar_lea.vmem %s2, 256
      %v5449 = vld [vmem:[%s5448] sm:$0xf]
      %v5450 = vld [vmem:[%s5448 + $0x4] sm:$0xf]
      %v5451 = vld [vmem:[%s5448 + $0x8] sm:$0xf]
      %v5452 = vld [vmem:[%s5448 + $0xc] sm:$0xf]
      %v5453 = vld [vmem:[%s5448 + $0x10] sm:$0xf]
      %v5454 = vld [vmem:[%s5448 + $0x14] sm:$0xf]
      %v5455 = vld [vmem:[%s5448 + $0x18] sm:$0xf]
      %v5456 = vld [vmem:[%s5448 + $0x1c] sm:$0xf]
      %v5465 = vunpack.c.l.b16 %v5449
      %v5466 = vunpack.c.l.b16 %v5450
      %v5467 = vunpack.c.l.b16 %v5451
      %v5468 = vunpack.c.l.b16 %v5452
      %v5469 = vunpack.c.l.b16 %v5453
      %v5470 = vunpack.c.l.b16 %v5454
      %v5471 = vunpack.c.l.b16 %v5455
      %v5472 = vunpack.c.l.b16 %v5456
      %v5473 = vpack.c.b16 %v5466, %v5465
      %v5474 = vpack.c.b16 %v5468, %v5467
      %v5475 = vpack.c.b16 %v5470, %v5469
      %v5476 = vpack.c.b16 %v5472, %v5471
      %v5482 = vsel %vm378, %v5436, 0
      %v5485 = vsel %vm378, %v5437, 0
      %v5488 = vsel %vm378, %v5438, 0
      %v5491 = vsel %vm378, %v5439, 0
      %v5494 = vsel %vm378, %v5440, 0
      %v5497 = vsel %vm378, %v5441, 0
      %v5500 = vsel %vm378, %v5442, 0
      %v5503 = vsel %vm378, %v5443, 0
      %v5506 = vsel %vm378, %v5444, 0
      %v5509 = vsel %vm378, %v5445, 0
      %v5512 = vsel %vm378, %v5446, 0
      %v5515 = vsel %vm378, %v5447, 0
      %5517 = vmatprep.subr.bf16.mxu0 0
      %5518 = vmatpush1.bf16.msra.mxu0 %v5473
      %5519 = vmatprep.subr.bf16.mxu0 0
      %5520 = vmatpush1.bf16.msra.mxu0 %v5474
      %5521 = vmatprep.subr.bf16.mxu0 0
      %5522 = vmatpush1.bf16.msra.mxu0 %v5475
      %5523 = vmatprep.subr.bf16.mxu0 0
      %5524 = vmatpush1.bf16.msra.mxu0 %v5476
      %5525 = vmatprep.subr.bf16.mxu0 0
      %5526 = vmatpush1.bf16.msra.mxu0 0
      %5527 = vmatprep.subr.bf16.mxu0 0
      %5528 = vmatpush1.bf16.msra.mxu0 0
      %5529 = vmatprep.subr.bf16.mxu0 0
      %5530 = vmatpush1.bf16.msra.mxu0 0
      %5531 = vmatprep.subr.bf16.mxu0 0
      %5532 = vmatpush1.bf16.msra.mxu0 0
      %5533 = vmatprep.subr.bf16.mxu0 0
      %5534 = vmatpush1.bf16.msra.mxu0 0
      %5535 = vmatprep.subr.bf16.mxu0 0
      %5536 = vmatpush1.bf16.msra.mxu0 0
      %5537 = vmatprep.subr.bf16.mxu0 0
      %5538 = vmatpush1.bf16.msra.mxu0 0
      %5539 = vmatprep.subr.bf16.mxu0 0
      %5540 = vmatpush1.bf16.msra.mxu0 0
      %5541 = vmatprep.subr.bf16.mxu0 0
      %5542 = vmatpush1.bf16.msra.mxu0 0
      %5543 = vmatprep.subr.bf16.mxu0 0
      %5544 = vmatpush1.bf16.msra.mxu0 0
      %5545 = vmatprep.subr.bf16.mxu0 0
      %5546 = vmatpush1.bf16.msra.mxu0 0
      %5547 = vmatprep.subr.bf16.mxu0 0
      %5548 = vmatpush1.bf16.msra.mxu0 0
      %5549 = vmatprep.mubr.bf16.mxu0 0
      %5550 = vmatmul.mubr.bf16.gmra.mrb[0].mxu0 %v5482
      %v5551 = vpop.f32.mrb[0].mxu0
      %v5552 = vadd.f32 0.0, %v5551
      %v5553 = vpop.f32.mrb[0].mxu0
      %v5554 = vpop.f32.mrb[0].mxu0
      %v5555 = vadd.f32 0.0, %v5554
      %v5556 = vpop.f32.mrb[0].mxu0
      %5557 = vmatprep.mubr.bf16.mxu0 0
      %5558 = vmatmul.mubr.bf16.gmra.mrb[0].mxu0 %v5485
      %v5559 = vpop.f32.mrb[0].mxu0
      %v5560 = vadd.f32 0.0, %v5559
      %v5561 = vpop.f32.mrb[0].mxu0
      %v5562 = vpop.f32.mrb[0].mxu0
      %v5563 = vadd.f32 0.0, %v5562
      %v5564 = vpop.f32.mrb[0].mxu0
      %5565 = vmatprep.mubr.bf16.mxu0 0
      %5566 = vmatmul.mubr.bf16.gmra.mrb[0].mxu0 %v5488
      %v5567 = vpop.f32.mrb[0].mxu0
      %v5568 = vadd.f32 0.0, %v5567
      %v5569 = vpop.f32.mrb[0].mxu0
      %v5570 = vpop.f32.mrb[0].mxu0
      %v5571 = vadd.f32 0.0, %v5570
      %v5572 = vpop.f32.mrb[0].mxu0
      %5573 = vmatprep.mubr.bf16.mxu0 0
      %5574 = vmatmul.mubr.bf16.gmra.mrb[0].mxu0 %v5491
      %v5575 = vpop.f32.mrb[0].mxu0
      %v5576 = vadd.f32 0.0, %v5575
      %v5577 = vpop.f32.mrb[0].mxu0
      %v5578 = vpop.f32.mrb[0].mxu0
      %v5579 = vadd.f32 0.0, %v5578
      %v5580 = vpop.f32.mrb[0].mxu0
      %5581 = vmatprep.mubr.bf16.mxu0 0
      %5582 = vmatmul.mubr.bf16.gmra.mrb[0].mxu0 %v5494
      %v5583 = vpop.f32.mrb[0].mxu0
      %v5584 = vadd.f32 0.0, %v5583
      %v5585 = vpop.f32.mrb[0].mxu0
      %v5586 = vpop.f32.mrb[0].mxu0
      %v5587 = vadd.f32 0.0, %v5586
      %v5588 = vpop.f32.mrb[0].mxu0
      %5589 = vmatprep.mubr.bf16.mxu0 0
      %5590 = vmatmul.mubr.bf16.gmra.mrb[0].mxu0 %v5497
      %v5591 = vpop.f32.mrb[0].mxu0
      %v5592 = vadd.f32 0.0, %v5591
      %v5593 = vpop.f32.mrb[0].mxu0
      %v5594 = vpop.f32.mrb[0].mxu0
      %v5595 = vadd.f32 0.0, %v5594
      %v5596 = vpop.f32.mrb[0].mxu0
      %5597 = vmatprep.mubr.bf16.mxu0 0
      %5598 = vmatmul.mubr.bf16.gmra.mrb[0].mxu0 %v5500
      %v5599 = vpop.f32.mrb[0].mxu0
      %v5600 = vadd.f32 0.0, %v5599
      %v5601 = vpop.f32.mrb[0].mxu0
      %v5602 = vpop.f32.mrb[0].mxu0
      %v5603 = vadd.f32 0.0, %v5602
      %v5604 = vpop.f32.mrb[0].mxu0
      %5605 = vmatprep.mubr.bf16.mxu0 0
      %5606 = vmatmul.mubr.bf16.gmra.mrb[0].mxu0 %v5503
      %v5607 = vpop.f32.mrb[0].mxu0
      %v5608 = vadd.f32 0.0, %v5607
      %v5609 = vpop.f32.mrb[0].mxu0
      %v5610 = vpop.f32.mrb[0].mxu0
      %v5611 = vadd.f32 0.0, %v5610
      %v5612 = vpop.f32.mrb[0].mxu0
      %5613 = vmatprep.mubr.bf16.mxu0 0
      %5614 = vmatmul.mubr.bf16.gmra.mrb[0].mxu0 %v5506
      %v5615 = vpop.f32.mrb[0].mxu0
      %v5616 = vadd.f32 0.0, %v5615
      %v5617 = vpop.f32.mrb[0].mxu0
      %v5618 = vpop.f32.mrb[0].mxu0
      %v5619 = vadd.f32 0.0, %v5618
      %v5620 = vpop.f32.mrb[0].mxu0
      %5621 = vmatprep.mubr.bf16.mxu0 0
      %5622 = vmatmul.mubr.bf16.gmra.mrb[0].mxu0 %v5509
      %v5623 = vpop.f32.mrb[0].mxu0
      %v5624 = vadd.f32 0.0, %v5623
      %v5625 = vpop.f32.mrb[0].mxu0
      %v5626 = vpop.f32.mrb[0].mxu0
      %v5627 = vadd.f32 0.0, %v5626
      %v5628 = vpop.f32.mrb[0].mxu0
      %5629 = vmatprep.mubr.bf16.mxu0 0
      %5630 = vmatmul.mubr.bf16.gmra.mrb[0].mxu0 %v5512
      %v5631 = vpop.f32.mrb[0].mxu0
      %v5632 = vadd.f32 0.0, %v5631
      %v5633 = vpop.f32.mrb[0].mxu0
      %v5634 = vpop.f32.mrb[0].mxu0
      %v5635 = vadd.f32 0.0, %v5634
      %v5636 = vpop.f32.mrb[0].mxu0
      %5637 = vmatprep.mubr.bf16.mxu0 0
      %5638 = vmatmul.mubr.bf16.gmra.mrb[0].mxu0 %v5515
      %v5639 = vpop.f32.mrb[0].mxu0
      %v5640 = vadd.f32 0.0, %v5639
      %v5641 = vpop.f32.mrb[0].mxu0
      %v5642 = vpop.f32.mrb[0].mxu0
      %v5643 = vadd.f32 0.0, %v5642
      %v5644 = vpop.f32.mrb[0].mxu0
      %5645 = vdwg.mxu0
      %v5646 = vadd.f32 %v5388, %v5552
      %v5647 = vadd.f32 %v5389, %v5555
      %v5648 = vadd.f32 %v5390, %v5560
      %v5649 = vadd.f32 %v5391, %v5563
      %v5650 = vadd.f32 %v5392, %v5568
      %v5651 = vadd.f32 %v5393, %v5571
      %v5652 = vadd.f32 %v5394, %v5576
      %v5653 = vadd.f32 %v5395, %v5579
      %v5654 = vadd.f32 %v5396, %v5584
      %v5655 = vadd.f32 %v5397, %v5587
      %v5656 = vadd.f32 %v5398, %v5592
      %v5657 = vadd.f32 %v5399, %v5595
      %v5658 = vadd.f32 %v5400, %v5600
      %v5659 = vadd.f32 %v5401, %v5603
      %v5660 = vadd.f32 %v5402, %v5608
      %v5661 = vadd.f32 %v5403, %v5611
      %v5662 = vadd.f32 %v5404, %v5616
      %v5663 = vadd.f32 %v5405, %v5619
      %v5664 = vadd.f32 %v5406, %v5624
      %v5665 = vadd.f32 %v5407, %v5627
      %v5666 = vadd.f32 %v5408, %v5632
      %v5667 = vadd.f32 %v5409, %v5635
      %v5668 = vadd.f32 %v5410, %v5640
      %v5669 = vadd.f32 %v5411, %v5643
      %v5670 = vld [vmem:[%s3 + $0x3] sm:$0x1]
      %v5671 = vlaneseq
      %v5672 = vshrl.u32 %v5671, 7
      %v5673 = vsub.s32 0, %v5672
      %v5674 = vrot.slane %v5670, %v5673
      %v5675 = vadd.f32 %v5646, %v5674
      %v5676 = vadd.f32 %v5647, %v5674
      %v5677 = vadd.f32 %v5648, %v5674
      %v5678 = vadd.f32 %v5649, %v5674
      %v5679 = vadd.f32 %v5650, %v5674
      %v5680 = vadd.f32 %v5651, %v5674
      %v5681 = vadd.f32 %v5652, %v5674
      %v5682 = vadd.f32 %v5653, %v5674
      %v5683 = vadd.f32 %v5654, %v5674
      %v5684 = vadd.f32 %v5655, %v5674
      %v5685 = vadd.f32 %v5656, %v5674
      %v5686 = vadd.f32 %v5657, %v5674
      %v5687 = vadd.f32 %v5658, %v5674
      %v5688 = vadd.f32 %v5659, %v5674
      %v5689 = vadd.f32 %v5660, %v5674
      %v5690 = vadd.f32 %v5661, %v5674
      %v5691 = vadd.f32 %v5662, %v5674
      %v5692 = vadd.f32 %v5663, %v5674
      %v5693 = vadd.f32 %v5664, %v5674
      %v5694 = vadd.f32 %v5665, %v5674
      %v5695 = vadd.f32 %v5666, %v5674
      %v5696 = vadd.f32 %v5667, %v5674
      %v5697 = vadd.f32 %v5668, %v5674
      %v5698 = vadd.f32 %v5669, %v5674
      %v5699 = vld [vmem:[%s5] sm:$0xff]
      %v5700 = vld [vmem:[%s5 + $0x8] sm:$0xff]
      %v5701 = vld [vmem:[%s5 + $0x10] sm:$0xff]
      %v5702 = vld [vmem:[%s5 + $0x18] sm:$0xff]
      %v5703 = vld [vmem:[%s5 + $0x20] sm:$0xff]
      %v5704 = vld [vmem:[%s5 + $0x28] sm:$0xff]
      %v5705 = vld [vmem:[%s5 + $0x30] sm:$0xff]
      %v5706 = vld [vmem:[%s5 + $0x38] sm:$0xff]
      %v5707 = vld [vmem:[%s5 + $0x40] sm:$0xff]
      %v5708 = vld [vmem:[%s5 + $0x48] sm:$0xff]
      %v5709 = vld [vmem:[%s5 + $0x50] sm:$0xff]
      %v5710 = vld [vmem:[%s5 + $0x58] sm:$0xff]
      %v5711 = vld [vmem:[%s5 + $0x60] sm:$0xff]
      %v5712 = vld [vmem:[%s5 + $0x68] sm:$0xff]
      %v5713 = vld [vmem:[%s5 + $0x70] sm:$0xff]
      %v5714 = vld [vmem:[%s5 + $0x78] sm:$0xff]
      %v5715 = vld [vmem:[%s5 + $0x80] sm:$0xff]
      %v5716 = vld [vmem:[%s5 + $0x88] sm:$0xff]
      %v5717 = vld [vmem:[%s5 + $0x90] sm:$0xff]
      %v5718 = vld [vmem:[%s5 + $0x98] sm:$0xff]
      %v5719 = vld [vmem:[%s5 + $0xa0] sm:$0xff]
      %v5720 = vld [vmem:[%s5 + $0xa8] sm:$0xff]
      %v5721 = vld [vmem:[%s5 + $0xb0] sm:$0xff]
      %v5722 = vld [vmem:[%s5 + $0xb8] sm:$0xff]
      %5724 = vset.pattern.permute.xlu0 0
      %5725 = vperm.xlu0 %5724, %v5699
      %v5726 = vpop.permute.xlu0 %5725
      %5729 = vset.pattern.permute.xlu0 0
      %5730 = vperm.xlu0 %5729, %v5700
      %v5731 = vpop.permute.xlu0 %5730
      %5734 = vset.pattern.permute.xlu0 0
      %5735 = vperm.xlu0 %5734, %v5701
      %v5736 = vpop.permute.xlu0 %5735
      %5739 = vset.pattern.permute.xlu0 0
      %5740 = vperm.xlu0 %5739, %v5702
      %v5741 = vpop.permute.xlu0 %5740
      %5744 = vset.pattern.permute.xlu0 0
      %5745 = vperm.xlu0 %5744, %v5703
      %v5746 = vpop.permute.xlu0 %5745
      %5749 = vset.pattern.permute.xlu0 0
      %5750 = vperm.xlu0 %5749, %v5704
      %v5751 = vpop.permute.xlu0 %5750
      %5754 = vset.pattern.permute.xlu0 0
      %5755 = vperm.xlu0 %5754, %v5705
      %v5756 = vpop.permute.xlu0 %5755
      %5759 = vset.pattern.permute.xlu0 0
      %5760 = vperm.xlu0 %5759, %v5706
      %v5761 = vpop.permute.xlu0 %5760
      %5764 = vset.pattern.permute.xlu0 0
      %5765 = vperm.xlu0 %5764, %v5707
      %v5766 = vpop.permute.xlu0 %5765
      %5769 = vset.pattern.permute.xlu0 0
      %5770 = vperm.xlu0 %5769, %v5708
      %v5771 = vpop.permute.xlu0 %5770
      %5774 = vset.pattern.permute.xlu0 0
      %5775 = vperm.xlu0 %5774, %v5709
      %v5776 = vpop.permute.xlu0 %5775
      %5779 = vset.pattern.permute.xlu0 0
      %5780 = vperm.xlu0 %5779, %v5710
      %v5781 = vpop.permute.xlu0 %5780
      %5784 = vset.pattern.permute.xlu0 0
      %5785 = vperm.xlu0 %5784, %v5711
      %v5786 = vpop.permute.xlu0 %5785
      %5789 = vset.pattern.permute.xlu0 0
      %5790 = vperm.xlu0 %5789, %v5712
      %v5791 = vpop.permute.xlu0 %5790
      %5794 = vset.pattern.permute.xlu0 0
      %5795 = vperm.xlu0 %5794, %v5713
      %v5796 = vpop.permute.xlu0 %5795
      %5799 = vset.pattern.permute.xlu0 0
      %5800 = vperm.xlu0 %5799, %v5714
      %v5801 = vpop.permute.xlu0 %5800
      %5804 = vset.pattern.permute.xlu0 0
      %5805 = vperm.xlu0 %5804, %v5715
      %v5806 = vpop.permute.xlu0 %5805
      %5809 = vset.pattern.permute.xlu0 0
      %5810 = vperm.xlu0 %5809, %v5716
      %v5811 = vpop.permute.xlu0 %5810
      %5814 = vset.pattern.permute.xlu0 0
      %5815 = vperm.xlu0 %5814, %v5717
      %v5816 = vpop.permute.xlu0 %5815
      %5819 = vset.pattern.permute.xlu0 0
      %5820 = vperm.xlu0 %5819, %v5718
      %v5821 = vpop.permute.xlu0 %5820
      %5824 = vset.pattern.permute.xlu0 0
      %5825 = vperm.xlu0 %5824, %v5719
      %v5826 = vpop.permute.xlu0 %5825
      %5829 = vset.pattern.permute.xlu0 0
      %5830 = vperm.xlu0 %5829, %v5720
      %v5831 = vpop.permute.xlu0 %5830
      %5834 = vset.pattern.permute.xlu0 0
      %5835 = vperm.xlu0 %5834, %v5721
      %v5836 = vpop.permute.xlu0 %5835
      %5839 = vset.pattern.permute.xlu0 0
      %5840 = vperm.xlu0 %5839, %v5722
      %v5841 = vpop.permute.xlu0 %5840
      %v5843 = vmul.f32 %v5675, %v5726
      %v5844 = vmul.f32 %v5676, %v5731
      %v5845 = vmul.f32 %v5677, %v5736
      %v5846 = vmul.f32 %v5678, %v5741
      %v5847 = vmul.f32 %v5679, %v5746
      %v5848 = vmul.f32 %v5680, %v5751
      %v5849 = vmul.f32 %v5681, %v5756
      %v5850 = vmul.f32 %v5682, %v5761
      %v5851 = vmul.f32 %v5683, %v5766
      %v5852 = vmul.f32 %v5684, %v5771
      %v5853 = vmul.f32 %v5685, %v5776
      %v5854 = vmul.f32 %v5686, %v5781
      %v5855 = vmul.f32 %v5687, %v5786
      %v5856 = vmul.f32 %v5688, %v5791
      %v5857 = vmul.f32 %v5689, %v5796
      %v5858 = vmul.f32 %v5690, %v5801
      %v5859 = vmul.f32 %v5691, %v5806
      %v5860 = vmul.f32 %v5692, %v5811
      %v5861 = vmul.f32 %v5693, %v5816
      %v5862 = vmul.f32 %v5694, %v5821
      %v5863 = vmul.f32 %v5695, %v5826
      %v5864 = vmul.f32 %v5696, %v5831
      %v5865 = vmul.f32 %v5697, %v5836
      %v5866 = vmul.f32 %v5698, %v5841
      %v5867 = vsel %vm378, %v5843, 0.0
      %v5868 = vsel %vm378, %v5844, 0.0
      %v5869 = vadd.f32 %v5867, %v5868
      %v5870 = vsel %vm378, %v5845, 0.0
      %v5871 = vadd.f32 %v5869, %v5870
      %v5872 = vsel %vm378, %v5846, 0.0
      %v5873 = vadd.f32 %v5871, %v5872
      %v5874 = vsel %vm378, %v5847, 0.0
      %v5875 = vadd.f32 %v5873, %v5874
      %v5876 = vsel %vm378, %v5848, 0.0
      %v5877 = vadd.f32 %v5875, %v5876
      %v5878 = vsel %vm378, %v5849, 0.0
      %v5879 = vadd.f32 %v5877, %v5878
      %v5880 = vsel %vm378, %v5850, 0.0
      %v5881 = vadd.f32 %v5879, %v5880
      %v5882 = vsel %vm378, %v5851, 0.0
      %v5883 = vadd.f32 %v5881, %v5882
      %v5884 = vsel %vm378, %v5852, 0.0
      %v5885 = vadd.f32 %v5883, %v5884
      %v5886 = vsel %vm378, %v5853, 0.0
      %v5887 = vadd.f32 %v5885, %v5886
      %v5888 = vsel %vm378, %v5854, 0.0
      %v5889 = vadd.f32 %v5887, %v5888
      %v5890 = vsel %vm378, %v5855, 0.0
      %v5891 = vadd.f32 %v5889, %v5890
      %v5892 = vsel %vm378, %v5856, 0.0
      %v5893 = vadd.f32 %v5891, %v5892
      %v5894 = vsel %vm378, %v5857, 0.0
      %v5895 = vadd.f32 %v5893, %v5894
      %v5896 = vsel %vm378, %v5858, 0.0
      %v5897 = vadd.f32 %v5895, %v5896
      %v5898 = vsel %vm378, %v5859, 0.0
      %v5899 = vadd.f32 %v5897, %v5898
      %v5900 = vsel %vm378, %v5860, 0.0
      %v5901 = vadd.f32 %v5899, %v5900
      %v5902 = vsel %vm378, %v5861, 0.0
      %v5903 = vadd.f32 %v5901, %v5902
      %v5904 = vsel %vm378, %v5862, 0.0
      %v5905 = vadd.f32 %v5903, %v5904
      %v5906 = vsel %vm378, %v5863, 0.0
      %v5907 = vadd.f32 %v5905, %v5906
      %v5908 = vsel %vm378, %v5864, 0.0
      %v5909 = vadd.f32 %v5907, %v5908
      %v5910 = vsel %vm378, %v5865, 0.0
      %v5911 = vadd.f32 %v5909, %v5910
      %v5912 = vsel %vm378, %v5866, 0.0
      %v5913 = vadd.f32 %v5911, %v5912
      %v5914 = vrot.slane %v5913, 4
      %v5915 = vadd.f32 %v5913, %v5914
      %v5916 = vrot.slane %v5915, 2
      %v5917 = vadd.f32 %v5915, %v5916
      %v5918 = vrot.slane %v5917, 1
      %v5919 = vadd.f32 %v5917, %v5918
      %v5920 = vmul.f32 %v5919, 0.0069444445
      %v5921 = vsub.f32 %v5675, %v5920
      %v5922 = vsub.f32 %v5676, %v5920
      %v5923 = vsub.f32 %v5677, %v5920
      %v5924 = vsub.f32 %v5678, %v5920
      %v5925 = vsub.f32 %v5679, %v5920
      %v5926 = vsub.f32 %v5680, %v5920
      %v5927 = vsub.f32 %v5681, %v5920
      %v5928 = vsub.f32 %v5682, %v5920
      %v5929 = vsub.f32 %v5683, %v5920
      %v5930 = vsub.f32 %v5684, %v5920
      %v5931 = vsub.f32 %v5685, %v5920
      %v5932 = vsub.f32 %v5686, %v5920
      %v5933 = vsub.f32 %v5687, %v5920
      %v5934 = vsub.f32 %v5688, %v5920
      %v5935 = vsub.f32 %v5689, %v5920
      %v5936 = vsub.f32 %v5690, %v5920
      %v5937 = vsub.f32 %v5691, %v5920
      %v5938 = vsub.f32 %v5692, %v5920
      %v5939 = vsub.f32 %v5693, %v5920
      %v5940 = vsub.f32 %v5694, %v5920
      %v5941 = vsub.f32 %v5695, %v5920
      %v5942 = vsub.f32 %v5696, %v5920
      %v5943 = vsub.f32 %v5697, %v5920
      %v5944 = vsub.f32 %v5698, %v5920
      %v5945 = vmul.f32 %v5921, %v5921
      %v5946 = vmul.f32 %v5922, %v5922
      %v5947 = vmul.f32 %v5923, %v5923
      %v5948 = vmul.f32 %v5924, %v5924
      %v5949 = vmul.f32 %v5925, %v5925
      %v5950 = vmul.f32 %v5926, %v5926
      %v5951 = vmul.f32 %v5927, %v5927
      %v5952 = vmul.f32 %v5928, %v5928
      %v5953 = vmul.f32 %v5929, %v5929
      %v5954 = vmul.f32 %v5930, %v5930
      %v5955 = vmul.f32 %v5931, %v5931
      %v5956 = vmul.f32 %v5932, %v5932
      %v5957 = vmul.f32 %v5933, %v5933
      %v5958 = vmul.f32 %v5934, %v5934
      %v5959 = vmul.f32 %v5935, %v5935
      %v5960 = vmul.f32 %v5936, %v5936
      %v5961 = vmul.f32 %v5937, %v5937
      %v5962 = vmul.f32 %v5938, %v5938
      %v5963 = vmul.f32 %v5939, %v5939
      %v5964 = vmul.f32 %v5940, %v5940
      %v5965 = vmul.f32 %v5941, %v5941
      %v5966 = vmul.f32 %v5942, %v5942
      %v5967 = vmul.f32 %v5943, %v5943
      %v5968 = vmul.f32 %v5944, %v5944
      %v5969 = vmul.f32 %v5945, %v5726
      %v5970 = vmul.f32 %v5946, %v5731
      %v5971 = vmul.f32 %v5947, %v5736
      %v5972 = vmul.f32 %v5948, %v5741
      %v5973 = vmul.f32 %v5949, %v5746
      %v5974 = vmul.f32 %v5950, %v5751
      %v5975 = vmul.f32 %v5951, %v5756
      %v5976 = vmul.f32 %v5952, %v5761
      %v5977 = vmul.f32 %v5953, %v5766
      %v5978 = vmul.f32 %v5954, %v5771
      %v5979 = vmul.f32 %v5955, %v5776
      %v5980 = vmul.f32 %v5956, %v5781
      %v5981 = vmul.f32 %v5957, %v5786
      %v5982 = vmul.f32 %v5958, %v5791
      %v5983 = vmul.f32 %v5959, %v5796
      %v5984 = vmul.f32 %v5960, %v5801
      %v5985 = vmul.f32 %v5961, %v5806
      %v5986 = vmul.f32 %v5962, %v5811
      %v5987 = vmul.f32 %v5963, %v5816
      %v5988 = vmul.f32 %v5964, %v5821
      %v5989 = vmul.f32 %v5965, %v5826
      %v5990 = vmul.f32 %v5966, %v5831
      %v5991 = vmul.f32 %v5967, %v5836
      %v5992 = vmul.f32 %v5968, %v5841
      %v5993 = vsel %vm378, %v5969, 0.0
      %v5994 = vsel %vm378, %v5970, 0.0
      %v5995 = vadd.f32 %v5993, %v5994
      %v5996 = vsel %vm378, %v5971, 0.0
      %v5997 = vadd.f32 %v5995, %v5996
      %v5998 = vsel %vm378, %v5972, 0.0
      %v5999 = vadd.f32 %v5997, %v5998
      %v6000 = vsel %vm378, %v5973, 0.0
      %v6001 = vadd.f32 %v5999, %v6000
      %v6002 = vsel %vm378, %v5974, 0.0
      %v6003 = vadd.f32 %v6001, %v6002
      %v6004 = vsel %vm378, %v5975, 0.0
      %v6005 = vadd.f32 %v6003, %v6004
      %v6006 = vsel %vm378, %v5976, 0.0
      %v6007 = vadd.f32 %v6005, %v6006
      %v6008 = vsel %vm378, %v5977, 0.0
      %v6009 = vadd.f32 %v6007, %v6008
      %v6010 = vsel %vm378, %v5978, 0.0
      %v6011 = vadd.f32 %v6009, %v6010
      %v6012 = vsel %vm378, %v5979, 0.0
      %v6013 = vadd.f32 %v6011, %v6012
      %v6014 = vsel %vm378, %v5980, 0.0
      %v6015 = vadd.f32 %v6013, %v6014
      %v6016 = vsel %vm378, %v5981, 0.0
      %v6017 = vadd.f32 %v6015, %v6016
      %v6018 = vsel %vm378, %v5982, 0.0
      %v6019 = vadd.f32 %v6017, %v6018
      %v6020 = vsel %vm378, %v5983, 0.0
      %v6021 = vadd.f32 %v6019, %v6020
      %v6022 = vsel %vm378, %v5984, 0.0
      %v6023 = vadd.f32 %v6021, %v6022
      %v6024 = vsel %vm378, %v5985, 0.0
      %v6025 = vadd.f32 %v6023, %v6024
      %v6026 = vsel %vm378, %v5986, 0.0
      %v6027 = vadd.f32 %v6025, %v6026
      %v6028 = vsel %vm378, %v5987, 0.0
      %v6029 = vadd.f32 %v6027, %v6028
      %v6030 = vsel %vm378, %v5988, 0.0
      %v6031 = vadd.f32 %v6029, %v6030
      %v6032 = vsel %vm378, %v5989, 0.0
      %v6033 = vadd.f32 %v6031, %v6032
      %v6034 = vsel %vm378, %v5990, 0.0
      %v6035 = vadd.f32 %v6033, %v6034
      %v6036 = vsel %vm378, %v5991, 0.0
      %v6037 = vadd.f32 %v6035, %v6036
      %v6038 = vsel %vm378, %v5992, 0.0
      %v6039 = vadd.f32 %v6037, %v6038
      %v6040 = vrot.slane %v6039, 4
      %v6041 = vadd.f32 %v6039, %v6040
      %v6042 = vrot.slane %v6041, 2
      %v6043 = vadd.f32 %v6041, %v6042
      %v6044 = vrot.slane %v6043, 1
      %v6045 = vadd.f32 %v6043, %v6044
      %v6046 = vmul.f32 %v6045, 0.0069444445
      %v6047 = vadd.f32 %v6046, 1e-05
      %v6048 = vrsqrt.pop %v6047
      %v6049 = vmul.f32 %v5921, %v6048
      %v6050 = vmul.f32 %v5922, %v6048
      %v6051 = vmul.f32 %v5923, %v6048
      %v6052 = vmul.f32 %v5924, %v6048
      %v6053 = vmul.f32 %v5925, %v6048
      %v6054 = vmul.f32 %v5926, %v6048
      %v6055 = vmul.f32 %v5927, %v6048
      %v6056 = vmul.f32 %v5928, %v6048
      %v6057 = vmul.f32 %v5929, %v6048
      %v6058 = vmul.f32 %v5930, %v6048
      %v6059 = vmul.f32 %v5931, %v6048
      %v6060 = vmul.f32 %v5932, %v6048
      %v6061 = vmul.f32 %v5933, %v6048
      %v6062 = vmul.f32 %v5934, %v6048
      %v6063 = vmul.f32 %v5935, %v6048
      %v6064 = vmul.f32 %v5936, %v6048
      %v6065 = vmul.f32 %v5937, %v6048
      %v6066 = vmul.f32 %v5938, %v6048
      %v6067 = vmul.f32 %v5939, %v6048
      %v6068 = vmul.f32 %v5940, %v6048
      %v6069 = vmul.f32 %v5941, %v6048
      %v6070 = vmul.f32 %v5942, %v6048
      %v6071 = vmul.f32 %v5943, %v6048
      %v6072 = vmul.f32 %v5944, %v6048
      %v6073 = vld [vmem:[%s3 + $0x4] sm:$0x1]
      %v6074 = vlaneseq
      %v6075 = vshrl.u32 %v6074, 7
      %v6076 = vsub.s32 0, %v6075
      %v6077 = vrot.slane %v6073, %v6076
      %v6078 = vmul.f32 %v6049, %v6077
      %v6079 = vmul.f32 %v6050, %v6077
      %v6080 = vmul.f32 %v6051, %v6077
      %v6081 = vmul.f32 %v6052, %v6077
      %v6082 = vmul.f32 %v6053, %v6077
      %v6083 = vmul.f32 %v6054, %v6077
      %v6084 = vmul.f32 %v6055, %v6077
      %v6085 = vmul.f32 %v6056, %v6077
      %v6086 = vmul.f32 %v6057, %v6077
      %v6087 = vmul.f32 %v6058, %v6077
      %v6088 = vmul.f32 %v6059, %v6077
      %v6089 = vmul.f32 %v6060, %v6077
      %v6090 = vmul.f32 %v6061, %v6077
      %v6091 = vmul.f32 %v6062, %v6077
      %v6092 = vmul.f32 %v6063, %v6077
      %v6093 = vmul.f32 %v6064, %v6077
      %v6094 = vmul.f32 %v6065, %v6077
      %v6095 = vmul.f32 %v6066, %v6077
      %v6096 = vmul.f32 %v6067, %v6077
      %v6097 = vmul.f32 %v6068, %v6077
      %v6098 = vmul.f32 %v6069, %v6077
      %v6099 = vmul.f32 %v6070, %v6077
      %v6100 = vmul.f32 %v6071, %v6077
      %v6101 = vmul.f32 %v6072, %v6077
      %v6102 = vld [vmem:[%s3 + $0x5] sm:$0x1]
      %v6103 = vlaneseq
      %v6104 = vshrl.u32 %v6103, 7
      %v6105 = vsub.s32 0, %v6104
      %v6106 = vrot.slane %v6102, %v6105
      %v6107 = vadd.f32 %v6078, %v6106
      %v6108 = vadd.f32 %v6079, %v6106
      %v6109 = vadd.f32 %v6080, %v6106
      %v6110 = vadd.f32 %v6081, %v6106
      %v6111 = vadd.f32 %v6082, %v6106
      %v6112 = vadd.f32 %v6083, %v6106
      %v6113 = vadd.f32 %v6084, %v6106
      %v6114 = vadd.f32 %v6085, %v6106
      %v6115 = vadd.f32 %v6086, %v6106
      %v6116 = vadd.f32 %v6087, %v6106
      %v6117 = vadd.f32 %v6088, %v6106
      %v6118 = vadd.f32 %v6089, %v6106
      %v6119 = vadd.f32 %v6090, %v6106
      %v6120 = vadd.f32 %v6091, %v6106
      %v6121 = vadd.f32 %v6092, %v6106
      %v6122 = vadd.f32 %v6093, %v6106
      %v6123 = vadd.f32 %v6094, %v6106
      %v6124 = vadd.f32 %v6095, %v6106
      %v6125 = vadd.f32 %v6096, %v6106
      %v6126 = vadd.f32 %v6097, %v6106
      %v6127 = vadd.f32 %v6098, %v6106
      %v6128 = vadd.f32 %v6099, %v6106
      %v6129 = vadd.f32 %v6100, %v6106
      %v6130 = vadd.f32 %v6101, %v6106
      %v6131 = vld [vmem:[%s246 + $0x22] sm:$0xff]
      %v6132 = vld [vmem:[%s246 + $0x2a] sm:$0xff]
      %v6133 = vld [vmem:[%s246 + $0x32] sm:$0xff]
      %v6134 = vld [vmem:[%s246 + $0x3a] sm:$0xff]
      %v6135 = vld [vmem:[%s246 + $0x42] sm:$0xff]
      %v6136 = vld [vmem:[%s246 + $0x4a] sm:$0xff]
      %v6137 = vld [vmem:[%s246 + $0x52] sm:$0xff]
      %v6138 = vld [vmem:[%s246 + $0x5a] sm:$0xff]
      %v6139 = vld [vmem:[%s246 + $0x62] sm:$0xff]
      %v6140 = vld [vmem:[%s246 + $0x6a] sm:$0xff]
      %v6141 = vld [vmem:[%s246 + $0x72] sm:$0xff]
      %v6142 = vld [vmem:[%s246 + $0x7a] sm:$0xff]
      %v6143 = vld [vmem:[%s246 + $0x82] sm:$0xff]
      %v6144 = vld [vmem:[%s246 + $0x8a] sm:$0xff]
      %v6145 = vld [vmem:[%s246 + $0x92] sm:$0xff]
      %v6146 = vld [vmem:[%s246 + $0x9a] sm:$0xff]
      %v6147 = vld [vmem:[%s246 + $0xa2] sm:$0xff]
      %v6148 = vld [vmem:[%s246 + $0xaa] sm:$0xff]
      %v6149 = vld [vmem:[%s246 + $0xb2] sm:$0xff]
      %v6150 = vld [vmem:[%s246 + $0xba] sm:$0xff]
      %v6151 = vld [vmem:[%s246 + $0xc2] sm:$0xff]
      %v6152 = vld [vmem:[%s246 + $0xca] sm:$0xff]
      %v6153 = vld [vmem:[%s246 + $0xd2] sm:$0xff]
      %v6154 = vld [vmem:[%s246 + $0xda] sm:$0xff]
      %v6155 = vadd.f32 %v6107, %v6131
      %v6156 = vadd.f32 %v6108, %v6132
      %v6157 = vadd.f32 %v6109, %v6133
      %v6158 = vadd.f32 %v6110, %v6134
      %v6159 = vadd.f32 %v6111, %v6135
      %v6160 = vadd.f32 %v6112, %v6136
      %v6161 = vadd.f32 %v6113, %v6137
      %v6162 = vadd.f32 %v6114, %v6138
      %v6163 = vadd.f32 %v6115, %v6139
      %v6164 = vadd.f32 %v6116, %v6140
      %v6165 = vadd.f32 %v6117, %v6141
      %v6166 = vadd.f32 %v6118, %v6142
      %v6167 = vadd.f32 %v6119, %v6143
      %v6168 = vadd.f32 %v6120, %v6144
      %v6169 = vadd.f32 %v6121, %v6145
      %v6170 = vadd.f32 %v6122, %v6146
      %v6171 = vadd.f32 %v6123, %v6147
      %v6172 = vadd.f32 %v6124, %v6148
      %v6173 = vadd.f32 %v6125, %v6149
      %v6174 = vadd.f32 %v6126, %v6150
      %v6175 = vadd.f32 %v6127, %v6151
      %v6176 = vadd.f32 %v6128, %v6152
      %v6177 = vadd.f32 %v6129, %v6153
      %v6178 = vadd.f32 %v6130, %v6154
      %6179 = vst.msk [vmem:[%s251] sm:$0xff] %vm378, %v6155
      %6180 = vst.msk [vmem:[%s251 + $0x8] sm:$0xff] %vm378, %v6156
      %6181 = vst.msk [vmem:[%s251 + $0x10] sm:$0xff] %vm378, %v6157
      %6182 = vst.msk [vmem:[%s251 + $0x18] sm:$0xff] %vm378, %v6158
      %6183 = vst.msk [vmem:[%s251 + $0x20] sm:$0xff] %vm378, %v6159
      %6184 = vst.msk [vmem:[%s251 + $0x28] sm:$0xff] %vm378, %v6160
      %6185 = vst.msk [vmem:[%s251 + $0x30] sm:$0xff] %vm378, %v6161
      %6186 = vst.msk [vmem:[%s251 + $0x38] sm:$0xff] %vm378, %v6162
      %6187 = vst.msk [vmem:[%s251 + $0x40] sm:$0xff] %vm378, %v6163
      %6188 = vst.msk [vmem:[%s251 + $0x48] sm:$0xff] %vm378, %v6164
      %6189 = vst.msk [vmem:[%s251 + $0x50] sm:$0xff] %vm378, %v6165
      %6190 = vst.msk [vmem:[%s251 + $0x58] sm:$0xff] %vm378, %v6166
      %6191 = vst.msk [vmem:[%s251 + $0x60] sm:$0xff] %vm378, %v6167
      %6192 = vst.msk [vmem:[%s251 + $0x68] sm:$0xff] %vm378, %v6168
      %6193 = vst.msk [vmem:[%s251 + $0x70] sm:$0xff] %vm378, %v6169
      %6194 = vst.msk [vmem:[%s251 + $0x78] sm:$0xff] %vm378, %v6170
      %6195 = vst.msk [vmem:[%s251 + $0x80] sm:$0xff] %vm378, %v6171
      %6196 = vst.msk [vmem:[%s251 + $0x88] sm:$0xff] %vm378, %v6172
      %6197 = vst.msk [vmem:[%s251 + $0x90] sm:$0xff] %vm378, %v6173
      %6198 = vst.msk [vmem:[%s251 + $0x98] sm:$0xff] %vm378, %v6174
      %6199 = vst.msk [vmem:[%s251 + $0xa0] sm:$0xff] %vm378, %v6175
      %6200 = vst.msk [vmem:[%s251 + $0xa8] sm:$0xff] %vm378, %v6176
      %6201 = vst.msk [vmem:[%s251 + $0xb0] sm:$0xff] %vm378, %v6177
      %6202 = vst.msk [vmem:[%s251 + $0xb8] sm:$0xff] %vm378, %v6178
      %p6203 = scmp.lt.s32.totalorder %s17, 1
      %s6204 = scalar_select %p6203, %s17, 1
      %s6205 = smul.addr %s6204, 24
      %s6206 = smul.addr %s6205, 8
      %s6207 = scalar_lea.vmem %s6, %s6206
      // Predicated region
      $region45: #{residual_block_forward.1} parent=43 // pred_check
        %p6208 = pneg %p166
      $region46: #{residual_block_forward.1} parent=43 // pred_check_branch
        %6210 = sbr.rel (%p6208) target = $region48
      $region47: #{residual_block_forward.1} parent=43 // pred_region
        _
      $region48: #{residual_block_forward.1} parent=43 // pred_fallthru
        _
    $region44: #{residual_block_forward.1} parent=5 // pred_fallthru
      _
    %p6211 = scmp.le.s32.totalorder 2, %s12
    // Predicated region
    $region49: #{residual_block_forward.1} parent=5 // pred_check
      %p6212 = pneg %p6211
    $region50: #{residual_block_forward.1} parent=5 // pred_check_branch
      %6214 = sbr.rel (%p6212) target = $region52
    $region51: #{residual_block_forward.1} parent=5 // pred_region
      %s6215 = ssub.s32 %s12, 2
      // Predicated region
      $region53: #{residual_block_forward.1} parent=51 // pred_check
        %p6216 = pneg %p172
      $region54: #{residual_block_forward.1} parent=51 // pred_check_branch
        %6218 = sbr.rel (%p6216) target = $region56
      $region55: #{residual_block_forward.1} parent=51 // pred_region
        %p6219 = scmp.lt.s32.totalorder %s18, 1
        %s6220 = scalar_select %p6219, %s18, 1
        %s6221 = smul.addr %s6220, 24
        %s6222 = smul.addr %s6221, 8
        %s6223 = scalar_lea.vmem %s6, %s6222
      $region56: #{residual_block_forward.1} parent=51 // pred_fallthru
        _
    $region52: #{residual_block_forward.1} parent=5 // pred_fallthru
      _
  $region6: #{residual_block_forward.1} parent=0 // loop_footer
    %s16 = sadd.s32 1, %s12
  $region7: #{residual_block_forward.1} parent=0 // loop_footer_branch
    %11 = sbr.rel target = $region3
  $region8: #{residual_block_forward.1} parent=0 // loop_exit
    _

</llo_original>
